<compile_context>
chip_gen: v7x
topology: tpu7x:2x2x1
jax: 0.10.0
libtpu: 0.0.40
codegen_flags: <defaults>
</compile_context>

<pallas_src>
import functools

import jax
import jax.numpy as jnp
from jax import lax
from jax.experimental import pallas as pl
from jax.experimental.pallas import tpu as pltpu


def _attention_kernel(x_ref, w_qkv_ref, w_out_ref, b_out_ref, o_ref, merged_ref,
                      *, heads, dim_head, bt, n):
    # x_ref      : (Bt, N, DIM)      f32 activations (Bt batch elements per grid step)
    # w_qkv_ref  : (DIM, 3*INNER)    bf16 fused qkv weight; 1/sqrt(d) pre-folded into Q cols
    # w_out_ref  : (INNER, DIM)      bf16 output-projection weight
    # b_out_ref  : (1, DIM)          f32 output-projection bias
    # o_ref      : (Bt, N, DIM)      f32 output
    # merged_ref : (Bt*N, INNER)     bf16 VMEM scratch for merged head outputs
    inner = heads * dim_head

    # Load the block, cast to bf16 in-kernel (no separate wrapper-side cast pass),
    # and flatten batch*tokens so projection matmuls run with M = Bt*N rows.
    x = x_ref[...].astype(jnp.bfloat16).reshape(bt * n, -1)           # (Bt*N, DIM)

    # Fused QKV projection: one MXU matmul, f32 accumulation, then a single bf16 cast
    # of the whole result (halves vreg/VMEM pressure for the head loop below).
    qkv = jnp.dot(x, w_qkv_ref[...],
                  preferred_element_type=jnp.float32)                 # (Bt*N, 3*INNER) f32
    qkv = qkv.astype(jnp.bfloat16)

    # Where to apply the softmax normalization: scaling the (N, d) AV result is cheaper
    # than scaling the (N, N) probabilities whenever N > d.  Static choice at trace time.
    normalize_after_av = n > dim_head

    for h in range(heads):                                            # static unroll
        q_off = h * dim_head
        k_off = inner + h * dim_head
        v_off = 2 * inner + h * dim_head
        for b in range(bt):                                           # static unroll
            r0 = b * n
            qh = qkv[r0:r0 + n, q_off:q_off + dim_head]               # (N, d) bf16, pre-scaled
            kh = qkv[r0:r0 + n, k_off:k_off + dim_head]               # (N, d) bf16
            vh = qkv[r0:r0 + n, v_off:v_off + dim_head]               # (N, d) bf16

            # NT-style scores: contract the d axes directly, no explicit kh.T transpose.
            s = lax.dot_general(qh, kh,
                                dimension_numbers=(((1,), (1,)), ((), ())),
                                preferred_element_type=jnp.float32)   # (N, N) f32

            # Numerically stable softmax; denominator reciprocal on the EUP (approx).
            s = s - jnp.max(s, axis=-1, keepdims=True)
            p = jnp.exp(s)
            inv_denom = pl.reciprocal(jnp.sum(p, axis=-1, keepdims=True),
                                      approx=True)                    # (N, 1) f32

            if normalize_after_av:
                # Un-normalized probabilities to the MXU; scale the (N, d) result.
                oh = jnp.dot(p.astype(jnp.bfloat16), vh,
                             preferred_element_type=jnp.float32)      # (N, d) f32
                oh = oh * inv_denom
            else:
                oh = jnp.dot((p * inv_denom).astype(jnp.bfloat16), vh,
                             preferred_element_type=jnp.float32)      # (N, d) f32

            # Lane-aligned store into the preallocated merged-heads scratch
            # (avoids a value-level concatenate copy, shortens per-head live ranges).
            merged_ref[r0:r0 + n, q_off:q_off + dim_head] = oh.astype(jnp.bfloat16)

    # Single full-contraction (K = INNER) output projection on the merged tile.
    out = jnp.dot(merged_ref[...], w_out_ref[...],
                  preferred_element_type=jnp.float32)                 # (Bt*N, DIM) f32
    out = out + b_out_ref[...]
    o_ref[...] = out.reshape(bt, n, -1).astype(o_ref.dtype)


def prepare_attention_params(w_qkv, w_out, b_out, *, heads, dim_head):
    """One-time, host-side parameter transform (not per-call work):
       * folds the 1/sqrt(dim_head) attention scale into the Q columns of the fused
         qkv weight, so the kernel never multiplies q by the scale,
       * casts matmul weights to bf16 (the kernel accumulates in f32),
       * keeps the output bias in f32 (added after the f32 accumulation)."""
    inner = heads * dim_head
    scale = dim_head ** (-0.5)
    w_qkv = w_qkv.at[:, :inner].multiply(scale)
    return (w_qkv.astype(jnp.bfloat16),
            w_out.astype(jnp.bfloat16),
            b_out.astype(jnp.float32))


def _pick_batch_tile(B, N, target_rows=256):
    """Largest divisor of B such that Bt*N <= target_rows (fills the 256-wide MXU),
       clamped to at least 1."""
    best = 1
    for bt in range(1, B + 1):
        if B % bt == 0 and bt * N <= max(target_rows, N):
            best = bt
    return best


def attention_pallas(x, w_qkv_b16, w_out_b16, b_out_f32, *, heads, dim_head, batch_tile=None):
    B, N, DIM = x.shape
    inner = heads * dim_head
    assert w_qkv_b16.shape == (DIM, 3 * inner)
    assert w_out_b16.shape == (inner, DIM)

    bt = batch_tile if batch_tile is not None else _pick_batch_tile(B, N)
    assert B % bt == 0, "batch_tile must divide the batch size"

    kernel = functools.partial(_attention_kernel,
                               heads=heads, dim_head=dim_head, bt=bt, n=N)

    # Advisory cost estimate so XLA can schedule/overlap around the custom call.
    flops = (2 * B * N * DIM * 3 * inner            # fused QKV projection
             + 2 * B * heads * N * N * dim_head     # Q @ K^T
             + 2 * B * heads * N * N * dim_head     # P @ V
             + 2 * B * N * inner * DIM)             # output projection
    transcendentals = B * heads * N * N + B * heads * N        # exp + reciprocal
    bytes_accessed = (x.size * 4 + w_qkv_b16.size * 2 + w_out_b16.size * 2
                      + b_out_f32.size * 4 + B * N * DIM * 4)

    return pl.pallas_call(
        kernel,
        out_shape=jax.ShapeDtypeStruct((B, N, DIM), jnp.float32),
        grid=(B // bt,),
        in_specs=[
            pl.BlockSpec((bt, N, DIM), lambda b: (b, 0, 0)),      # x: Bt batch elements / step
            pl.BlockSpec((DIM, 3 * inner), lambda b: (0, 0)),     # fused qkv weight (constant)
            pl.BlockSpec((inner, DIM), lambda b: (0, 0)),         # output weight    (constant)
            pl.BlockSpec((1, DIM), lambda b: (0, 0)),             # output bias      (constant)
        ],
        out_specs=pl.BlockSpec((bt, N, DIM), lambda b: (b, 0, 0)),
        scratch_shapes=[pltpu.VMEM((bt * N, inner), jnp.bfloat16)],   # merged-heads buffer
        compiler_params=pltpu.CompilerParams(
            dimension_semantics=("parallel",),   # independent batch blocks -> megacore / 2 TCs
            vmem_limit_bytes=16 * 1024 * 1024,   # real footprint << 2 MiB; leave v7x headroom
        ),
        cost_estimate=pl.CostEstimate(flops=flops,
                                      transcendentals=transcendentals,
                                      bytes_accessed=bytes_accessed),
    )(x, w_qkv_b16, w_out_b16, b_out_f32)


def attention_ref(x, w_qkv, w_out, b_out, *, heads, dim_head):
    """Pure-JAX f32 reference matching the PyTorch forward (dropout=0)."""
    B, N, DIM = x.shape
    inner = heads * dim_head
    scale = dim_head ** (-0.5)
    qkv = x @ w_qkv                                            # (B, N, 3*inner)
    q, k, v = jnp.split(qkv, 3, axis=-1)

    def split_heads(t):                                        # 'b n (h d) -> b h n d'
        return t.reshape(B, N, heads, dim_head).transpose(0, 2, 1, 3)

    q, k, v = map(split_heads, (q, k, v))
    q = q * scale
    attn = jax.nn.softmax(jnp.einsum('bhnd,bhmd->bhnm', q, k), axis=-1)
    out = jnp.einsum('bhnm,bhmd->bhnd', attn, v)
    out = out.transpose(0, 2, 1, 3).reshape(B, N, inner)       # 'b h n d -> b n (h d)'
    return out @ w_out + b_out


if __name__ == "__main__":
    # Small, TPU-friendly shapes consistent with the module: lane-dense DIM (128),
    # sublane-aligned N (64), dim_head a multiple of 128 so head boundaries are
    # lane-aligned.  B=8 with Bt=4 gives M = Bt*N = 256 rows per projection matmul
    # (fills the 256-wide MXU) and 2 grid steps (one per v7x TensorCore).
    B, N, DIM = 8, 64, 128
    HEADS, DIM_HEAD = 2, 128
    INNER = HEADS * DIM_HEAD

    key = jax.random.PRNGKey(0)
    kx, kq, kw, kb = jax.random.split(key, 4)

    x = jax.random.normal(kx, (B, N, DIM), dtype=jnp.float32)
    w_qkv = jax.random.normal(kq, (DIM, 3 * INNER), dtype=jnp.float32) * 0.05
    w_out = jax.random.normal(kw, (INNER, DIM), dtype=jnp.float32) * 0.05
    b_out = jax.random.normal(kb, (1, DIM), dtype=jnp.float32) * 0.05

    # One-time host-side parameter preparation (scale folding + bf16 cast).
    w_qkv_p, w_out_p, b_out_p = prepare_attention_params(
        w_qkv, w_out, b_out, heads=HEADS, dim_head=DIM_HEAD)

    out = attention_pallas(x, w_qkv_p, w_out_p, b_out_p, heads=HEADS, dim_head=DIM_HEAD)
    out = jax.block_until_ready(out)

    ref = attention_ref(x, w_qkv, w_out, b_out, heads=HEADS, dim_head=DIM_HEAD)
    assert out.shape == (B, N, DIM)
    # bf16 matmul operands (f32 accumulation) + approx softmax reciprocal vs an
    # all-f32 reference -> loose tolerance.
    assert jnp.allclose(out, ref, atol=3e-2, rtol=3e-2), "Pallas output mismatch vs reference"

    print("KERNEL_OK")
</pallas_src>

<mosaic_0001>
module attributes {stable_mosaic.version = 11 : i64} {
  func.func @_attention_kernel(%arg0: i32, %arg1: memref<4x64x128xf32, #tpu.memory_space<vmem>>, %arg2: memref<128x768xbf16, #tpu.memory_space<vmem>>, %arg3: memref<256x128xbf16, #tpu.memory_space<vmem>>, %arg4: memref<1x128xf32, #tpu.memory_space<vmem>>, %arg5: memref<4x64x128xf32, #tpu.memory_space<vmem>>, %arg6: memref<256x256xbf16, #tpu.memory_space<vmem>>) attributes {dimension_semantics = [#tpu.dimension_semantics<parallel>], iteration_bounds = array<i64: 2>, scalar_prefetch = 0 : i64, scratch_operands = 1 : i64, tpu.core_type = #tpu.core_type<tc>, window_params = [{transform_indices = @transform_0, window_bounds = array<i64: 4, 64, 128>}, {pipeline_mode = #tpu.pipeline_mode<synchronous>, transform_indices = @transform_1, window_bounds = array<i64: 128, 768>}, {pipeline_mode = #tpu.pipeline_mode<synchronous>, transform_indices = @transform_2, window_bounds = array<i64: 256, 128>}, {pipeline_mode = #tpu.pipeline_mode<synchronous>, transform_indices = @transform_3, window_bounds = array<i64: 1, 128>}, {transform_indices = @transform_4, window_bounds = array<i64: 4, 64, 128>}]} {
    %c0 = arith.constant 0 : index
    %c0_0 = arith.constant 0 : index
    %c0_1 = arith.constant 0 : index
    %0 = vector.load %arg1[%c0, %c0_0, %c0_1] : memref<4x64x128xf32, #tpu.memory_space<vmem>>, vector<4x64x128xf32>
    %1 = arith.truncf %0 : vector<4x64x128xf32> to vector<4x64x128xbf16>
    %2 = vector.shape_cast %1 : vector<4x64x128xbf16> to vector<256x128xbf16>
    %c0_2 = arith.constant 0 : index
    %c0_3 = arith.constant 0 : index
    %3 = vector.load %arg2[%c0_2, %c0_3] : memref<128x768xbf16, #tpu.memory_space<vmem>>, vector<128x768xbf16>
    %cst = arith.constant dense<0.000000e+00> : vector<256x768xf32>
    %4 = tpu.matmul %2, %3, %cst {dimension_numbers = #tpu.dot_dimension_numbers<[1], [0], [0], [1], [0, 0, 1, 1], [], []>} : vector<256x128xbf16>, vector<128x768xbf16>, vector<256x768xf32> -> vector<256x768xf32>
    %5 = arith.truncf %4 : vector<256x768xf32> to vector<256x768xbf16>
    %6 = vector.extract_strided_slice %5 {offsets = [0, 0], sizes = [64, 128], strides = [1, 1]} : vector<256x768xbf16> to vector<64x128xbf16>
    %7 = vector.extract_strided_slice %5 {offsets = [0, 256], sizes = [64, 128], strides = [1, 1]} : vector<256x768xbf16> to vector<64x128xbf16>
    %8 = vector.extract_strided_slice %5 {offsets = [0, 512], sizes = [64, 128], strides = [1, 1]} : vector<256x768xbf16> to vector<64x128xbf16>
    %cst_4 = arith.constant dense<0.000000e+00> : vector<64x64xf32>
    %9 = tpu.matmul %6, %7, %cst_4 {dimension_numbers = #tpu.dot_dimension_numbers<[1], [1], [0], [0], [0, 0, 1, 0], [], []>} : vector<64x128xbf16>, vector<64x128xbf16>, vector<64x64xf32> -> vector<64x64xf32>
    %cst_5 = arith.constant dense<0xFF800000> : vector<64xf32>
    %10 = vector.multi_reduction <maximumf>, %9, %cst_5 [1] : vector<64x64xf32> to vector<64xf32>
    %11 = vector.shape_cast %10 : vector<64xf32> to vector<64x1xf32>
    %12 = vector.broadcast %11 : vector<64x1xf32> to vector<64x64xf32>
    %13 = arith.subf %9, %12 : vector<64x64xf32>
    %14 = math.exp %13 : vector<64x64xf32>
    %cst_6 = arith.constant dense<0.000000e+00> : vector<64xf32>
    %15 = vector.multi_reduction <add>, %14, %cst_6 [1] : vector<64x64xf32> to vector<64xf32>
    %16 = vector.shape_cast %15 : vector<64xf32> to vector<64x1xf32>
    %17 = tpu.reciprocal %16 {approx = true} : vector<64x1xf32> -> vector<64x1xf32>
    %18 = vector.broadcast %17 : vector<64x1xf32> to vector<64x64xf32>
    %19 = arith.mulf %14, %18 : vector<64x64xf32>
    %20 = arith.truncf %19 : vector<64x64xf32> to vector<64x64xbf16>
    %cst_7 = arith.constant dense<0.000000e+00> : vector<64x128xf32>
    %21 = tpu.matmul %20, %8, %cst_7 {dimension_numbers = #tpu.dot_dimension_numbers<[1], [0], [0], [1], [0, 0, 1, 1], [], []>} : vector<64x64xbf16>, vector<64x128xbf16>, vector<64x128xf32> -> vector<64x128xf32>
    %22 = arith.truncf %21 : vector<64x128xf32> to vector<64x128xbf16>
    %c0_8 = arith.constant 0 : index
    %c0_9 = arith.constant 0 : index
    %23 = vector.load %arg6[%c0_8, %c0_9] : memref<256x256xbf16, #tpu.memory_space<vmem>>, vector<64x128xbf16>
    tpu.vector_store %arg6[%c0_8, %c0_9], %22 {strides = array<i32>} : memref<256x256xbf16, #tpu.memory_space<vmem>>, vector<64x128xbf16>,
    %24 = vector.extract_strided_slice %5 {offsets = [64, 0], sizes = [64, 128], strides = [1, 1]} : vector<256x768xbf16> to vector<64x128xbf16>
    %25 = vector.extract_strided_slice %5 {offsets = [64, 256], sizes = [64, 128], strides = [1, 1]} : vector<256x768xbf16> to vector<64x128xbf16>
    %26 = vector.extract_strided_slice %5 {offsets = [64, 512], sizes = [64, 128], strides = [1, 1]} : vector<256x768xbf16> to vector<64x128xbf16>
    %cst_10 = arith.constant dense<0.000000e+00> : vector<64x64xf32>
    %27 = tpu.matmul %24, %25, %cst_10 {dimension_numbers = #tpu.dot_dimension_numbers<[1], [1], [0], [0], [0, 0, 1, 0], [], []>} : vector<64x128xbf16>, vector<64x128xbf16>, vector<64x64xf32> -> vector<64x64xf32>
    %cst_11 = arith.constant dense<0xFF800000> : vector<64xf32>
    %28 = vector.multi_reduction <maximumf>, %27, %cst_11 [1] : vector<64x64xf32> to vector<64xf32>
    %29 = vector.shape_cast %28 : vector<64xf32> to vector<64x1xf32>
    %30 = vector.broadcast %29 : vector<64x1xf32> to vector<64x64xf32>
    %31 = arith.subf %27, %30 : vector<64x64xf32>
    %32 = math.exp %31 : vector<64x64xf32>
    %cst_12 = arith.constant dense<0.000000e+00> : vector<64xf32>
    %33 = vector.multi_reduction <add>, %32, %cst_12 [1] : vector<64x64xf32> to vector<64xf32>
    %34 = vector.shape_cast %33 : vector<64xf32> to vector<64x1xf32>
    %35 = tpu.reciprocal %34 {approx = true} : vector<64x1xf32> -> vector<64x1xf32>
    %36 = vector.broadcast %35 : vector<64x1xf32> to vector<64x64xf32>
    %37 = arith.mulf %32, %36 : vector<64x64xf32>
    %38 = arith.truncf %37 : vector<64x64xf32> to vector<64x64xbf16>
    %cst_13 = arith.constant dense<0.000000e+00> : vector<64x128xf32>
    %39 = tpu.matmul %38, %26, %cst_13 {dimension_numbers = #tpu.dot_dimension_numbers<[1], [0], [0], [1], [0, 0, 1, 1], [], []>} : vector<64x64xbf16>, vector<64x128xbf16>, vector<64x128xf32> -> vector<64x128xf32>
    %40 = arith.truncf %39 : vector<64x128xf32> to vector<64x128xbf16>
    %c64 = arith.constant 64 : index
    %c0_14 = arith.constant 0 : index
    %41 = vector.load %arg6[%c64, %c0_14] : memref<256x256xbf16, #tpu.memory_space<vmem>>, vector<64x128xbf16>
    tpu.vector_store %arg6[%c64, %c0_14], %40 {strides = array<i32>} : memref<256x256xbf16, #tpu.memory_space<vmem>>, vector<64x128xbf16>,
    %42 = vector.extract_strided_slice %5 {offsets = [128, 0], sizes = [64, 128], strides = [1, 1]} : vector<256x768xbf16> to vector<64x128xbf16>
    %43 = vector.extract_strided_slice %5 {offsets = [128, 256], sizes = [64, 128], strides = [1, 1]} : vector<256x768xbf16> to vector<64x128xbf16>
    %44 = vector.extract_strided_slice %5 {offsets = [128, 512], sizes = [64, 128], strides = [1, 1]} : vector<256x768xbf16> to vector<64x128xbf16>
    %cst_15 = arith.constant dense<0.000000e+00> : vector<64x64xf32>
    %45 = tpu.matmul %42, %43, %cst_15 {dimension_numbers = #tpu.dot_dimension_numbers<[1], [1], [0], [0], [0, 0, 1, 0], [], []>} : vector<64x128xbf16>, vector<64x128xbf16>, vector<64x64xf32> -> vector<64x64xf32>
    %cst_16 = arith.constant dense<0xFF800000> : vector<64xf32>
    %46 = vector.multi_reduction <maximumf>, %45, %cst_16 [1] : vector<64x64xf32> to vector<64xf32>
    %47 = vector.shape_cast %46 : vector<64xf32> to vector<64x1xf32>
    %48 = vector.broadcast %47 : vector<64x1xf32> to vector<64x64xf32>
    %49 = arith.subf %45, %48 : vector<64x64xf32>
    %50 = math.exp %49 : vector<64x64xf32>
    %cst_17 = arith.constant dense<0.000000e+00> : vector<64xf32>
    %51 = vector.multi_reduction <add>, %50, %cst_17 [1] : vector<64x64xf32> to vector<64xf32>
    %52 = vector.shape_cast %51 : vector<64xf32> to vector<64x1xf32>
    %53 = tpu.reciprocal %52 {approx = true} : vector<64x1xf32> -> vector<64x1xf32>
    %54 = vector.broadcast %53 : vector<64x1xf32> to vector<64x64xf32>
    %55 = arith.mulf %50, %54 : vector<64x64xf32>
    %56 = arith.truncf %55 : vector<64x64xf32> to vector<64x64xbf16>
    %cst_18 = arith.constant dense<0.000000e+00> : vector<64x128xf32>
    %57 = tpu.matmul %56, %44, %cst_18 {dimension_numbers = #tpu.dot_dimension_numbers<[1], [0], [0], [1], [0, 0, 1, 1], [], []>} : vector<64x64xbf16>, vector<64x128xbf16>, vector<64x128xf32> -> vector<64x128xf32>
    %58 = arith.truncf %57 : vector<64x128xf32> to vector<64x128xbf16>
    %c128 = arith.constant 128 : index
    %c0_19 = arith.constant 0 : index
    %59 = vector.load %arg6[%c128, %c0_19] : memref<256x256xbf16, #tpu.memory_space<vmem>>, vector<64x128xbf16>
    tpu.vector_store %arg6[%c128, %c0_19], %58 {strides = array<i32>} : memref<256x256xbf16, #tpu.memory_space<vmem>>, vector<64x128xbf16>,
    %60 = vector.extract_strided_slice %5 {offsets = [192, 0], sizes = [64, 128], strides = [1, 1]} : vector<256x768xbf16> to vector<64x128xbf16>
    %61 = vector.extract_strided_slice %5 {offsets = [192, 256], sizes = [64, 128], strides = [1, 1]} : vector<256x768xbf16> to vector<64x128xbf16>
    %62 = vector.extract_strided_slice %5 {offsets = [192, 512], sizes = [64, 128], strides = [1, 1]} : vector<256x768xbf16> to vector<64x128xbf16>
    %cst_20 = arith.constant dense<0.000000e+00> : vector<64x64xf32>
    %63 = tpu.matmul %60, %61, %cst_20 {dimension_numbers = #tpu.dot_dimension_numbers<[1], [1], [0], [0], [0, 0, 1, 0], [], []>} : vector<64x128xbf16>, vector<64x128xbf16>, vector<64x64xf32> -> vector<64x64xf32>
    %cst_21 = arith.constant dense<0xFF800000> : vector<64xf32>
    %64 = vector.multi_reduction <maximumf>, %63, %cst_21 [1] : vector<64x64xf32> to vector<64xf32>
    %65 = vector.shape_cast %64 : vector<64xf32> to vector<64x1xf32>
    %66 = vector.broadcast %65 : vector<64x1xf32> to vector<64x64xf32>
    %67 = arith.subf %63, %66 : vector<64x64xf32>
    %68 = math.exp %67 : vector<64x64xf32>
    %cst_22 = arith.constant dense<0.000000e+00> : vector<64xf32>
    %69 = vector.multi_reduction <add>, %68, %cst_22 [1] : vector<64x64xf32> to vector<64xf32>
    %70 = vector.shape_cast %69 : vector<64xf32> to vector<64x1xf32>
    %71 = tpu.reciprocal %70 {approx = true} : vector<64x1xf32> -> vector<64x1xf32>
    %72 = vector.broadcast %71 : vector<64x1xf32> to vector<64x64xf32>
    %73 = arith.mulf %68, %72 : vector<64x64xf32>
    %74 = arith.truncf %73 : vector<64x64xf32> to vector<64x64xbf16>
    %cst_23 = arith.constant dense<0.000000e+00> : vector<64x128xf32>
    %75 = tpu.matmul %74, %62, %cst_23 {dimension_numbers = #tpu.dot_dimension_numbers<[1], [0], [0], [1], [0, 0, 1, 1], [], []>} : vector<64x64xbf16>, vector<64x128xbf16>, vector<64x128xf32> -> vector<64x128xf32>
    %76 = arith.truncf %75 : vector<64x128xf32> to vector<64x128xbf16>
    %c192 = arith.constant 192 : index
    %c0_24 = arith.constant 0 : index
    %77 = vector.load %arg6[%c192, %c0_24] : memref<256x256xbf16, #tpu.memory_space<vmem>>, vector<64x128xbf16>
    tpu.vector_store %arg6[%c192, %c0_24], %76 {strides = array<i32>} : memref<256x256xbf16, #tpu.memory_space<vmem>>, vector<64x128xbf16>,
    %78 = vector.extract_strided_slice %5 {offsets = [0, 128], sizes = [64, 128], strides = [1, 1]} : vector<256x768xbf16> to vector<64x128xbf16>
    %79 = vector.extract_strided_slice %5 {offsets = [0, 384], sizes = [64, 128], strides = [1, 1]} : vector<256x768xbf16> to vector<64x128xbf16>
    %80 = vector.extract_strided_slice %5 {offsets = [0, 640], sizes = [64, 128], strides = [1, 1]} : vector<256x768xbf16> to vector<64x128xbf16>
    %cst_25 = arith.constant dense<0.000000e+00> : vector<64x64xf32>
    %81 = tpu.matmul %78, %79, %cst_25 {dimension_numbers = #tpu.dot_dimension_numbers<[1], [1], [0], [0], [0, 0, 1, 0], [], []>} : vector<64x128xbf16>, vector<64x128xbf16>, vector<64x64xf32> -> vector<64x64xf32>
    %cst_26 = arith.constant dense<0xFF800000> : vector<64xf32>
    %82 = vector.multi_reduction <maximumf>, %81, %cst_26 [1] : vector<64x64xf32> to vector<64xf32>
    %83 = vector.shape_cast %82 : vector<64xf32> to vector<64x1xf32>
    %84 = vector.broadcast %83 : vector<64x1xf32> to vector<64x64xf32>
    %85 = arith.subf %81, %84 : vector<64x64xf32>
    %86 = math.exp %85 : vector<64x64xf32>
    %cst_27 = arith.constant dense<0.000000e+00> : vector<64xf32>
    %87 = vector.multi_reduction <add>, %86, %cst_27 [1] : vector<64x64xf32> to vector<64xf32>
    %88 = vector.shape_cast %87 : vector<64xf32> to vector<64x1xf32>
    %89 = tpu.reciprocal %88 {approx = true} : vector<64x1xf32> -> vector<64x1xf32>
    %90 = vector.broadcast %89 : vector<64x1xf32> to vector<64x64xf32>
    %91 = arith.mulf %86, %90 : vector<64x64xf32>
    %92 = arith.truncf %91 : vector<64x64xf32> to vector<64x64xbf16>
    %cst_28 = arith.constant dense<0.000000e+00> : vector<64x128xf32>
    %93 = tpu.matmul %92, %80, %cst_28 {dimension_numbers = #tpu.dot_dimension_numbers<[1], [0], [0], [1], [0, 0, 1, 1], [], []>} : vector<64x64xbf16>, vector<64x128xbf16>, vector<64x128xf32> -> vector<64x128xf32>
    %94 = arith.truncf %93 : vector<64x128xf32> to vector<64x128xbf16>
    %c0_29 = arith.constant 0 : index
    %c128_30 = arith.constant 128 : index
    %95 = vector.load %arg6[%c0_29, %c128_30] : memref<256x256xbf16, #tpu.memory_space<vmem>>, vector<64x128xbf16>
    tpu.vector_store %arg6[%c0_29, %c128_30], %94 {strides = array<i32>} : memref<256x256xbf16, #tpu.memory_space<vmem>>, vector<64x128xbf16>,
    %96 = vector.extract_strided_slice %5 {offsets = [64, 128], sizes = [64, 128], strides = [1, 1]} : vector<256x768xbf16> to vector<64x128xbf16>
    %97 = vector.extract_strided_slice %5 {offsets = [64, 384], sizes = [64, 128], strides = [1, 1]} : vector<256x768xbf16> to vector<64x128xbf16>
    %98 = vector.extract_strided_slice %5 {offsets = [64, 640], sizes = [64, 128], strides = [1, 1]} : vector<256x768xbf16> to vector<64x128xbf16>
    %cst_31 = arith.constant dense<0.000000e+00> : vector<64x64xf32>
    %99 = tpu.matmul %96, %97, %cst_31 {dimension_numbers = #tpu.dot_dimension_numbers<[1], [1], [0], [0], [0, 0, 1, 0], [], []>} : vector<64x128xbf16>, vector<64x128xbf16>, vector<64x64xf32> -> vector<64x64xf32>
    %cst_32 = arith.constant dense<0xFF800000> : vector<64xf32>
    %100 = vector.multi_reduction <maximumf>, %99, %cst_32 [1] : vector<64x64xf32> to vector<64xf32>
    %101 = vector.shape_cast %100 : vector<64xf32> to vector<64x1xf32>
    %102 = vector.broadcast %101 : vector<64x1xf32> to vector<64x64xf32>
    %103 = arith.subf %99, %102 : vector<64x64xf32>
    %104 = math.exp %103 : vector<64x64xf32>
    %cst_33 = arith.constant dense<0.000000e+00> : vector<64xf32>
    %105 = vector.multi_reduction <add>, %104, %cst_33 [1] : vector<64x64xf32> to vector<64xf32>
    %106 = vector.shape_cast %105 : vector<64xf32> to vector<64x1xf32>
    %107 = tpu.reciprocal %106 {approx = true} : vector<64x1xf32> -> vector<64x1xf32>
    %108 = vector.broadcast %107 : vector<64x1xf32> to vector<64x64xf32>
    %109 = arith.mulf %104, %108 : vector<64x64xf32>
    %110 = arith.truncf %109 : vector<64x64xf32> to vector<64x64xbf16>
    %cst_34 = arith.constant dense<0.000000e+00> : vector<64x128xf32>
    %111 = tpu.matmul %110, %98, %cst_34 {dimension_numbers = #tpu.dot_dimension_numbers<[1], [0], [0], [1], [0, 0, 1, 1], [], []>} : vector<64x64xbf16>, vector<64x128xbf16>, vector<64x128xf32> -> vector<64x128xf32>
    %112 = arith.truncf %111 : vector<64x128xf32> to vector<64x128xbf16>
    %c64_35 = arith.constant 64 : index
    %c128_36 = arith.constant 128 : index
    %113 = vector.load %arg6[%c64_35, %c128_36] : memref<256x256xbf16, #tpu.memory_space<vmem>>, vector<64x128xbf16>
    tpu.vector_store %arg6[%c64_35, %c128_36], %112 {strides = array<i32>} : memref<256x256xbf16, #tpu.memory_space<vmem>>, vector<64x128xbf16>,
    %114 = vector.extract_strided_slice %5 {offsets = [128, 128], sizes = [64, 128], strides = [1, 1]} : vector<256x768xbf16> to vector<64x128xbf16>
    %115 = vector.extract_strided_slice %5 {offsets = [128, 384], sizes = [64, 128], strides = [1, 1]} : vector<256x768xbf16> to vector<64x128xbf16>
    %116 = vector.extract_strided_slice %5 {offsets = [128, 640], sizes = [64, 128], strides = [1, 1]} : vector<256x768xbf16> to vector<64x128xbf16>
    %cst_37 = arith.constant dense<0.000000e+00> : vector<64x64xf32>
    %117 = tpu.matmul %114, %115, %cst_37 {dimension_numbers = #tpu.dot_dimension_numbers<[1], [1], [0], [0], [0, 0, 1, 0], [], []>} : vector<64x128xbf16>, vector<64x128xbf16>, vector<64x64xf32> -> vector<64x64xf32>
    %cst_38 = arith.constant dense<0xFF800000> : vector<64xf32>
    %118 = vector.multi_reduction <maximumf>, %117, %cst_38 [1] : vector<64x64xf32> to vector<64xf32>
    %119 = vector.shape_cast %118 : vector<64xf32> to vector<64x1xf32>
    %120 = vector.broadcast %119 : vector<64x1xf32> to vector<64x64xf32>
    %121 = arith.subf %117, %120 : vector<64x64xf32>
    %122 = math.exp %121 : vector<64x64xf32>
    %cst_39 = arith.constant dense<0.000000e+00> : vector<64xf32>
    %123 = vector.multi_reduction <add>, %122, %cst_39 [1] : vector<64x64xf32> to vector<64xf32>
    %124 = vector.shape_cast %123 : vector<64xf32> to vector<64x1xf32>
    %125 = tpu.reciprocal %124 {approx = true} : vector<64x1xf32> -> vector<64x1xf32>
    %126 = vector.broadcast %125 : vector<64x1xf32> to vector<64x64xf32>
    %127 = arith.mulf %122, %126 : vector<64x64xf32>
    %128 = arith.truncf %127 : vector<64x64xf32> to vector<64x64xbf16>
    %cst_40 = arith.constant dense<0.000000e+00> : vector<64x128xf32>
    %129 = tpu.matmul %128, %116, %cst_40 {dimension_numbers = #tpu.dot_dimension_numbers<[1], [0], [0], [1], [0, 0, 1, 1], [], []>} : vector<64x64xbf16>, vector<64x128xbf16>, vector<64x128xf32> -> vector<64x128xf32>
    %130 = arith.truncf %129 : vector<64x128xf32> to vector<64x128xbf16>
    %c128_41 = arith.constant 128 : index
    %c128_42 = arith.constant 128 : index
    %131 = vector.load %arg6[%c128_41, %c128_42] : memref<256x256xbf16, #tpu.memory_space<vmem>>, vector<64x128xbf16>
    tpu.vector_store %arg6[%c128_41, %c128_42], %130 {strides = array<i32>} : memref<256x256xbf16, #tpu.memory_space<vmem>>, vector<64x128xbf16>,
    %132 = vector.extract_strided_slice %5 {offsets = [192, 128], sizes = [64, 128], strides = [1, 1]} : vector<256x768xbf16> to vector<64x128xbf16>
    %133 = vector.extract_strided_slice %5 {offsets = [192, 384], sizes = [64, 128], strides = [1, 1]} : vector<256x768xbf16> to vector<64x128xbf16>
    %134 = vector.extract_strided_slice %5 {offsets = [192, 640], sizes = [64, 128], strides = [1, 1]} : vector<256x768xbf16> to vector<64x128xbf16>
    %cst_43 = arith.constant dense<0.000000e+00> : vector<64x64xf32>
    %135 = tpu.matmul %132, %133, %cst_43 {dimension_numbers = #tpu.dot_dimension_numbers<[1], [1], [0], [0], [0, 0, 1, 0], [], []>} : vector<64x128xbf16>, vector<64x128xbf16>, vector<64x64xf32> -> vector<64x64xf32>
    %cst_44 = arith.constant dense<0xFF800000> : vector<64xf32>
    %136 = vector.multi_reduction <maximumf>, %135, %cst_44 [1] : vector<64x64xf32> to vector<64xf32>
    %137 = vector.shape_cast %136 : vector<64xf32> to vector<64x1xf32>
    %138 = vector.broadcast %137 : vector<64x1xf32> to vector<64x64xf32>
    %139 = arith.subf %135, %138 : vector<64x64xf32>
    %140 = math.exp %139 : vector<64x64xf32>
    %cst_45 = arith.constant dense<0.000000e+00> : vector<64xf32>
    %141 = vector.multi_reduction <add>, %140, %cst_45 [1] : vector<64x64xf32> to vector<64xf32>
    %142 = vector.shape_cast %141 : vector<64xf32> to vector<64x1xf32>
    %143 = tpu.reciprocal %142 {approx = true} : vector<64x1xf32> -> vector<64x1xf32>
    %144 = vector.broadcast %143 : vector<64x1xf32> to vector<64x64xf32>
    %145 = arith.mulf %140, %144 : vector<64x64xf32>
    %146 = arith.truncf %145 : vector<64x64xf32> to vector<64x64xbf16>
    %cst_46 = arith.constant dense<0.000000e+00> : vector<64x128xf32>
    %147 = tpu.matmul %146, %134, %cst_46 {dimension_numbers = #tpu.dot_dimension_numbers<[1], [0], [0], [1], [0, 0, 1, 1], [], []>} : vector<64x64xbf16>, vector<64x128xbf16>, vector<64x128xf32> -> vector<64x128xf32>
    %148 = arith.truncf %147 : vector<64x128xf32> to vector<64x128xbf16>
    %c192_47 = arith.constant 192 : index
    %c128_48 = arith.constant 128 : index
    %149 = vector.load %arg6[%c192_47, %c128_48] : memref<256x256xbf16, #tpu.memory_space<vmem>>, vector<64x128xbf16>
    tpu.vector_store %arg6[%c192_47, %c128_48], %148 {strides = array<i32>} : memref<256x256xbf16, #tpu.memory_space<vmem>>, vector<64x128xbf16>,
    %c0_49 = arith.constant 0 : index
    %c0_50 = arith.constant 0 : index
    %150 = vector.load %arg6[%c0_49, %c0_50] : memref<256x256xbf16, #tpu.memory_space<vmem>>, vector<256x256xbf16>
    %c0_51 = arith.constant 0 : index
    %c0_52 = arith.constant 0 : index
    %151 = vector.load %arg3[%c0_51, %c0_52] : memref<256x128xbf16, #tpu.memory_space<vmem>>, vector<256x128xbf16>
    %cst_53 = arith.constant dense<0.000000e+00> : vector<256x128xf32>
    %152 = tpu.matmul %150, %151, %cst_53 {dimension_numbers = #tpu.dot_dimension_numbers<[1], [0], [0], [1], [0, 0, 1, 1], [], []>} : vector<256x256xbf16>, vector<256x128xbf16>, vector<256x128xf32> -> vector<256x128xf32>
    %c0_54 = arith.constant 0 : index
    %c0_55 = arith.constant 0 : index
    %153 = vector.load %arg4[%c0_54, %c0_55] : memref<1x128xf32, #tpu.memory_space<vmem>>, vector<1x128xf32>
    %154 = vector.broadcast %153 : vector<1x128xf32> to vector<256x128xf32>
    %155 = arith.addf %152, %154 : vector<256x128xf32>
    %156 = vector.shape_cast %155 : vector<256x128xf32> to vector<4x64x128xf32>
    %c0_56 = arith.constant 0 : index
    %c0_57 = arith.constant 0 : index
    %c0_58 = arith.constant 0 : index
    %157 = vector.load %arg5[%c0_56, %c0_57, %c0_58] : memref<4x64x128xf32, #tpu.memory_space<vmem>>, vector<4x64x128xf32>
    tpu.vector_store %arg5[%c0_56, %c0_57, %c0_58], %156 {strides = array<i32>} : memref<4x64x128xf32, #tpu.memory_space<vmem>>, vector<4x64x128xf32>,
    return
  }
  func.func @transform_0(%arg0: i32) -> (i32, i32, i32) {
    %c0_i32 = arith.constant 0 : i32
    %c0_i32_0 = arith.constant 0 : i32
    %c0_i32_1 = arith.constant 0 : i32
    return %arg0, %c0_i32, %c0_i32_0 : i32, i32, i32
  }
  func.func @transform_1(%arg0: i32) -> (i32, i32) {
    %c0_i32 = arith.constant 0 : i32
    %c0_i32_0 = arith.constant 0 : i32
    %c0_i32_1 = arith.constant 0 : i32
    return %c0_i32, %c0_i32_0 : i32, i32
  }
  func.func @transform_2(%arg0: i32) -> (i32, i32) {
    %c0_i32 = arith.constant 0 : i32
    %c0_i32_0 = arith.constant 0 : i32
    %c0_i32_1 = arith.constant 0 : i32
    return %c0_i32, %c0_i32_0 : i32, i32
  }
  func.func @transform_3(%arg0: i32) -> (i32, i32) {
    %c0_i32 = arith.constant 0 : i32
    %c0_i32_0 = arith.constant 0 : i32
    %c0_i32_1 = arith.constant 0 : i32
    return %c0_i32, %c0_i32_0 : i32, i32
  }
  func.func @transform_4(%arg0: i32) -> (i32, i32, i32) {
    %c0_i32 = arith.constant 0 : i32
    %c0_i32_0 = arith.constant 0 : i32
    %c0_i32_1 = arith.constant 0 : i32
    return %arg0, %c0_i32, %c0_i32_0 : i32, i32, i32
  }
}

</mosaic_0001>

<llo_original>
// kernel: tpu_custom_call.1
$region0: #{tpu_custom_call.1}
  #allocation0 [shape = 'u32[]', space=smem, size = 0x4, offset = 0x4, fixed_abs, tag = 'smem constant byte address 0x4 - core index']
  #allocation1 [shape = 'u32[144,128]{1,0:T(1,128)}', space=vmem, size = 0x12000, scoped, tag = 'internal scratch']
  #allocation2 [shape = 'bf16[256,256]{1,0:T(16,128)(2,1)}', space=vmem, size = 0x20000, scoped, tag = 'scratch operand']
  %s0 = inlined_call_operand.hbm [shape: f32[8,64,128], index: 0, kind: input, shape index: {}]
  %s1 = inlined_call_operand.hbm [shape: bf16[128,768], index: 1, kind: input, shape index: {}]
  %s2 = inlined_call_operand.hbm [shape: bf16[256,128], index: 2, kind: input, shape index: {}]
  %s3 = inlined_call_operand.vmem [shape: f32[1,128], index: 3, kind: input, shape index: {}]
  %s4 = inlined_call_operand.hbm [shape: f32[8,64,128], index: 4, kind: output, shape index: {}]
  %s5 = sld [smem:[#allocation0]]
  $region61: #{tpu_custom_call.1} parent=0
    _
  %s7 = ssub.s32 1, %s5
  %s8 = scalar_select 0, %s7, %s5
  $region1: #{tpu_custom_call.1} parent=0
    #allocation3 [shape = 'u8[262144]{0}', space=vmem, size = 0x40000, scoped, tag = 'input window, operand 0']
    #allocation4 [shape = 's32[2]{0}', space=sflag, size = 0x8, scoped, tag = 'scoped memory for tpu_custom_call.1']
    #allocation5 [shape = 's32[2]{0}', space=sflag, size = 0x8, scoped, tag = 'scoped memory for tpu_custom_call.1']
    #allocation6 [shape = 'u8[196608]{0}', space=vmem, size = 0x30000, scoped, tag = 'input window, operand 1, single buffered']
    #allocation7 [shape = 's32[1]{0}', space=sflag, size = 0x4, scoped, tag = 'scoped memory for tpu_custom_call.1']
    #allocation8 [shape = 'u8[65536]{0}', space=vmem, size = 0x10000, scoped, tag = 'input window, operand 2, single buffered']
    #allocation9 [shape = 'u8[262144]{0}', space=vmem, size = 0x40000, scoped, tag = 'output window, operand 0']
    %9 = vsyncpa [#allocation4], 0
    %s10 = scalar_lea.sflag [#allocation4], 1
    %11 = vsyncpa %s10, 0
    %12 = vsyncpa [#allocation7], 0
    %13 = vsyncpa [#allocation5], 0
    %s14 = scalar_lea.sflag [#allocation5], 1
    %15 = vsyncpa %s14, 0
    loop: start=0, step=1, limit=4
    $region2: #{tpu_custom_call.1} parent=1 // loop_pre_header
      _
    $region3: #{tpu_custom_call.1} parent=1 // loop_header
      %s17 = sphi 0, %s21
      %p18 = scmp.ge.s32.totalorder %s17, 4
      %s27 = sphi 0, %s29
      %s30 = sphi 0, %s27
      %s31 = sphi 0, %s30
      %s47 = sphi 0, %s31
      %s51 = sphi 0, %s51
      %s53 = sphi 0, %s51
      %s54 = sphi 0, %s53
      %s68 = sphi 0, %s54
      %s72 = sphi 0, %s72
      %s74 = sphi 0, %s72
      %s75 = sphi 0, %s74
      %s89 = sphi 0, %s75
      %s93 = sphi 0, %s93
      %s95 = sphi 0, %s93
      %s96 = sphi 0, %s95
      %s110 = sphi 0, %s96
      %s116 = sphi 0, %s118
      %s119 = sphi 0, %s116
      %s120 = sphi 0, %s119
      %s136 = sphi 0, %s120
    $region4: #{tpu_custom_call.1} parent=1 // loop_header_branch
      %20 = sbr.rel (%p18) target = $region8
    $region5: #{tpu_custom_call.1} parent=1 // loop_body
      %s22 = ssub.s32 %s17, 1
      %s23 = ssub.s32 %s17, 2
      %s24 = sadd.s32 %s17, 1
      %s25 = ssub.s32 %s17, %s24
      %p26 = scmp.eq.s32.totalorder %s25, 0
      %s28 = sadd.s32 %s27, 1
      %s29 = scalar_select %p26, %s27, %s28
      %p32 = pneg %p26
      %p33 = scmp.eq.s32.totalorder %s17, 1
      %p34 = por %p32, %p33
      %p35 = scmp.ne.s32.totalorder %s27, %s30
      %p36 = scmp.eq.s32.totalorder %s17, 0
      %p37 = por %p35, %p36
      %p38 = scmp.ne.s32.totalorder %s27, %s30
      %p39 = scmp.eq.s32.totalorder %s22, 1
      %p40 = por %p38, %p39
      %p41 = scmp.ne.s32.totalorder %s30, %s31
      %p42 = scmp.eq.s32.totalorder %s22, 0
      %p43 = por %p41, %p42
      %p44 = scmp.ne.s32.totalorder %s30, %s31
      %p45 = scmp.eq.s32.totalorder %s23, 1
      %p46 = por %p44, %p45
      %p48 = scmp.ne.s32.totalorder %s31, %s47
      %p49 = scmp.eq.s32.totalorder %s23, 0
      %p50 = por %p48, %p49
      %s52 = sadd.s32 %s51, 1
      %p55 = scmp.eq.s32.totalorder %s17, 1
      %p56 = scmp.ne.s32.totalorder %s51, %s53
      %p57 = scmp.eq.s32.totalorder %s17, 0
      %p58 = por %p56, %p57
      %p59 = scmp.ne.s32.totalorder %s51, %s53
      %p60 = scmp.eq.s32.totalorder %s22, 1
      %p61 = por %p59, %p60
      %p62 = scmp.ne.s32.totalorder %s53, %s54
      %p63 = scmp.eq.s32.totalorder %s22, 0
      %p64 = por %p62, %p63
      %p65 = scmp.ne.s32.totalorder %s53, %s54
      %p66 = scmp.eq.s32.totalorder %s23, 1
      %p67 = por %p65, %p66
      %p69 = scmp.ne.s32.totalorder %s54, %s68
      %p70 = scmp.eq.s32.totalorder %s23, 0
      %p71 = por %p69, %p70
      %s73 = sadd.s32 %s72, 1
      %p76 = scmp.eq.s32.totalorder %s17, 1
      %p77 = scmp.ne.s32.totalorder %s72, %s74
      %p78 = scmp.eq.s32.totalorder %s17, 0
      %p79 = por %p77, %p78
      %p80 = scmp.ne.s32.totalorder %s72, %s74
      %p81 = scmp.eq.s32.totalorder %s22, 1
      %p82 = por %p80, %p81
      %p83 = scmp.ne.s32.totalorder %s74, %s75
      %p84 = scmp.eq.s32.totalorder %s22, 0
      %p85 = por %p83, %p84
      %p86 = scmp.ne.s32.totalorder %s74, %s75
      %p87 = scmp.eq.s32.totalorder %s23, 1
      %p88 = por %p86, %p87
      %p90 = scmp.ne.s32.totalorder %s75, %s89
      %p91 = scmp.eq.s32.totalorder %s23, 0
      %p92 = por %p90, %p91
      %s94 = sadd.s32 %s93, 1
      %p97 = scmp.eq.s32.totalorder %s17, 1
      %p98 = scmp.ne.s32.totalorder %s93, %s95
      %p99 = scmp.eq.s32.totalorder %s17, 0
      %p100 = por %p98, %p99
      %p101 = scmp.ne.s32.totalorder %s93, %s95
      %p102 = scmp.eq.s32.totalorder %s22, 1
      %p103 = por %p101, %p102
      %p104 = scmp.ne.s32.totalorder %s95, %s96
      %p105 = scmp.eq.s32.totalorder %s22, 0
      %p106 = por %p104, %p105
      %p107 = scmp.ne.s32.totalorder %s95, %s96
      %p108 = scmp.eq.s32.totalorder %s23, 1
      %p109 = por %p107, %p108
      %p111 = scmp.ne.s32.totalorder %s96, %s110
      %p112 = scmp.eq.s32.totalorder %s23, 0
      %p113 = por %p111, %p112
      %s114 = ssub.s32 %s17, %s24
      %p115 = scmp.eq.s32.totalorder %s114, 0
      %s117 = sadd.s32 %s116, 1
      %s118 = scalar_select %p115, %s116, %s117
      %p121 = pneg %p115
      %p122 = scmp.eq.s32.totalorder %s17, 1
      %p123 = por %p121, %p122
      %p124 = scmp.ne.s32.totalorder %s116, %s119
      %p125 = scmp.eq.s32.totalorder %s17, 0
      %p126 = por %p124, %p125
      %p127 = scmp.ne.s32.totalorder %s116, %s119
      %p128 = scmp.eq.s32.totalorder %s22, 1
      %p129 = por %p127, %p128
      %p130 = scmp.ne.s32.totalorder %s119, %s120
      %p131 = scmp.eq.s32.totalorder %s22, 0
      %p132 = por %p130, %p131
      %p133 = scmp.ne.s32.totalorder %s119, %s120
      %p134 = scmp.eq.s32.totalorder %s23, 1
      %p135 = por %p133, %p134
      %p137 = scmp.ne.s32.totalorder %s120, %s136
      %p138 = scmp.eq.s32.totalorder %s23, 0
      %p139 = por %p137, %p138
      %p140 = scmp.le.s32.totalorder 1, %s17
      %p141 = scmp.lt.s32.totalorder %s17, 3
      %p142 = pnand %p140, %p141
      %p143 = pneg %p142
      // Predicated region
      $region9: #{tpu_custom_call.1} parent=5 // pred_check
        _
      $region10: #{tpu_custom_call.1} parent=5 // pred_check_branch
        %145 = sbr.rel (%p142) target = $region12
      $region11: #{tpu_custom_call.1} parent=5 // pred_region
        %s146 = ssub.s32 %s17, 1
        // Predicated region
        $region13: #{tpu_custom_call.1} parent=11 // pred_check
          %p147 = pneg %p64
        $region14: #{tpu_custom_call.1} parent=11 // pred_check_branch
          %149 = sbr.rel (%p147) target = $region16
        $region15: #{tpu_custom_call.1} parent=11 // pred_region
          %s151 = ssub.s32 6144, 6144
          %152 = vsyncadd [#allocation7], %s151
          %s153 = sshll.u32 [#allocation6], 4
          %s154 = int_to_ptr.vmem [resolvable:$true] %s153
          %159 = dma.hbm_to_vmem [thread:$0]  %s1, 6144, %s154, [#allocation7], 384, 384, 24
        $region16: #{tpu_custom_call.1} parent=11 // pred_fallthru
          _
        // Predicated region
        $region17: #{tpu_custom_call.1} parent=11 // pred_check
          %p160 = pneg %p85
        $region18: #{tpu_custom_call.1} parent=11 // pred_check_branch
          %162 = sbr.rel (%p160) target = $region20
        $region19: #{tpu_custom_call.1} parent=11 // pred_region
          %s164 = ssub.s32 2048, 2048
          %165 = vsyncadd [#allocation7], %s164
          %s166 = sshll.u32 [#allocation8], 4
          %s167 = int_to_ptr.vmem [resolvable:$true] %s166
          %172 = dma.hbm_to_vmem [thread:$0]  %s2, 2048, %s167, [#allocation7], 64, 64, 4
        $region20: #{tpu_custom_call.1} parent=11 // pred_fallthru
          _
        // Predicated region
        $region21: #{tpu_custom_call.1} parent=11 // pred_check
          %p173 = pneg %p106
        $region22: #{tpu_custom_call.1} parent=11 // pred_check_branch
          %175 = sbr.rel (%p173) target = $region24
        $region23: #{tpu_custom_call.1} parent=11 // pred_region
          _
        $region24: #{tpu_custom_call.1} parent=11 // pred_fallthru
          _
      $region12: #{tpu_custom_call.1} parent=5 // pred_fallthru
        _
      %p176 = scmp.lt.s32.totalorder %s17, 2
      // Predicated region
      $region25: #{tpu_custom_call.1} parent=5 // pred_check
        %p177 = pneg %p176
      $region26: #{tpu_custom_call.1} parent=5 // pred_check_branch
        %179 = sbr.rel (%p177) target = $region28
      $region27: #{tpu_custom_call.1} parent=5 // pred_region
        // Predicated region
        $region29: #{tpu_custom_call.1} parent=27 // pred_check
          %p180 = pneg %p37
        $region30: #{tpu_custom_call.1} parent=27 // pred_check_branch
          %182 = sbr.rel (%p180) target = $region32
        $region31: #{tpu_custom_call.1} parent=27 // pred_region
          %s183 = sand.u32 %s27, 1
          %s184 = scalar_lea.sflag [#allocation4], %s183
          %s185 = sand.u32 %s27, 1
          %s186 = smul.addr %s185, 256
          %s187 = scalar_lea.vmem [#allocation3], %s186
          %s188 = smul.u32 4, %s17
          %s190 = ssub.s32 4096, 4096
          %191 = vsyncadd %s184, %s190
          %s192 = smul.addr %s188, 8
          %s193 = smul.addr %s192, 128
          %s194 = scalar_lea.hbm %s0, %s193
          %s195 = sshll.u32 %s187, 4
          %s196 = int_to_ptr.vmem [resolvable:$true] %s195
          %201 = dma.hbm_to_vmem [thread:$0]  %s194, 4096, %s196, %s184, 128, 128, 8
        $region32: #{tpu_custom_call.1} parent=27 // pred_fallthru
          _
      $region28: #{tpu_custom_call.1} parent=5 // pred_fallthru
        _
      %p202 = scmp.le.s32.totalorder 1, %s17
      %p203 = scmp.lt.s32.totalorder %s17, 3
      %p204 = pnand %p202, %p203
      %p205 = pneg %p204
      // Predicated region
      $region33: #{tpu_custom_call.1} parent=5 // pred_check
        _
      $region34: #{tpu_custom_call.1} parent=5 // pred_check_branch
        %207 = sbr.rel (%p204) target = $region36
      $region35: #{tpu_custom_call.1} parent=5 // pred_region
        %s208 = ssub.s32 %s17, 1
        %s209 = sand.u32 %s30, 1
        %s210 = scalar_lea.sflag [#allocation4], %s209
        %s211 = sand.u32 %s30, 1
        %s212 = smul.addr %s211, 256
        %s213 = scalar_lea.vmem [#allocation3], %s212
        // Predicated region
        $region37: #{tpu_custom_call.1} parent=35 // pred_check
          %p214 = pneg %p43
        $region38: #{tpu_custom_call.1} parent=35 // pred_check_branch
          %216 = sbr.rel (%p214) target = $region40
        $region39: #{tpu_custom_call.1} parent=35 // pred_region
          %217 = dma.done %s210, 4096
        $region40: #{tpu_custom_call.1} parent=35 // pred_fallthru
          _
        // Predicated region
        $region41: #{tpu_custom_call.1} parent=35 // pred_check
          %p218 = pneg %p64
        $region42: #{tpu_custom_call.1} parent=35 // pred_check_branch
          %220 = sbr.rel (%p218) target = $region44
        $region43: #{tpu_custom_call.1} parent=35 // pred_region
          %221 = dma.done [#allocation7], 6144
        $region44: #{tpu_custom_call.1} parent=35 // pred_fallthru
          _
        // Predicated region
        $region45: #{tpu_custom_call.1} parent=35 // pred_check
          %p222 = pneg %p85
        $region46: #{tpu_custom_call.1} parent=35 // pred_check_branch
          %224 = sbr.rel (%p222) target = $region48
        $region47: #{tpu_custom_call.1} parent=35 // pred_region
          %225 = dma.done [#allocation7], 2048
        $region48: #{tpu_custom_call.1} parent=35 // pred_fallthru
          _
        %s226 = sand.u32 %s30, 1
        %s227 = scalar_lea.sflag [#allocation4], %s226
        %s228 = sand.u32 %s30, 1
        %s229 = smul.addr %s228, 256
        %s230 = scalar_lea.vmem [#allocation3], %s229
        %p231 = pneg %p43
        %p232 = pneg %p40
        %p233 = pneg %p64
        %p234 = pneg %p61
        %p235 = pneg %p85
        %p236 = pneg %p82
        %p237 = pneg %p106
        %p238 = pneg %p103
        %p239 = pneg %p132
        %p240 = pneg %p129
        %s241 = sand.u32 %s119, 1
        %s242 = scalar_lea.sflag [#allocation5], %s241
        %s243 = sand.u32 %s119, 1
        %s244 = smul.addr %s243, 256
        %s245 = scalar_lea.vmem [#allocation9], %s244
        %s246 = smul.u32 4, %s22
        %s247 = smul.u32 4, %s22
        %v249 = vld [vmem:[%s213] sm:$0xff]
        %v250 = vld [vmem:[%s213 + $0x8] sm:$0xff]
        %v251 = vld [vmem:[%s213 + $0x10] sm:$0xff]
        %v252 = vld [vmem:[%s213 + $0x18] sm:$0xff]
        %v253 = vld [vmem:[%s213 + $0x20] sm:$0xff]
        %v254 = vld [vmem:[%s213 + $0x28] sm:$0xff]
        %v255 = vld [vmem:[%s213 + $0x30] sm:$0xff]
        %v256 = vld [vmem:[%s213 + $0x38] sm:$0xff]
        %v257 = vld [vmem:[%s213 + $0x40] sm:$0xff]
        %v258 = vld [vmem:[%s213 + $0x48] sm:$0xff]
        %v259 = vld [vmem:[%s213 + $0x50] sm:$0xff]
        %v260 = vld [vmem:[%s213 + $0x58] sm:$0xff]
        %v261 = vld [vmem:[%s213 + $0x60] sm:$0xff]
        %v262 = vld [vmem:[%s213 + $0x68] sm:$0xff]
        %v263 = vld [vmem:[%s213 + $0x70] sm:$0xff]
        %v264 = vld [vmem:[%s213 + $0x78] sm:$0xff]
        %v265 = vld [vmem:[%s213 + $0x80] sm:$0xff]
        %v266 = vld [vmem:[%s213 + $0x88] sm:$0xff]
        %v267 = vld [vmem:[%s213 + $0x90] sm:$0xff]
        %v268 = vld [vmem:[%s213 + $0x98] sm:$0xff]
        %v269 = vld [vmem:[%s213 + $0xa0] sm:$0xff]
        %v270 = vld [vmem:[%s213 + $0xa8] sm:$0xff]
        %v271 = vld [vmem:[%s213 + $0xb0] sm:$0xff]
        %v272 = vld [vmem:[%s213 + $0xb8] sm:$0xff]
        %v273 = vld [vmem:[%s213 + $0xc0] sm:$0xff]
        %v274 = vld [vmem:[%s213 + $0xc8] sm:$0xff]
        %v275 = vld [vmem:[%s213 + $0xd0] sm:$0xff]
        %v276 = vld [vmem:[%s213 + $0xd8] sm:$0xff]
        %v277 = vld [vmem:[%s213 + $0xe0] sm:$0xff]
        %v278 = vld [vmem:[%s213 + $0xe8] sm:$0xff]
        %v279 = vld [vmem:[%s213 + $0xf0] sm:$0xff]
        %v280 = vld [vmem:[%s213 + $0xf8] sm:$0xff]
        %v281 = vpack.c.bf16 %v250, %v249
        %v282 = vpack.c.bf16 %v252, %v251
        %v283 = vpack.c.bf16 %v254, %v253
        %v284 = vpack.c.bf16 %v256, %v255
        %v285 = vpack.c.bf16 %v258, %v257
        %v286 = vpack.c.bf16 %v260, %v259
        %v287 = vpack.c.bf16 %v262, %v261
        %v288 = vpack.c.bf16 %v264, %v263
        %v289 = vpack.c.bf16 %v266, %v265
        %v290 = vpack.c.bf16 %v268, %v267
        %v291 = vpack.c.bf16 %v270, %v269
        %v292 = vpack.c.bf16 %v272, %v271
        %v293 = vpack.c.bf16 %v274, %v273
        %v294 = vpack.c.bf16 %v276, %v275
        %v295 = vpack.c.bf16 %v278, %v277
        %v296 = vpack.c.bf16 %v280, %v279
        %v297 = vld [vmem:[#allocation6] sm:$0xff]
        %v298 = vld [vmem:[#allocation6 + $0x8] sm:$0xff]
        %v299 = vld [vmem:[#allocation6 + $0x10] sm:$0xff]
        %v300 = vld [vmem:[#allocation6 + $0x18] sm:$0xff]
        %v301 = vld [vmem:[#allocation6 + $0x20] sm:$0xff]
        %v302 = vld [vmem:[#allocation6 + $0x28] sm:$0xff]
        %v303 = vld [vmem:[#allocation6 + $0x30] sm:$0xff]
        %v304 = vld [vmem:[#allocation6 + $0x38] sm:$0xff]
        %v305 = vld [vmem:[#allocation6 + $0x40] sm:$0xff]
        %v306 = vld [vmem:[#allocation6 + $0x48] sm:$0xff]
        %v307 = vld [vmem:[#allocation6 + $0x50] sm:$0xff]
        %v308 = vld [vmem:[#allocation6 + $0x58] sm:$0xff]
        %v309 = vld [vmem:[#allocation6 + $0x60] sm:$0xff]
        %v310 = vld [vmem:[#allocation6 + $0x68] sm:$0xff]
        %v311 = vld [vmem:[#allocation6 + $0x70] sm:$0xff]
        %v312 = vld [vmem:[#allocation6 + $0x78] sm:$0xff]
        %v313 = vld [vmem:[#allocation6 + $0x80] sm:$0xff]
        %v314 = vld [vmem:[#allocation6 + $0x88] sm:$0xff]
        %v315 = vld [vmem:[#allocation6 + $0x90] sm:$0xff]
        %v316 = vld [vmem:[#allocation6 + $0x98] sm:$0xff]
        %v317 = vld [vmem:[#allocation6 + $0xa0] sm:$0xff]
        %v318 = vld [vmem:[#allocation6 + $0xa8] sm:$0xff]
        %v319 = vld [vmem:[#allocation6 + $0xb0] sm:$0xff]
        %v320 = vld [vmem:[#allocation6 + $0xb8] sm:$0xff]
        %v321 = vld [vmem:[#allocation6 + $0xc0] sm:$0xff]
        %v322 = vld [vmem:[#allocation6 + $0xc8] sm:$0xff]
        %v323 = vld [vmem:[#allocation6 + $0xd0] sm:$0xff]
        %v324 = vld [vmem:[#allocation6 + $0xd8] sm:$0xff]
        %v325 = vld [vmem:[#allocation6 + $0xe0] sm:$0xff]
        %v326 = vld [vmem:[#allocation6 + $0xe8] sm:$0xff]
        %v327 = vld [vmem:[#allocation6 + $0xf0] sm:$0xff]
        %v328 = vld [vmem:[#allocation6 + $0xf8] sm:$0xff]
        %v329 = vld [vmem:[#allocation6 + $0x100] sm:$0xff]
        %v330 = vld [vmem:[#allocation6 + $0x108] sm:$0xff]
        %v331 = vld [vmem:[#allocation6 + $0x110] sm:$0xff]
        %v332 = vld [vmem:[#allocation6 + $0x118] sm:$0xff]
        %v333 = vld [vmem:[#allocation6 + $0x120] sm:$0xff]
        %v334 = vld [vmem:[#allocation6 + $0x128] sm:$0xff]
        %v335 = vld [vmem:[#allocation6 + $0x130] sm:$0xff]
        %v336 = vld [vmem:[#allocation6 + $0x138] sm:$0xff]
        %v337 = vld [vmem:[#allocation6 + $0x140] sm:$0xff]
        %v338 = vld [vmem:[#allocation6 + $0x148] sm:$0xff]
        %v339 = vld [vmem:[#allocation6 + $0x150] sm:$0xff]
        %v340 = vld [vmem:[#allocation6 + $0x158] sm:$0xff]
        %v341 = vld [vmem:[#allocation6 + $0x160] sm:$0xff]
        %v342 = vld [vmem:[#allocation6 + $0x168] sm:$0xff]
        %v343 = vld [vmem:[#allocation6 + $0x170] sm:$0xff]
        %v344 = vld [vmem:[#allocation6 + $0x178] sm:$0xff]
        %v393 = vunpack.c.l.b16 %v297
        %v394 = vunpack.c.h.b16 %v297
        %v395 = vunpack.c.l.b16 %v298
        %v396 = vunpack.c.h.b16 %v298
        %v397 = vunpack.c.l.b16 %v299
        %v398 = vunpack.c.h.b16 %v299
        %v399 = vunpack.c.l.b16 %v300
        %v400 = vunpack.c.h.b16 %v300
        %v401 = vunpack.c.l.b16 %v301
        %v402 = vunpack.c.h.b16 %v301
        %v403 = vunpack.c.l.b16 %v302
        %v404 = vunpack.c.h.b16 %v302
        %v405 = vunpack.c.l.b16 %v303
        %v406 = vunpack.c.h.b16 %v303
        %v407 = vunpack.c.l.b16 %v304
        %v408 = vunpack.c.h.b16 %v304
        %v409 = vunpack.c.l.b16 %v305
        %v410 = vunpack.c.h.b16 %v305
        %v411 = vunpack.c.l.b16 %v306
        %v412 = vunpack.c.h.b16 %v306
        %v413 = vunpack.c.l.b16 %v307
        %v414 = vunpack.c.h.b16 %v307
        %v415 = vunpack.c.l.b16 %v308
        %v416 = vunpack.c.h.b16 %v308
        %v417 = vunpack.c.l.b16 %v309
        %v418 = vunpack.c.h.b16 %v309
        %v419 = vunpack.c.l.b16 %v310
        %v420 = vunpack.c.h.b16 %v310
        %v421 = vunpack.c.l.b16 %v311
        %v422 = vunpack.c.h.b16 %v311
        %v423 = vunpack.c.l.b16 %v312
        %v424 = vunpack.c.h.b16 %v312
        %v425 = vunpack.c.l.b16 %v313
        %v426 = vunpack.c.h.b16 %v313
        %v427 = vunpack.c.l.b16 %v314
        %v428 = vunpack.c.h.b16 %v314
        %v429 = vunpack.c.l.b16 %v315
        %v430 = vunpack.c.h.b16 %v315
        %v431 = vunpack.c.l.b16 %v316
        %v432 = vunpack.c.h.b16 %v316
        %v433 = vunpack.c.l.b16 %v317
        %v434 = vunpack.c.h.b16 %v317
        %v435 = vunpack.c.l.b16 %v318
        %v436 = vunpack.c.h.b16 %v318
        %v437 = vunpack.c.l.b16 %v319
        %v438 = vunpack.c.h.b16 %v319
        %v439 = vunpack.c.l.b16 %v320
        %v440 = vunpack.c.h.b16 %v320
        %v441 = vunpack.c.l.b16 %v321
        %v442 = vunpack.c.h.b16 %v321
        %v443 = vunpack.c.l.b16 %v322
        %v444 = vunpack.c.h.b16 %v322
        %v445 = vunpack.c.l.b16 %v323
        %v446 = vunpack.c.h.b16 %v323
        %v447 = vunpack.c.l.b16 %v324
        %v448 = vunpack.c.h.b16 %v324
        %v449 = vunpack.c.l.b16 %v325
        %v450 = vunpack.c.h.b16 %v325
        %v451 = vunpack.c.l.b16 %v326
        %v452 = vunpack.c.h.b16 %v326
        %v453 = vunpack.c.l.b16 %v327
        %v454 = vunpack.c.h.b16 %v327
        %v455 = vunpack.c.l.b16 %v328
        %v456 = vunpack.c.h.b16 %v328
        %v457 = vunpack.c.l.b16 %v329
        %v458 = vunpack.c.h.b16 %v329
        %v459 = vunpack.c.l.b16 %v330
        %v460 = vunpack.c.h.b16 %v330
        %v461 = vunpack.c.l.b16 %v331
        %v462 = vunpack.c.h.b16 %v331
        %v463 = vunpack.c.l.b16 %v332
        %v464 = vunpack.c.h.b16 %v332
        %v465 = vunpack.c.l.b16 %v333
        %v466 = vunpack.c.h.b16 %v333
        %v467 = vunpack.c.l.b16 %v334
        %v468 = vunpack.c.h.b16 %v334
        %v469 = vunpack.c.l.b16 %v335
        %v470 = vunpack.c.h.b16 %v335
        %v471 = vunpack.c.l.b16 %v336
        %v472 = vunpack.c.h.b16 %v336
        %v473 = vunpack.c.l.b16 %v337
        %v474 = vunpack.c.h.b16 %v337
        %v475 = vunpack.c.l.b16 %v338
        %v476 = vunpack.c.h.b16 %v338
        %v477 = vunpack.c.l.b16 %v339
        %v478 = vunpack.c.h.b16 %v339
        %v479 = vunpack.c.l.b16 %v340
        %v480 = vunpack.c.h.b16 %v340
        %v481 = vunpack.c.l.b16 %v341
        %v482 = vunpack.c.h.b16 %v341
        %v483 = vunpack.c.l.b16 %v342
        %v484 = vunpack.c.h.b16 %v342
        %v485 = vunpack.c.l.b16 %v343
        %v486 = vunpack.c.h.b16 %v343
        %v487 = vunpack.c.l.b16 %v344
        %v488 = vunpack.c.h.b16 %v344
        %v489 = vpack.c.b16 %v399, %v393
        %v490 = vpack.c.b16 %v400, %v394
        %v491 = vpack.c.b16 %v401, %v395
        %v492 = vpack.c.b16 %v402, %v396
        %v493 = vpack.c.b16 %v403, %v397
        %v494 = vpack.c.b16 %v404, %v398
        %v495 = vpack.c.b16 %v411, %v405
        %v496 = vpack.c.b16 %v412, %v406
        %v497 = vpack.c.b16 %v413, %v407
        %v498 = vpack.c.b16 %v414, %v408
        %v499 = vpack.c.b16 %v415, %v409
        %v500 = vpack.c.b16 %v416, %v410
        %v501 = vpack.c.b16 %v423, %v417
        %v502 = vpack.c.b16 %v424, %v418
        %v503 = vpack.c.b16 %v425, %v419
        %v504 = vpack.c.b16 %v426, %v420
        %v505 = vpack.c.b16 %v427, %v421
        %v506 = vpack.c.b16 %v428, %v422
        %v507 = vpack.c.b16 %v435, %v429
        %v508 = vpack.c.b16 %v436, %v430
        %v509 = vpack.c.b16 %v437, %v431
        %v510 = vpack.c.b16 %v438, %v432
        %v511 = vpack.c.b16 %v439, %v433
        %v512 = vpack.c.b16 %v440, %v434
        %v513 = vpack.c.b16 %v447, %v441
        %v514 = vpack.c.b16 %v448, %v442
        %v515 = vpack.c.b16 %v449, %v443
        %v516 = vpack.c.b16 %v450, %v444
        %v517 = vpack.c.b16 %v451, %v445
        %v518 = vpack.c.b16 %v452, %v446
        %v519 = vpack.c.b16 %v459, %v453
        %v520 = vpack.c.b16 %v460, %v454
        %v521 = vpack.c.b16 %v461, %v455
        %v522 = vpack.c.b16 %v462, %v456
        %v523 = vpack.c.b16 %v463, %v457
        %v524 = vpack.c.b16 %v464, %v458
        %v525 = vpack.c.b16 %v471, %v465
        %v526 = vpack.c.b16 %v472, %v466
        %v527 = vpack.c.b16 %v473, %v467
        %v528 = vpack.c.b16 %v474, %v468
        %v529 = vpack.c.b16 %v475, %v469
        %v530 = vpack.c.b16 %v476, %v470
        %v531 = vpack.c.b16 %v483, %v477
        %v532 = vpack.c.b16 %v484, %v478
        %v533 = vpack.c.b16 %v485, %v479
        %v534 = vpack.c.b16 %v486, %v480
        %v535 = vpack.c.b16 %v487, %v481
        %v536 = vpack.c.b16 %v488, %v482
        %585 = vmatprep.subr.bf16.mxu0 %v490
        %586 = vmatpush1.bf16.msra.mxu0 %v489
        %587 = vmatprep.subr.bf16.mxu0 %v496
        %588 = vmatpush1.bf16.msra.mxu0 %v495
        %589 = vmatprep.subr.bf16.mxu0 %v502
        %590 = vmatpush1.bf16.msra.mxu0 %v501
        %591 = vmatprep.subr.bf16.mxu0 %v508
        %592 = vmatpush1.bf16.msra.mxu0 %v507
        %593 = vmatprep.subr.bf16.mxu0 %v514
        %594 = vmatpush1.bf16.msra.mxu0 %v513
        %595 = vmatprep.subr.bf16.mxu0 %v520
        %596 = vmatpush1.bf16.msra.mxu0 %v519
        %597 = vmatprep.subr.bf16.mxu0 %v526
        %598 = vmatpush1.bf16.msra.mxu0 %v525
        %599 = vmatprep.subr.bf16.mxu0 %v532
        %600 = vmatpush1.bf16.msra.mxu0 %v531
        %601 = vmatprep.subr.bf16.mxu0 0
        %602 = vmatpush1.bf16.msra.mxu0 0
        %603 = vmatprep.subr.bf16.mxu0 0
        %604 = vmatpush1.bf16.msra.mxu0 0
        %605 = vmatprep.subr.bf16.mxu0 0
        %606 = vmatpush1.bf16.msra.mxu0 0
        %607 = vmatprep.subr.bf16.mxu0 0
        %608 = vmatpush1.bf16.msra.mxu0 0
        %609 = vmatprep.subr.bf16.mxu0 0
        %610 = vmatpush1.bf16.msra.mxu0 0
        %611 = vmatprep.subr.bf16.mxu0 0
        %612 = vmatpush1.bf16.msra.mxu0 0
        %613 = vmatprep.subr.bf16.mxu0 0
        %614 = vmatpush1.bf16.msra.mxu0 0
        %615 = vmatprep.subr.bf16.mxu0 0
        %616 = vmatpush1.bf16.msra.mxu0 0
        %617 = vmatprep.mubr.bf16.mxu0 0
        %618 = vmatmul.mubr.bf16.gmra.mrb[0].mxu0 %v281
        %v619 = vpop.f32.mrb[0].mxu0
        %v620 = vadd.f32 0.0, %v619
        %v621 = vpop.f32.mrb[0].mxu0
        %v622 = vadd.f32 0.0, %v621
        %v623 = vpop.f32.mrb[0].mxu0
        %v624 = vadd.f32 0.0, %v623
        %v625 = vpop.f32.mrb[0].mxu0
        %v626 = vadd.f32 0.0, %v625
        %627 = vmatprep.mubr.bf16.mxu0 0
        %628 = vmatmul.mubr.bf16.gmra.mrb[0].mxu0 %v282
        %v629 = vpop.f32.mrb[0].mxu0
        %v630 = vadd.f32 0.0, %v629
        %v631 = vpop.f32.mrb[0].mxu0
        %v632 = vadd.f32 0.0, %v631
        %v633 = vpop.f32.mrb[0].mxu0
        %v634 = vadd.f32 0.0, %v633
        %v635 = vpop.f32.mrb[0].mxu0
        %v636 = vadd.f32 0.0, %v635
        %637 = vmatprep.mubr.bf16.mxu0 0
        %638 = vmatmul.mubr.bf16.gmra.mrb[0].mxu0 %v283
        %v639 = vpop.f32.mrb[0].mxu0
        %v640 = vadd.f32 0.0, %v639
        %v641 = vpop.f32.mrb[0].mxu0
        %v642 = vadd.f32 0.0, %v641
        %v643 = vpop.f32.mrb[0].mxu0
        %v644 = vadd.f32 0.0, %v643
        %v645 = vpop.f32.mrb[0].mxu0
        %v646 = vadd.f32 0.0, %v645
        %647 = vmatprep.mubr.bf16.mxu0 0
        %648 = vmatmul.mubr.bf16.gmra.mrb[0].mxu0 %v284
        %v649 = vpop.f32.mrb[0].mxu0
        %v650 = vadd.f32 0.0, %v649
        %v651 = vpop.f32.mrb[0].mxu0
        %v652 = vadd.f32 0.0, %v651
        %v653 = vpop.f32.mrb[0].mxu0
        %v654 = vadd.f32 0.0, %v653
        %v655 = vpop.f32.mrb[0].mxu0
        %v656 = vadd.f32 0.0, %v655
        %657 = vmatprep.mubr.bf16.mxu0 0
        %658 = vmatmul.mubr.bf16.gmra.mrb[0].mxu0 %v285
        %v659 = vpop.f32.mrb[0].mxu0
        %v660 = vadd.f32 0.0, %v659
        %v661 = vpop.f32.mrb[0].mxu0
        %v662 = vadd.f32 0.0, %v661
        %v663 = vpop.f32.mrb[0].mxu0
        %v664 = vadd.f32 0.0, %v663
        %v665 = vpop.f32.mrb[0].mxu0
        %v666 = vadd.f32 0.0, %v665
        %667 = vmatprep.mubr.bf16.mxu0 0
        %668 = vmatmul.mubr.bf16.gmra.mrb[0].mxu0 %v286
        %v669 = vpop.f32.mrb[0].mxu0
        %v670 = vadd.f32 0.0, %v669
        %v671 = vpop.f32.mrb[0].mxu0
        %v672 = vadd.f32 0.0, %v671
        %v673 = vpop.f32.mrb[0].mxu0
        %v674 = vadd.f32 0.0, %v673
        %v675 = vpop.f32.mrb[0].mxu0
        %v676 = vadd.f32 0.0, %v675
        %677 = vmatprep.mubr.bf16.mxu0 0
        %678 = vmatmul.mubr.bf16.gmra.mrb[0].mxu0 %v287
        %v679 = vpop.f32.mrb[0].mxu0
        %v680 = vadd.f32 0.0, %v679
        %v681 = vpop.f32.mrb[0].mxu0
        %v682 = vadd.f32 0.0, %v681
        %v683 = vpop.f32.mrb[0].mxu0
        %v684 = vadd.f32 0.0, %v683
        %v685 = vpop.f32.mrb[0].mxu0
        %v686 = vadd.f32 0.0, %v685
        %687 = vmatprep.mubr.bf16.mxu0 0
        %688 = vmatmul.mubr.bf16.gmra.mrb[0].mxu0 %v288
        %v689 = vpop.f32.mrb[0].mxu0
        %v690 = vadd.f32 0.0, %v689
        %v691 = vpop.f32.mrb[0].mxu0
        %v692 = vadd.f32 0.0, %v691
        %v693 = vpop.f32.mrb[0].mxu0
        %v694 = vadd.f32 0.0, %v693
        %v695 = vpop.f32.mrb[0].mxu0
        %v696 = vadd.f32 0.0, %v695
        %697 = vmatprep.mubr.bf16.mxu0 0
        %698 = vmatmul.mubr.bf16.gmra.mrb[0].mxu0 %v289
        %v699 = vpop.f32.mrb[0].mxu0
        %v700 = vadd.f32 0.0, %v699
        %v701 = vpop.f32.mrb[0].mxu0
        %v702 = vadd.f32 0.0, %v701
        %v703 = vpop.f32.mrb[0].mxu0
        %v704 = vadd.f32 0.0, %v703
        %v705 = vpop.f32.mrb[0].mxu0
        %v706 = vadd.f32 0.0, %v705
        %707 = vmatprep.mubr.bf16.mxu0 0
        %708 = vmatmul.mubr.bf16.gmra.mrb[0].mxu0 %v290
        %v709 = vpop.f32.mrb[0].mxu0
        %v710 = vadd.f32 0.0, %v709
        %v711 = vpop.f32.mrb[0].mxu0
        %v712 = vadd.f32 0.0, %v711
        %v713 = vpop.f32.mrb[0].mxu0
        %v714 = vadd.f32 0.0, %v713
        %v715 = vpop.f32.mrb[0].mxu0
        %v716 = vadd.f32 0.0, %v715
        %717 = vmatprep.mubr.bf16.mxu0 0
        %718 = vmatmul.mubr.bf16.gmra.mrb[0].mxu0 %v291
        %v719 = vpop.f32.mrb[0].mxu0
        %v720 = vadd.f32 0.0, %v719
        %v721 = vpop.f32.mrb[0].mxu0
        %v722 = vadd.f32 0.0, %v721
        %v723 = vpop.f32.mrb[0].mxu0
        %v724 = vadd.f32 0.0, %v723
        %v725 = vpop.f32.mrb[0].mxu0
        %v726 = vadd.f32 0.0, %v725
        %727 = vmatprep.mubr.bf16.mxu0 0
        %728 = vmatmul.mubr.bf16.gmra.mrb[0].mxu0 %v292
        %v729 = vpop.f32.mrb[0].mxu0
        %v730 = vadd.f32 0.0, %v729
        %v731 = vpop.f32.mrb[0].mxu0
        %v732 = vadd.f32 0.0, %v731
        %v733 = vpop.f32.mrb[0].mxu0
        %v734 = vadd.f32 0.0, %v733
        %v735 = vpop.f32.mrb[0].mxu0
        %v736 = vadd.f32 0.0, %v735
        %737 = vmatprep.mubr.bf16.mxu0 0
        %738 = vmatmul.mubr.bf16.gmra.mrb[0].mxu0 %v293
        %v739 = vpop.f32.mrb[0].mxu0
        %v740 = vadd.f32 0.0, %v739
        %v741 = vpop.f32.mrb[0].mxu0
        %v742 = vadd.f32 0.0, %v741
        %v743 = vpop.f32.mrb[0].mxu0
        %v744 = vadd.f32 0.0, %v743
        %v745 = vpop.f32.mrb[0].mxu0
        %v746 = vadd.f32 0.0, %v745
        %747 = vmatprep.mubr.bf16.mxu0 0
        %748 = vmatmul.mubr.bf16.gmra.mrb[0].mxu0 %v294
        %v749 = vpop.f32.mrb[0].mxu0
        %v750 = vadd.f32 0.0, %v749
        %v751 = vpop.f32.mrb[0].mxu0
        %v752 = vadd.f32 0.0, %v751
        %v753 = vpop.f32.mrb[0].mxu0
        %v754 = vadd.f32 0.0, %v753
        %v755 = vpop.f32.mrb[0].mxu0
        %v756 = vadd.f32 0.0, %v755
        %757 = vmatprep.mubr.bf16.mxu0 0
        %758 = vmatmul.mubr.bf16.gmra.mrb[0].mxu0 %v295
        %v759 = vpop.f32.mrb[0].mxu0
        %v760 = vadd.f32 0.0, %v759
        %v761 = vpop.f32.mrb[0].mxu0
        %v762 = vadd.f32 0.0, %v761
        %v763 = vpop.f32.mrb[0].mxu0
        %v764 = vadd.f32 0.0, %v763
        %v765 = vpop.f32.mrb[0].mxu0
        %v766 = vadd.f32 0.0, %v765
        %767 = vmatprep.mubr.bf16.mxu0 0
        %768 = vmatmul.mubr.bf16.gmra.mrb[0].mxu0 %v296
        %v769 = vpop.f32.mrb[0].mxu0
        %v770 = vadd.f32 0.0, %v769
        %v771 = vpop.f32.mrb[0].mxu0
        %v772 = vadd.f32 0.0, %v771
        %v773 = vpop.f32.mrb[0].mxu0
        %v774 = vadd.f32 0.0, %v773
        %v775 = vpop.f32.mrb[0].mxu0
        %v776 = vadd.f32 0.0, %v775
        %777 = vdwg.mxu0
        %778 = vmatprep.subr.bf16.mxu0 %v492
        %779 = vmatpush1.bf16.msra.mxu0 %v491
        %780 = vmatprep.subr.bf16.mxu0 %v498
        %781 = vmatpush1.bf16.msra.mxu0 %v497
        %782 = vmatprep.subr.bf16.mxu0 %v504
        %783 = vmatpush1.bf16.msra.mxu0 %v503
        %784 = vmatprep.subr.bf16.mxu0 %v510
        %785 = vmatpush1.bf16.msra.mxu0 %v509
        %786 = vmatprep.subr.bf16.mxu0 %v516
        %787 = vmatpush1.bf16.msra.mxu0 %v515
        %788 = vmatprep.subr.bf16.mxu0 %v522
        %789 = vmatpush1.bf16.msra.mxu0 %v521
        %790 = vmatprep.subr.bf16.mxu0 %v528
        %791 = vmatpush1.bf16.msra.mxu0 %v527
        %792 = vmatprep.subr.bf16.mxu0 %v534
        %793 = vmatpush1.bf16.msra.mxu0 %v533
        %794 = vmatprep.subr.bf16.mxu0 0
        %795 = vmatpush1.bf16.msra.mxu0 0
        %796 = vmatprep.subr.bf16.mxu0 0
        %797 = vmatpush1.bf16.msra.mxu0 0
        %798 = vmatprep.subr.bf16.mxu0 0
        %799 = vmatpush1.bf16.msra.mxu0 0
        %800 = vmatprep.subr.bf16.mxu0 0
        %801 = vmatpush1.bf16.msra.mxu0 0
        %802 = vmatprep.subr.bf16.mxu0 0
        %803 = vmatpush1.bf16.msra.mxu0 0
        %804 = vmatprep.subr.bf16.mxu0 0
        %805 = vmatpush1.bf16.msra.mxu0 0
        %806 = vmatprep.subr.bf16.mxu0 0
        %807 = vmatpush1.bf16.msra.mxu0 0
        %808 = vmatprep.subr.bf16.mxu0 0
        %809 = vmatpush1.bf16.msra.mxu0 0
        %810 = vmatprep.mubr.bf16.mxu0 0
        %811 = vmatmul.mubr.bf16.gmra.mrb[0].mxu0 %v281
        %v812 = vpop.f32.mrb[0].mxu0
        %v813 = vadd.f32 0.0, %v812
        %v814 = vpop.f32.mrb[0].mxu0
        %v815 = vadd.f32 0.0, %v814
        %v816 = vpop.f32.mrb[0].mxu0
        %v817 = vadd.f32 0.0, %v816
        %v818 = vpop.f32.mrb[0].mxu0
        %v819 = vadd.f32 0.0, %v818
        %820 = vmatprep.mubr.bf16.mxu0 0
        %821 = vmatmul.mubr.bf16.gmra.mrb[0].mxu0 %v282
        %v822 = vpop.f32.mrb[0].mxu0
        %v823 = vadd.f32 0.0, %v822
        %v824 = vpop.f32.mrb[0].mxu0
        %v825 = vadd.f32 0.0, %v824
        %v826 = vpop.f32.mrb[0].mxu0
        %v827 = vadd.f32 0.0, %v826
        %v828 = vpop.f32.mrb[0].mxu0
        %v829 = vadd.f32 0.0, %v828
        %830 = vmatprep.mubr.bf16.mxu0 0
        %831 = vmatmul.mubr.bf16.gmra.mrb[0].mxu0 %v283
        %v832 = vpop.f32.mrb[0].mxu0
        %v833 = vadd.f32 0.0, %v832
        %v834 = vpop.f32.mrb[0].mxu0
        %v835 = vadd.f32 0.0, %v834
        %v836 = vpop.f32.mrb[0].mxu0
        %v837 = vadd.f32 0.0, %v836
        %v838 = vpop.f32.mrb[0].mxu0
        %v839 = vadd.f32 0.0, %v838
        %840 = vmatprep.mubr.bf16.mxu0 0
        %841 = vmatmul.mubr.bf16.gmra.mrb[0].mxu0 %v284
        %v842 = vpop.f32.mrb[0].mxu0
        %v843 = vadd.f32 0.0, %v842
        %v844 = vpop.f32.mrb[0].mxu0
        %v845 = vadd.f32 0.0, %v844
        %v846 = vpop.f32.mrb[0].mxu0
        %v847 = vadd.f32 0.0, %v846
        %v848 = vpop.f32.mrb[0].mxu0
        %v849 = vadd.f32 0.0, %v848
        %850 = vmatprep.mubr.bf16.mxu0 0
        %851 = vmatmul.mubr.bf16.gmra.mrb[0].mxu0 %v285
        %v852 = vpop.f32.mrb[0].mxu0
        %v853 = vadd.f32 0.0, %v852
        %v854 = vpop.f32.mrb[0].mxu0
        %v855 = vadd.f32 0.0, %v854
        %v856 = vpop.f32.mrb[0].mxu0
        %v857 = vadd.f32 0.0, %v856
        %v858 = vpop.f32.mrb[0].mxu0
        %v859 = vadd.f32 0.0, %v858
        %860 = vmatprep.mubr.bf16.mxu0 0
        %861 = vmatmul.mubr.bf16.gmra.mrb[0].mxu0 %v286
        %v862 = vpop.f32.mrb[0].mxu0
        %v863 = vadd.f32 0.0, %v862
        %v864 = vpop.f32.mrb[0].mxu0
        %v865 = vadd.f32 0.0, %v864
        %v866 = vpop.f32.mrb[0].mxu0
        %v867 = vadd.f32 0.0, %v866
        %v868 = vpop.f32.mrb[0].mxu0
        %v869 = vadd.f32 0.0, %v868
        %870 = vmatprep.mubr.bf16.mxu0 0
        %871 = vmatmul.mubr.bf16.gmra.mrb[0].mxu0 %v287
        %v872 = vpop.f32.mrb[0].mxu0
        %v873 = vadd.f32 0.0, %v872
        %v874 = vpop.f32.mrb[0].mxu0
        %v875 = vadd.f32 0.0, %v874
        %v876 = vpop.f32.mrb[0].mxu0
        %v877 = vadd.f32 0.0, %v876
        %v878 = vpop.f32.mrb[0].mxu0
        %v879 = vadd.f32 0.0, %v878
        %880 = vmatprep.mubr.bf16.mxu0 0
        %881 = vmatmul.mubr.bf16.gmra.mrb[0].mxu0 %v288
        %v882 = vpop.f32.mrb[0].mxu0
        %v883 = vadd.f32 0.0, %v882
        %v884 = vpop.f32.mrb[0].mxu0
        %v885 = vadd.f32 0.0, %v884
        %v886 = vpop.f32.mrb[0].mxu0
        %v887 = vadd.f32 0.0, %v886
        %v888 = vpop.f32.mrb[0].mxu0
        %v889 = vadd.f32 0.0, %v888
        %890 = vmatprep.mubr.bf16.mxu0 0
        %891 = vmatmul.mubr.bf16.gmra.mrb[0].mxu0 %v289
        %v892 = vpop.f32.mrb[0].mxu0
        %v893 = vadd.f32 0.0, %v892
        %v894 = vpop.f32.mrb[0].mxu0
        %v895 = vadd.f32 0.0, %v894
        %v896 = vpop.f32.mrb[0].mxu0
        %v897 = vadd.f32 0.0, %v896
        %v898 = vpop.f32.mrb[0].mxu0
        %v899 = vadd.f32 0.0, %v898
        %900 = vmatprep.mubr.bf16.mxu0 0
        %901 = vmatmul.mubr.bf16.gmra.mrb[0].mxu0 %v290
        %v902 = vpop.f32.mrb[0].mxu0
        %v903 = vadd.f32 0.0, %v902
        %v904 = vpop.f32.mrb[0].mxu0
        %v905 = vadd.f32 0.0, %v904
        %v906 = vpop.f32.mrb[0].mxu0
        %v907 = vadd.f32 0.0, %v906
        %v908 = vpop.f32.mrb[0].mxu0
        %v909 = vadd.f32 0.0, %v908
        %910 = vmatprep.mubr.bf16.mxu0 0
        %911 = vmatmul.mubr.bf16.gmra.mrb[0].mxu0 %v291
        %v912 = vpop.f32.mrb[0].mxu0
        %v913 = vadd.f32 0.0, %v912
        %v914 = vpop.f32.mrb[0].mxu0
        %v915 = vadd.f32 0.0, %v914
        %v916 = vpop.f32.mrb[0].mxu0
        %v917 = vadd.f32 0.0, %v916
        %v918 = vpop.f32.mrb[0].mxu0
        %v919 = vadd.f32 0.0, %v918
        %920 = vmatprep.mubr.bf16.mxu0 0
        %921 = vmatmul.mubr.bf16.gmra.mrb[0].mxu0 %v292
        %v922 = vpop.f32.mrb[0].mxu0
        %v923 = vadd.f32 0.0, %v922
        %v924 = vpop.f32.mrb[0].mxu0
        %v925 = vadd.f32 0.0, %v924
        %v926 = vpop.f32.mrb[0].mxu0
        %v927 = vadd.f32 0.0, %v926
        %v928 = vpop.f32.mrb[0].mxu0
        %v929 = vadd.f32 0.0, %v928
        %930 = vmatprep.mubr.bf16.mxu0 0
        %931 = vmatmul.mubr.bf16.gmra.mrb[0].mxu0 %v293
        %v932 = vpop.f32.mrb[0].mxu0
        %v933 = vadd.f32 0.0, %v932
        %v934 = vpop.f32.mrb[0].mxu0
        %v935 = vadd.f32 0.0, %v934
        %v936 = vpop.f32.mrb[0].mxu0
        %v937 = vadd.f32 0.0, %v936
        %v938 = vpop.f32.mrb[0].mxu0
        %v939 = vadd.f32 0.0, %v938
        %940 = vmatprep.mubr.bf16.mxu0 0
        %941 = vmatmul.mubr.bf16.gmra.mrb[0].mxu0 %v294
        %v942 = vpop.f32.mrb[0].mxu0
        %v943 = vadd.f32 0.0, %v942
        %v944 = vpop.f32.mrb[0].mxu0
        %v945 = vadd.f32 0.0, %v944
        %v946 = vpop.f32.mrb[0].mxu0
        %v947 = vadd.f32 0.0, %v946
        %v948 = vpop.f32.mrb[0].mxu0
        %v949 = vadd.f32 0.0, %v948
        %950 = vmatprep.mubr.bf16.mxu0 0
        %951 = vmatmul.mubr.bf16.gmra.mrb[0].mxu0 %v295
        %v952 = vpop.f32.mrb[0].mxu0
        %v953 = vadd.f32 0.0, %v952
        %v954 = vpop.f32.mrb[0].mxu0
        %v955 = vadd.f32 0.0, %v954
        %v956 = vpop.f32.mrb[0].mxu0
        %v957 = vadd.f32 0.0, %v956
        %v958 = vpop.f32.mrb[0].mxu0
        %v959 = vadd.f32 0.0, %v958
        %960 = vmatprep.mubr.bf16.mxu0 0
        %961 = vmatmul.mubr.bf16.gmra.mrb[0].mxu0 %v296
        %v962 = vpop.f32.mrb[0].mxu0
        %v963 = vadd.f32 0.0, %v962
        %v964 = vpop.f32.mrb[0].mxu0
        %v965 = vadd.f32 0.0, %v964
        %v966 = vpop.f32.mrb[0].mxu0
        %v967 = vadd.f32 0.0, %v966
        %v968 = vpop.f32.mrb[0].mxu0
        %v969 = vadd.f32 0.0, %v968
        %970 = vdwg.mxu0
        %971 = vmatprep.subr.bf16.mxu0 %v494
        %972 = vmatpush1.bf16.msra.mxu0 %v493
        %973 = vmatprep.subr.bf16.mxu0 %v500
        %974 = vmatpush1.bf16.msra.mxu0 %v499
        %975 = vmatprep.subr.bf16.mxu0 %v506
        %976 = vmatpush1.bf16.msra.mxu0 %v505
        %977 = vmatprep.subr.bf16.mxu0 %v512
        %978 = vmatpush1.bf16.msra.mxu0 %v511
        %979 = vmatprep.subr.bf16.mxu0 %v518
        %980 = vmatpush1.bf16.msra.mxu0 %v517
        %981 = vmatprep.subr.bf16.mxu0 %v524
        %982 = vmatpush1.bf16.msra.mxu0 %v523
        %983 = vmatprep.subr.bf16.mxu0 %v530
        %984 = vmatpush1.bf16.msra.mxu0 %v529
        %985 = vmatprep.subr.bf16.mxu0 %v536
        %986 = vmatpush1.bf16.msra.mxu0 %v535
        %987 = vmatprep.subr.bf16.mxu0 0
        %988 = vmatpush1.bf16.msra.mxu0 0
        %989 = vmatprep.subr.bf16.mxu0 0
        %990 = vmatpush1.bf16.msra.mxu0 0
        %991 = vmatprep.subr.bf16.mxu0 0
        %992 = vmatpush1.bf16.msra.mxu0 0
        %993 = vmatprep.subr.bf16.mxu0 0
        %994 = vmatpush1.bf16.msra.mxu0 0
        %995 = vmatprep.subr.bf16.mxu0 0
        %996 = vmatpush1.bf16.msra.mxu0 0
        %997 = vmatprep.subr.bf16.mxu0 0
        %998 = vmatpush1.bf16.msra.mxu0 0
        %999 = vmatprep.subr.bf16.mxu0 0
        %1000 = vmatpush1.bf16.msra.mxu0 0
        %1001 = vmatprep.subr.bf16.mxu0 0
        %1002 = vmatpush1.bf16.msra.mxu0 0
        %1003 = vmatprep.mubr.bf16.mxu0 0
        %1004 = vmatmul.mubr.bf16.gmra.mrb[0].mxu0 %v281
        %v1005 = vpop.f32.mrb[0].mxu0
        %v1006 = vadd.f32 0.0, %v1005
        %v1007 = vpop.f32.mrb[0].mxu0
        %v1008 = vadd.f32 0.0, %v1007
        %v1009 = vpop.f32.mrb[0].mxu0
        %v1010 = vadd.f32 0.0, %v1009
        %v1011 = vpop.f32.mrb[0].mxu0
        %v1012 = vadd.f32 0.0, %v1011
        %1013 = vmatprep.mubr.bf16.mxu0 0
        %1014 = vmatmul.mubr.bf16.gmra.mrb[0].mxu0 %v282
        %v1015 = vpop.f32.mrb[0].mxu0
        %v1016 = vadd.f32 0.0, %v1015
        %v1017 = vpop.f32.mrb[0].mxu0
        %v1018 = vadd.f32 0.0, %v1017
        %v1019 = vpop.f32.mrb[0].mxu0
        %v1020 = vadd.f32 0.0, %v1019
        %v1021 = vpop.f32.mrb[0].mxu0
        %v1022 = vadd.f32 0.0, %v1021
        %1023 = vmatprep.mubr.bf16.mxu0 0
        %1024 = vmatmul.mubr.bf16.gmra.mrb[0].mxu0 %v283
        %v1025 = vpop.f32.mrb[0].mxu0
        %v1026 = vadd.f32 0.0, %v1025
        %v1027 = vpop.f32.mrb[0].mxu0
        %v1028 = vadd.f32 0.0, %v1027
        %v1029 = vpop.f32.mrb[0].mxu0
        %v1030 = vadd.f32 0.0, %v1029
        %v1031 = vpop.f32.mrb[0].mxu0
        %v1032 = vadd.f32 0.0, %v1031
        %1033 = vmatprep.mubr.bf16.mxu0 0
        %1034 = vmatmul.mubr.bf16.gmra.mrb[0].mxu0 %v284
        %v1035 = vpop.f32.mrb[0].mxu0
        %v1036 = vadd.f32 0.0, %v1035
        %v1037 = vpop.f32.mrb[0].mxu0
        %v1038 = vadd.f32 0.0, %v1037
        %v1039 = vpop.f32.mrb[0].mxu0
        %v1040 = vadd.f32 0.0, %v1039
        %v1041 = vpop.f32.mrb[0].mxu0
        %v1042 = vadd.f32 0.0, %v1041
        %1043 = vmatprep.mubr.bf16.mxu0 0
        %1044 = vmatmul.mubr.bf16.gmra.mrb[0].mxu0 %v285
        %v1045 = vpop.f32.mrb[0].mxu0
        %v1046 = vadd.f32 0.0, %v1045
        %v1047 = vpop.f32.mrb[0].mxu0
        %v1048 = vadd.f32 0.0, %v1047
        %v1049 = vpop.f32.mrb[0].mxu0
        %v1050 = vadd.f32 0.0, %v1049
        %v1051 = vpop.f32.mrb[0].mxu0
        %v1052 = vadd.f32 0.0, %v1051
        %1053 = vmatprep.mubr.bf16.mxu0 0
        %1054 = vmatmul.mubr.bf16.gmra.mrb[0].mxu0 %v286
        %v1055 = vpop.f32.mrb[0].mxu0
        %v1056 = vadd.f32 0.0, %v1055
        %v1057 = vpop.f32.mrb[0].mxu0
        %v1058 = vadd.f32 0.0, %v1057
        %v1059 = vpop.f32.mrb[0].mxu0
        %v1060 = vadd.f32 0.0, %v1059
        %v1061 = vpop.f32.mrb[0].mxu0
        %v1062 = vadd.f32 0.0, %v1061
        %1063 = vmatprep.mubr.bf16.mxu0 0
        %1064 = vmatmul.mubr.bf16.gmra.mrb[0].mxu0 %v287
        %v1065 = vpop.f32.mrb[0].mxu0
        %v1066 = vadd.f32 0.0, %v1065
        %v1067 = vpop.f32.mrb[0].mxu0
        %v1068 = vadd.f32 0.0, %v1067
        %v1069 = vpop.f32.mrb[0].mxu0
        %v1070 = vadd.f32 0.0, %v1069
        %v1071 = vpop.f32.mrb[0].mxu0
        %v1072 = vadd.f32 0.0, %v1071
        %1073 = vmatprep.mubr.bf16.mxu0 0
        %1074 = vmatmul.mubr.bf16.gmra.mrb[0].mxu0 %v288
        %v1075 = vpop.f32.mrb[0].mxu0
        %v1076 = vadd.f32 0.0, %v1075
        %v1077 = vpop.f32.mrb[0].mxu0
        %v1078 = vadd.f32 0.0, %v1077
        %v1079 = vpop.f32.mrb[0].mxu0
        %v1080 = vadd.f32 0.0, %v1079
        %v1081 = vpop.f32.mrb[0].mxu0
        %v1082 = vadd.f32 0.0, %v1081
        %1083 = vmatprep.mubr.bf16.mxu0 0
        %1084 = vmatmul.mubr.bf16.gmra.mrb[0].mxu0 %v289
        %v1085 = vpop.f32.mrb[0].mxu0
        %v1086 = vadd.f32 0.0, %v1085
        %v1087 = vpop.f32.mrb[0].mxu0
        %v1088 = vadd.f32 0.0, %v1087
        %v1089 = vpop.f32.mrb[0].mxu0
        %v1090 = vadd.f32 0.0, %v1089
        %v1091 = vpop.f32.mrb[0].mxu0
        %v1092 = vadd.f32 0.0, %v1091
        %1093 = vmatprep.mubr.bf16.mxu0 0
        %1094 = vmatmul.mubr.bf16.gmra.mrb[0].mxu0 %v290
        %v1095 = vpop.f32.mrb[0].mxu0
        %v1096 = vadd.f32 0.0, %v1095
        %v1097 = vpop.f32.mrb[0].mxu0
        %v1098 = vadd.f32 0.0, %v1097
        %v1099 = vpop.f32.mrb[0].mxu0
        %v1100 = vadd.f32 0.0, %v1099
        %v1101 = vpop.f32.mrb[0].mxu0
        %v1102 = vadd.f32 0.0, %v1101
        %1103 = vmatprep.mubr.bf16.mxu0 0
        %1104 = vmatmul.mubr.bf16.gmra.mrb[0].mxu0 %v291
        %v1105 = vpop.f32.mrb[0].mxu0
        %v1106 = vadd.f32 0.0, %v1105
        %v1107 = vpop.f32.mrb[0].mxu0
        %v1108 = vadd.f32 0.0, %v1107
        %v1109 = vpop.f32.mrb[0].mxu0
        %v1110 = vadd.f32 0.0, %v1109
        %v1111 = vpop.f32.mrb[0].mxu0
        %v1112 = vadd.f32 0.0, %v1111
        %1113 = vmatprep.mubr.bf16.mxu0 0
        %1114 = vmatmul.mubr.bf16.gmra.mrb[0].mxu0 %v292
        %v1115 = vpop.f32.mrb[0].mxu0
        %v1116 = vadd.f32 0.0, %v1115
        %v1117 = vpop.f32.mrb[0].mxu0
        %v1118 = vadd.f32 0.0, %v1117
        %v1119 = vpop.f32.mrb[0].mxu0
        %v1120 = vadd.f32 0.0, %v1119
        %v1121 = vpop.f32.mrb[0].mxu0
        %v1122 = vadd.f32 0.0, %v1121
        %1123 = vmatprep.mubr.bf16.mxu0 0
        %1124 = vmatmul.mubr.bf16.gmra.mrb[0].mxu0 %v293
        %v1125 = vpop.f32.mrb[0].mxu0
        %v1126 = vadd.f32 0.0, %v1125
        %v1127 = vpop.f32.mrb[0].mxu0
        %v1128 = vadd.f32 0.0, %v1127
        %v1129 = vpop.f32.mrb[0].mxu0
        %v1130 = vadd.f32 0.0, %v1129
        %v1131 = vpop.f32.mrb[0].mxu0
        %v1132 = vadd.f32 0.0, %v1131
        %1133 = vmatprep.mubr.bf16.mxu0 0
        %1134 = vmatmul.mubr.bf16.gmra.mrb[0].mxu0 %v294
        %v1135 = vpop.f32.mrb[0].mxu0
        %v1136 = vadd.f32 0.0, %v1135
        %v1137 = vpop.f32.mrb[0].mxu0
        %v1138 = vadd.f32 0.0, %v1137
        %v1139 = vpop.f32.mrb[0].mxu0
        %v1140 = vadd.f32 0.0, %v1139
        %v1141 = vpop.f32.mrb[0].mxu0
        %v1142 = vadd.f32 0.0, %v1141
        %1143 = vmatprep.mubr.bf16.mxu0 0
        %1144 = vmatmul.mubr.bf16.gmra.mrb[0].mxu0 %v295
        %v1145 = vpop.f32.mrb[0].mxu0
        %v1146 = vadd.f32 0.0, %v1145
        %v1147 = vpop.f32.mrb[0].mxu0
        %v1148 = vadd.f32 0.0, %v1147
        %v1149 = vpop.f32.mrb[0].mxu0
        %v1150 = vadd.f32 0.0, %v1149
        %v1151 = vpop.f32.mrb[0].mxu0
        %v1152 = vadd.f32 0.0, %v1151
        %1153 = vmatprep.mubr.bf16.mxu0 0
        %1154 = vmatmul.mubr.bf16.gmra.mrb[0].mxu0 %v296
        %v1155 = vpop.f32.mrb[0].mxu0
        %v1156 = vadd.f32 0.0, %v1155
        %v1157 = vpop.f32.mrb[0].mxu0
        %v1158 = vadd.f32 0.0, %v1157
        %v1159 = vpop.f32.mrb[0].mxu0
        %v1160 = vadd.f32 0.0, %v1159
        %v1161 = vpop.f32.mrb[0].mxu0
        %v1162 = vadd.f32 0.0, %v1161
        %1163 = vdwg.mxu0
        %v1164 = vpack.c.bf16 %v624, %v620
        %v1165 = vpack.c.bf16 %v626, %v622
        %v1166 = vpack.c.bf16 %v817, %v813
        %v1167 = vpack.c.bf16 %v819, %v815
        %v1168 = vpack.c.bf16 %v1010, %v1006
        %v1169 = vpack.c.bf16 %v1012, %v1008
        %v1170 = vpack.c.bf16 %v634, %v630
        %v1171 = vpack.c.bf16 %v636, %v632
        %v1172 = vpack.c.bf16 %v827, %v823
        %v1173 = vpack.c.bf16 %v829, %v825
        %v1174 = vpack.c.bf16 %v1020, %v1016
        %v1175 = vpack.c.bf16 %v1022, %v1018
        %v1176 = vpack.c.bf16 %v644, %v640
        %v1177 = vpack.c.bf16 %v646, %v642
        %v1178 = vpack.c.bf16 %v837, %v833
        %v1179 = vpack.c.bf16 %v839, %v835
        %v1180 = vpack.c.bf16 %v1030, %v1026
        %v1181 = vpack.c.bf16 %v1032, %v1028
        %v1182 = vpack.c.bf16 %v654, %v650
        %v1183 = vpack.c.bf16 %v656, %v652
        %v1184 = vpack.c.bf16 %v847, %v843
        %v1185 = vpack.c.bf16 %v849, %v845
        %v1186 = vpack.c.bf16 %v1040, %v1036
        %v1187 = vpack.c.bf16 %v1042, %v1038
        %v1188 = vpack.c.bf16 %v664, %v660
        %v1189 = vpack.c.bf16 %v666, %v662
        %v1190 = vpack.c.bf16 %v857, %v853
        %v1191 = vpack.c.bf16 %v859, %v855
        %v1192 = vpack.c.bf16 %v1050, %v1046
        %v1193 = vpack.c.bf16 %v1052, %v1048
        %v1194 = vpack.c.bf16 %v674, %v670
        %v1195 = vpack.c.bf16 %v676, %v672
        %v1196 = vpack.c.bf16 %v867, %v863
        %v1197 = vpack.c.bf16 %v869, %v865
        %v1198 = vpack.c.bf16 %v1060, %v1056
        %v1199 = vpack.c.bf16 %v1062, %v1058
        %v1200 = vpack.c.bf16 %v684, %v680
        %v1201 = vpack.c.bf16 %v686, %v682
        %v1202 = vpack.c.bf16 %v877, %v873
        %v1203 = vpack.c.bf16 %v879, %v875
        %v1204 = vpack.c.bf16 %v1070, %v1066
        %v1205 = vpack.c.bf16 %v1072, %v1068
        %v1206 = vpack.c.bf16 %v694, %v690
        %v1207 = vpack.c.bf16 %v696, %v692
        %v1208 = vpack.c.bf16 %v887, %v883
        %v1209 = vpack.c.bf16 %v889, %v885
        %v1210 = vpack.c.bf16 %v1080, %v1076
        %v1211 = vpack.c.bf16 %v1082, %v1078
        %v1212 = vpack.c.bf16 %v704, %v700
        %v1213 = vpack.c.bf16 %v706, %v702
        %v1214 = vpack.c.bf16 %v897, %v893
        %v1215 = vpack.c.bf16 %v899, %v895
        %v1216 = vpack.c.bf16 %v1090, %v1086
        %v1217 = vpack.c.bf16 %v1092, %v1088
        %v1218 = vpack.c.bf16 %v714, %v710
        %v1219 = vpack.c.bf16 %v716, %v712
        %v1220 = vpack.c.bf16 %v907, %v903
        %v1221 = vpack.c.bf16 %v909, %v905
        %v1222 = vpack.c.bf16 %v1100, %v1096
        %v1223 = vpack.c.bf16 %v1102, %v1098
        %v1224 = vpack.c.bf16 %v724, %v720
        %v1225 = vpack.c.bf16 %v726, %v722
        %v1226 = vpack.c.bf16 %v917, %v913
        %v1227 = vpack.c.bf16 %v919, %v915
        %v1228 = vpack.c.bf16 %v1110, %v1106
        %v1229 = vpack.c.bf16 %v1112, %v1108
        %v1230 = vpack.c.bf16 %v734, %v730
        %v1231 = vpack.c.bf16 %v736, %v732
        %v1232 = vpack.c.bf16 %v927, %v923
        %v1233 = vpack.c.bf16 %v929, %v925
        %v1234 = vpack.c.bf16 %v1120, %v1116
        %v1235 = vpack.c.bf16 %v1122, %v1118
        %v1236 = vpack.c.bf16 %v744, %v740
        %v1237 = vpack.c.bf16 %v746, %v742
        %v1238 = vpack.c.bf16 %v937, %v933
        %v1239 = vpack.c.bf16 %v939, %v935
        %v1240 = vpack.c.bf16 %v1130, %v1126
        %v1241 = vpack.c.bf16 %v1132, %v1128
        %v1242 = vpack.c.bf16 %v754, %v750
        %v1243 = vpack.c.bf16 %v756, %v752
        %v1244 = vpack.c.bf16 %v947, %v943
        %v1245 = vpack.c.bf16 %v949, %v945
        %v1246 = vpack.c.bf16 %v1140, %v1136
        %v1247 = vpack.c.bf16 %v1142, %v1138
        %v1248 = vpack.c.bf16 %v764, %v760
        %v1249 = vpack.c.bf16 %v766, %v762
        %v1250 = vpack.c.bf16 %v957, %v953
        %v1251 = vpack.c.bf16 %v959, %v955
        %v1252 = vpack.c.bf16 %v1150, %v1146
        %v1253 = vpack.c.bf16 %v1152, %v1148
        %v1254 = vpack.c.bf16 %v774, %v770
        %v1255 = vpack.c.bf16 %v776, %v772
        %v1256 = vpack.c.bf16 %v967, %v963
        %v1257 = vpack.c.bf16 %v969, %v965
        %v1258 = vpack.c.bf16 %v1160, %v1156
        %v1259 = vpack.c.bf16 %v1162, %v1158
        %1260 = vmatprep.subr.bf16.mxu0 0
        %1261 = vmatpush1.bf16.xpose.msra.mxu0 %v1166
        %1262 = vmatprep.subr.bf16.mxu0 0
        %1263 = vmatpush1.bf16.xpose.msra.mxu0 %v1172
        %1264 = vmatprep.subr.bf16.mxu0 0
        %1265 = vmatpush1.bf16.xpose.msra.mxu0 %v1178
        %1266 = vmatprep.subr.bf16.mxu0 0
        %1267 = vmatpush1.bf16.xpose.msra.mxu0 %v1184
        %1268 = vmatprep.subr.bf16.mxu0 0
        %1269 = vmatpush1.bf16.xpose.msra.mxu0 0
        %1270 = vmatprep.subr.bf16.mxu0 0
        %1271 = vmatpush1.bf16.xpose.msra.mxu0 0
        %1272 = vmatprep.subr.bf16.mxu0 0
        %1273 = vmatpush1.bf16.xpose.msra.mxu0 0
        %1274 = vmatprep.subr.bf16.mxu0 0
        %1275 = vmatpush1.bf16.xpose.msra.mxu0 0
        %1276 = vmatprep.subr.bf16.mxu0 0
        %1277 = vmatpush1.bf16.xpose.msra.mxu0 0
        %1278 = vmatprep.subr.bf16.mxu0 0
        %1279 = vmatpush1.bf16.xpose.msra.mxu0 0
        %1280 = vmatprep.subr.bf16.mxu0 0
        %1281 = vmatpush1.bf16.xpose.msra.mxu0 0
        %1282 = vmatprep.subr.bf16.mxu0 0
        %1283 = vmatpush1.bf16.xpose.msra.mxu0 0
        %1284 = vmatprep.subr.bf16.mxu0 0
        %1285 = vmatpush1.bf16.xpose.msra.mxu0 0
        %1286 = vmatprep.subr.bf16.mxu0 0
        %1287 = vmatpush1.bf16.xpose.msra.mxu0 0
        %1288 = vmatprep.subr.bf16.mxu0 0
        %1289 = vmatpush1.bf16.xpose.msra.mxu0 0
        %1290 = vmatprep.subr.bf16.mxu0 0
        %1291 = vmatpush1.bf16.xpose.msra.mxu0 0
        %1292 = vmatprep.mubr.bf16.mxu0 0
        %1293 = vmatmul.mubr.bf16.gmra.mrb[0].mxu0 %v1164
        %v1294 = vpop.f32.mrb[0].mxu0
        %v1295 = vadd.f32 0.0, %v1294
        %v1296 = vpop.f32.mrb[0].mxu0
        %v1297 = vpop.f32.mrb[0].mxu0
        %v1298 = vadd.f32 0.0, %v1297
        %v1299 = vpop.f32.mrb[0].mxu0
        %1300 = vmatprep.mubr.bf16.mxu0 0
        %1301 = vmatmul.mubr.bf16.gmra.mrb[0].mxu0 %v1170
        %v1302 = vpop.f32.mrb[0].mxu0
        %v1303 = vadd.f32 0.0, %v1302
        %v1304 = vpop.f32.mrb[0].mxu0
        %v1305 = vpop.f32.mrb[0].mxu0
        %v1306 = vadd.f32 0.0, %v1305
        %v1307 = vpop.f32.mrb[0].mxu0
        %1308 = vmatprep.mubr.bf16.mxu0 0
        %1309 = vmatmul.mubr.bf16.gmra.mrb[0].mxu0 %v1176
        %v1310 = vpop.f32.mrb[0].mxu0
        %v1311 = vadd.f32 0.0, %v1310
        %v1312 = vpop.f32.mrb[0].mxu0
        %v1313 = vpop.f32.mrb[0].mxu0
        %v1314 = vadd.f32 0.0, %v1313
        %v1315 = vpop.f32.mrb[0].mxu0
        %1316 = vmatprep.mubr.bf16.mxu0 0
        %1317 = vmatmul.mubr.bf16.gmra.mrb[0].mxu0 %v1182
        %v1318 = vpop.f32.mrb[0].mxu0
        %v1319 = vadd.f32 0.0, %v1318
        %v1320 = vpop.f32.mrb[0].mxu0
        %v1321 = vpop.f32.mrb[0].mxu0
        %v1322 = vadd.f32 0.0, %v1321
        %v1323 = vpop.f32.mrb[0].mxu0
        %1324 = vdwg.mxu0
        %vm1325 = vcmask 523264
        %v1326 = vsel %vm1325, %v1295, -inf
        %1327 = vmax.xlane.f32.xlu0 %v1326
        %v1328 = vpop.xlane.xlu0 %1327
        %v1329 = vsel %vm1325, %v1298, -inf
        %1330 = vmax.xlane.f32.xlu0 %v1329
        %v1331 = vpop.xlane.xlu0 %1330
        %v1332 = vsel %vm1325, %v1303, -inf
        %1333 = vmax.xlane.f32.xlu0 %v1332
        %v1334 = vpop.xlane.xlu0 %1333
        %v1335 = vsel %vm1325, %v1306, -inf
        %1336 = vmax.xlane.f32.xlu0 %v1335
        %v1337 = vpop.xlane.xlu0 %1336
        %v1338 = vsel %vm1325, %v1311, -inf
        %1339 = vmax.xlane.f32.xlu0 %v1338
        %v1340 = vpop.xlane.xlu0 %1339
        %v1341 = vsel %vm1325, %v1314, -inf
        %1342 = vmax.xlane.f32.xlu0 %v1341
        %v1343 = vpop.xlane.xlu0 %1342
        %v1344 = vsel %vm1325, %v1319, -inf
        %1345 = vmax.xlane.f32.xlu0 %v1344
        %v1346 = vpop.xlane.xlu0 %1345
        %v1347 = vsel %vm1325, %v1322, -inf
        %1348 = vmax.xlane.f32.xlu0 %v1347
        %v1349 = vpop.xlane.xlu0 %1348
        %v1350 = vsub.f32 %v1295, %v1328
        %v1351 = vsub.f32 %v1298, %v1331
        %v1352 = vsub.f32 %v1303, %v1334
        %v1353 = vsub.f32 %v1306, %v1337
        %v1354 = vsub.f32 %v1311, %v1340
        %v1355 = vsub.f32 %v1314, %v1343
        %v1356 = vsub.f32 %v1319, %v1346
        %v1357 = vsub.f32 %v1322, %v1349
        %v1358 = vmul.f32 %v1350, 1.442695
        %v1359 = vpow.pop %v1358
        %v1360 = vmul.f32 %v1351, 1.442695
        %v1361 = vpow.pop %v1360
        %v1362 = vmul.f32 %v1352, 1.442695
        %v1363 = vpow.pop %v1362
        %v1364 = vmul.f32 %v1353, 1.442695
        %v1365 = vpow.pop %v1364
        %v1366 = vmul.f32 %v1354, 1.442695
        %v1367 = vpow.pop %v1366
        %v1368 = vmul.f32 %v1355, 1.442695
        %v1369 = vpow.pop %v1368
        %v1370 = vmul.f32 %v1356, 1.442695
        %v1371 = vpow.pop %v1370
        %v1372 = vmul.f32 %v1357, 1.442695
        %v1373 = vpow.pop %v1372
        %v1374 = vsel %vm1325, %v1359, 0.0
        %1375 = vadd.xlane.f32.xlu0 %v1374
        %v1376 = vpop.xlane.xlu0 %1375
        %v1377 = vsel %vm1325, %v1361, 0.0
        %1378 = vadd.xlane.f32.xlu0 %v1377
        %v1379 = vpop.xlane.xlu0 %1378
        %v1380 = vsel %vm1325, %v1363, 0.0
        %1381 = vadd.xlane.f32.xlu0 %v1380
        %v1382 = vpop.xlane.xlu0 %1381
        %v1383 = vsel %vm1325, %v1365, 0.0
        %1384 = vadd.xlane.f32.xlu0 %v1383
        %v1385 = vpop.xlane.xlu0 %1384
        %v1386 = vsel %vm1325, %v1367, 0.0
        %1387 = vadd.xlane.f32.xlu0 %v1386
        %v1388 = vpop.xlane.xlu0 %1387
        %v1389 = vsel %vm1325, %v1369, 0.0
        %1390 = vadd.xlane.f32.xlu0 %v1389
        %v1391 = vpop.xlane.xlu0 %1390
        %v1392 = vsel %vm1325, %v1371, 0.0
        %1393 = vadd.xlane.f32.xlu0 %v1392
        %v1394 = vpop.xlane.xlu0 %1393
        %v1395 = vsel %vm1325, %v1373, 0.0
        %1396 = vadd.xlane.f32.xlu0 %v1395
        %v1397 = vpop.xlane.xlu0 %1396
        %v1398 = vrcp.pop %v1376
        %v1399 = vrcp.pop %v1379
        %v1400 = vrcp.pop %v1382
        %v1401 = vrcp.pop %v1385
        %v1402 = vrcp.pop %v1388
        %v1403 = vrcp.pop %v1391
        %v1404 = vrcp.pop %v1394
        %v1405 = vrcp.pop %v1397
        %v1406 = vmul.f32 %v1359, %v1398
        %v1407 = vmul.f32 %v1361, %v1399
        %v1408 = vmul.f32 %v1363, %v1400
        %v1409 = vmul.f32 %v1365, %v1401
        %v1410 = vmul.f32 %v1367, %v1402
        %v1411 = vmul.f32 %v1369, %v1403
        %v1412 = vmul.f32 %v1371, %v1404
        %v1413 = vmul.f32 %v1373, %v1405
        %v1414 = vpack.c.bf16 %v1407, %v1406
        %v1415 = vpack.c.bf16 %v1409, %v1408
        %v1416 = vpack.c.bf16 %v1411, %v1410
        %v1417 = vpack.c.bf16 %v1413, %v1412
        %v1419 = vsel %vm1325, %v1414, 0
        %v1422 = vsel %vm1325, %v1415, 0
        %v1425 = vsel %vm1325, %v1416, 0
        %v1428 = vsel %vm1325, %v1417, 0
        %1430 = vmatprep.subr.bf16.mxu0 0
        %1431 = vmatpush1.bf16.msra.mxu0 %v1168
        %1432 = vmatprep.subr.bf16.mxu0 0
        %1433 = vmatpush1.bf16.msra.mxu0 %v1174
        %1434 = vmatprep.subr.bf16.mxu0 0
        %1435 = vmatpush1.bf16.msra.mxu0 %v1180
        %1436 = vmatprep.subr.bf16.mxu0 0
        %1437 = vmatpush1.bf16.msra.mxu0 %v1186
        %1438 = vmatprep.subr.bf16.mxu0 0
        %1439 = vmatpush1.bf16.msra.mxu0 0
        %1440 = vmatprep.subr.bf16.mxu0 0
        %1441 = vmatpush1.bf16.msra.mxu0 0
        %1442 = vmatprep.subr.bf16.mxu0 0
        %1443 = vmatpush1.bf16.msra.mxu0 0
        %1444 = vmatprep.subr.bf16.mxu0 0
        %1445 = vmatpush1.bf16.msra.mxu0 0
        %1446 = vmatprep.subr.bf16.mxu0 0
        %1447 = vmatpush1.bf16.msra.mxu0 0
        %1448 = vmatprep.subr.bf16.mxu0 0
        %1449 = vmatpush1.bf16.msra.mxu0 0
        %1450 = vmatprep.subr.bf16.mxu0 0
        %1451 = vmatpush1.bf16.msra.mxu0 0
        %1452 = vmatprep.subr.bf16.mxu0 0
        %1453 = vmatpush1.bf16.msra.mxu0 0
        %1454 = vmatprep.subr.bf16.mxu0 0
        %1455 = vmatpush1.bf16.msra.mxu0 0
        %1456 = vmatprep.subr.bf16.mxu0 0
        %1457 = vmatpush1.bf16.msra.mxu0 0
        %1458 = vmatprep.subr.bf16.mxu0 0
        %1459 = vmatpush1.bf16.msra.mxu0 0
        %1460 = vmatprep.subr.bf16.mxu0 0
        %1461 = vmatpush1.bf16.msra.mxu0 0
        %1462 = vmatprep.mubr.bf16.mxu0 0
        %1463 = vmatmul.mubr.bf16.gmra.mrb[0].mxu0 %v1419
        %v1464 = vpop.f32.mrb[0].mxu0
        %v1465 = vadd.f32 0.0, %v1464
        %v1466 = vpop.f32.mrb[0].mxu0
        %v1467 = vpop.f32.mrb[0].mxu0
        %v1468 = vadd.f32 0.0, %v1467
        %v1469 = vpop.f32.mrb[0].mxu0
        %1470 = vmatprep.mubr.bf16.mxu0 0
        %1471 = vmatmul.mubr.bf16.gmra.mrb[0].mxu0 %v1422
        %v1472 = vpop.f32.mrb[0].mxu0
        %v1473 = vadd.f32 0.0, %v1472
        %v1474 = vpop.f32.mrb[0].mxu0
        %v1475 = vpop.f32.mrb[0].mxu0
        %v1476 = vadd.f32 0.0, %v1475
        %v1477 = vpop.f32.mrb[0].mxu0
        %1478 = vmatprep.mubr.bf16.mxu0 0
        %1479 = vmatmul.mubr.bf16.gmra.mrb[0].mxu0 %v1425
        %v1480 = vpop.f32.mrb[0].mxu0
        %v1481 = vadd.f32 0.0, %v1480
        %v1482 = vpop.f32.mrb[0].mxu0
        %v1483 = vpop.f32.mrb[0].mxu0
        %v1484 = vadd.f32 0.0, %v1483
        %v1485 = vpop.f32.mrb[0].mxu0
        %1486 = vmatprep.mubr.bf16.mxu0 0
        %1487 = vmatmul.mubr.bf16.gmra.mrb[0].mxu0 %v1428
        %v1488 = vpop.f32.mrb[0].mxu0
        %v1489 = vadd.f32 0.0, %v1488
        %v1490 = vpop.f32.mrb[0].mxu0
        %v1491 = vpop.f32.mrb[0].mxu0
        %v1492 = vadd.f32 0.0, %v1491
        %v1493 = vpop.f32.mrb[0].mxu0
        %1494 = vdwg.mxu0
        %v1495 = vpack.c.bf16 %v1468, %v1465
        %v1496 = vpack.c.bf16 %v1476, %v1473
        %v1497 = vpack.c.bf16 %v1484, %v1481
        %v1498 = vpack.c.bf16 %v1492, %v1489
        %1499 = vst [vmem:[#allocation2] sm:$0xff] %v1495
        %1500 = vst [vmem:[#allocation2 + $0x10] sm:$0xff] %v1496
        %1501 = vst [vmem:[#allocation2 + $0x20] sm:$0xff] %v1497
        %1502 = vst [vmem:[#allocation2 + $0x30] sm:$0xff] %v1498
        %1503 = vmatprep.subr.bf16.mxu0 0
        %1504 = vmatpush1.bf16.xpose.msra.mxu0 %v1190
        %1505 = vmatprep.subr.bf16.mxu0 0
        %1506 = vmatpush1.bf16.xpose.msra.mxu0 %v1196
        %1507 = vmatprep.subr.bf16.mxu0 0
        %1508 = vmatpush1.bf16.xpose.msra.mxu0 %v1202
        %1509 = vmatprep.subr.bf16.mxu0 0
        %1510 = vmatpush1.bf16.xpose.msra.mxu0 %v1208
        %1511 = vmatprep.subr.bf16.mxu0 0
        %1512 = vmatpush1.bf16.xpose.msra.mxu0 0
        %1513 = vmatprep.subr.bf16.mxu0 0
        %1514 = vmatpush1.bf16.xpose.msra.mxu0 0
        %1515 = vmatprep.subr.bf16.mxu0 0
        %1516 = vmatpush1.bf16.xpose.msra.mxu0 0
        %1517 = vmatprep.subr.bf16.mxu0 0
        %1518 = vmatpush1.bf16.xpose.msra.mxu0 0
        %1519 = vmatprep.subr.bf16.mxu0 0
        %1520 = vmatpush1.bf16.xpose.msra.mxu0 0
        %1521 = vmatprep.subr.bf16.mxu0 0
        %1522 = vmatpush1.bf16.xpose.msra.mxu0 0
        %1523 = vmatprep.subr.bf16.mxu0 0
        %1524 = vmatpush1.bf16.xpose.msra.mxu0 0
        %1525 = vmatprep.subr.bf16.mxu0 0
        %1526 = vmatpush1.bf16.xpose.msra.mxu0 0
        %1527 = vmatprep.subr.bf16.mxu0 0
        %1528 = vmatpush1.bf16.xpose.msra.mxu0 0
        %1529 = vmatprep.subr.bf16.mxu0 0
        %1530 = vmatpush1.bf16.xpose.msra.mxu0 0
        %1531 = vmatprep.subr.bf16.mxu0 0
        %1532 = vmatpush1.bf16.xpose.msra.mxu0 0
        %1533 = vmatprep.subr.bf16.mxu0 0
        %1534 = vmatpush1.bf16.xpose.msra.mxu0 0
        %1535 = vmatprep.mubr.bf16.mxu0 0
        %1536 = vmatmul.mubr.bf16.gmra.mrb[0].mxu0 %v1188
        %v1537 = vpop.f32.mrb[0].mxu0
        %v1538 = vadd.f32 0.0, %v1537
        %v1539 = vpop.f32.mrb[0].mxu0
        %v1540 = vpop.f32.mrb[0].mxu0
        %v1541 = vadd.f32 0.0, %v1540
        %v1542 = vpop.f32.mrb[0].mxu0
        %1543 = vmatprep.mubr.bf16.mxu0 0
        %1544 = vmatmul.mubr.bf16.gmra.mrb[0].mxu0 %v1194
        %v1545 = vpop.f32.mrb[0].mxu0
        %v1546 = vadd.f32 0.0, %v1545
        %v1547 = vpop.f32.mrb[0].mxu0
        %v1548 = vpop.f32.mrb[0].mxu0
        %v1549 = vadd.f32 0.0, %v1548
        %v1550 = vpop.f32.mrb[0].mxu0
        %1551 = vmatprep.mubr.bf16.mxu0 0
        %1552 = vmatmul.mubr.bf16.gmra.mrb[0].mxu0 %v1200
        %v1553 = vpop.f32.mrb[0].mxu0
        %v1554 = vadd.f32 0.0, %v1553
        %v1555 = vpop.f32.mrb[0].mxu0
        %v1556 = vpop.f32.mrb[0].mxu0
        %v1557 = vadd.f32 0.0, %v1556
        %v1558 = vpop.f32.mrb[0].mxu0
        %1559 = vmatprep.mubr.bf16.mxu0 0
        %1560 = vmatmul.mubr.bf16.gmra.mrb[0].mxu0 %v1206
        %v1561 = vpop.f32.mrb[0].mxu0
        %v1562 = vadd.f32 0.0, %v1561
        %v1563 = vpop.f32.mrb[0].mxu0
        %v1564 = vpop.f32.mrb[0].mxu0
        %v1565 = vadd.f32 0.0, %v1564
        %v1566 = vpop.f32.mrb[0].mxu0
        %1567 = vdwg.mxu0
        %v1568 = vsel %vm1325, %v1538, -inf
        %1569 = vmax.xlane.f32.xlu0 %v1568
        %v1570 = vpop.xlane.xlu0 %1569
        %v1571 = vsel %vm1325, %v1541, -inf
        %1572 = vmax.xlane.f32.xlu0 %v1571
        %v1573 = vpop.xlane.xlu0 %1572
        %v1574 = vsel %vm1325, %v1546, -inf
        %1575 = vmax.xlane.f32.xlu0 %v1574
        %v1576 = vpop.xlane.xlu0 %1575
        %v1577 = vsel %vm1325, %v1549, -inf
        %1578 = vmax.xlane.f32.xlu0 %v1577
        %v1579 = vpop.xlane.xlu0 %1578
        %v1580 = vsel %vm1325, %v1554, -inf
        %1581 = vmax.xlane.f32.xlu0 %v1580
        %v1582 = vpop.xlane.xlu0 %1581
        %v1583 = vsel %vm1325, %v1557, -inf
        %1584 = vmax.xlane.f32.xlu0 %v1583
        %v1585 = vpop.xlane.xlu0 %1584
        %v1586 = vsel %vm1325, %v1562, -inf
        %1587 = vmax.xlane.f32.xlu0 %v1586
        %v1588 = vpop.xlane.xlu0 %1587
        %v1589 = vsel %vm1325, %v1565, -inf
        %1590 = vmax.xlane.f32.xlu0 %v1589
        %v1591 = vpop.xlane.xlu0 %1590
        %v1592 = vsub.f32 %v1538, %v1570
        %v1593 = vsub.f32 %v1541, %v1573
        %v1594 = vsub.f32 %v1546, %v1576
        %v1595 = vsub.f32 %v1549, %v1579
        %v1596 = vsub.f32 %v1554, %v1582
        %v1597 = vsub.f32 %v1557, %v1585
        %v1598 = vsub.f32 %v1562, %v1588
        %v1599 = vsub.f32 %v1565, %v1591
        %v1600 = vmul.f32 %v1592, 1.442695
        %v1601 = vpow.pop %v1600
        %v1602 = vmul.f32 %v1593, 1.442695
        %v1603 = vpow.pop %v1602
        %v1604 = vmul.f32 %v1594, 1.442695
        %v1605 = vpow.pop %v1604
        %v1606 = vmul.f32 %v1595, 1.442695
        %v1607 = vpow.pop %v1606
        %v1608 = vmul.f32 %v1596, 1.442695
        %v1609 = vpow.pop %v1608
        %v1610 = vmul.f32 %v1597, 1.442695
        %v1611 = vpow.pop %v1610
        %v1612 = vmul.f32 %v1598, 1.442695
        %v1613 = vpow.pop %v1612
        %v1614 = vmul.f32 %v1599, 1.442695
        %v1615 = vpow.pop %v1614
        %v1616 = vsel %vm1325, %v1601, 0.0
        %1617 = vadd.xlane.f32.xlu0 %v1616
        %v1618 = vpop.xlane.xlu0 %1617
        %v1619 = vsel %vm1325, %v1603, 0.0
        %1620 = vadd.xlane.f32.xlu0 %v1619
        %v1621 = vpop.xlane.xlu0 %1620
        %v1622 = vsel %vm1325, %v1605, 0.0
        %1623 = vadd.xlane.f32.xlu0 %v1622
        %v1624 = vpop.xlane.xlu0 %1623
        %v1625 = vsel %vm1325, %v1607, 0.0
        %1626 = vadd.xlane.f32.xlu0 %v1625
        %v1627 = vpop.xlane.xlu0 %1626
        %v1628 = vsel %vm1325, %v1609, 0.0
        %1629 = vadd.xlane.f32.xlu0 %v1628
        %v1630 = vpop.xlane.xlu0 %1629
        %v1631 = vsel %vm1325, %v1611, 0.0
        %1632 = vadd.xlane.f32.xlu0 %v1631
        %v1633 = vpop.xlane.xlu0 %1632
        %v1634 = vsel %vm1325, %v1613, 0.0
        %1635 = vadd.xlane.f32.xlu0 %v1634
        %v1636 = vpop.xlane.xlu0 %1635
        %v1637 = vsel %vm1325, %v1615, 0.0
        %1638 = vadd.xlane.f32.xlu0 %v1637
        %v1639 = vpop.xlane.xlu0 %1638
        %v1640 = vrcp.pop %v1618
        %v1641 = vrcp.pop %v1621
        %v1642 = vrcp.pop %v1624
        %v1643 = vrcp.pop %v1627
        %v1644 = vrcp.pop %v1630
        %v1645 = vrcp.pop %v1633
        %v1646 = vrcp.pop %v1636
        %v1647 = vrcp.pop %v1639
        %v1648 = vmul.f32 %v1601, %v1640
        %v1649 = vmul.f32 %v1603, %v1641
        %v1650 = vmul.f32 %v1605, %v1642
        %v1651 = vmul.f32 %v1607, %v1643
        %v1652 = vmul.f32 %v1609, %v1644
        %v1653 = vmul.f32 %v1611, %v1645
        %v1654 = vmul.f32 %v1613, %v1646
        %v1655 = vmul.f32 %v1615, %v1647
        %v1656 = vpack.c.bf16 %v1649, %v1648
        %v1657 = vpack.c.bf16 %v1651, %v1650
        %v1658 = vpack.c.bf16 %v1653, %v1652
        %v1659 = vpack.c.bf16 %v1655, %v1654
        %v1661 = vsel %vm1325, %v1656, 0
        %v1664 = vsel %vm1325, %v1657, 0
        %v1667 = vsel %vm1325, %v1658, 0
        %v1670 = vsel %vm1325, %v1659, 0
        %1672 = vmatprep.subr.bf16.mxu0 0
        %1673 = vmatpush1.bf16.msra.mxu0 %v1192
        %1674 = vmatprep.subr.bf16.mxu0 0
        %1675 = vmatpush1.bf16.msra.mxu0 %v1198
        %1676 = vmatprep.subr.bf16.mxu0 0
        %1677 = vmatpush1.bf16.msra.mxu0 %v1204
        %1678 = vmatprep.subr.bf16.mxu0 0
        %1679 = vmatpush1.bf16.msra.mxu0 %v1210
        %1680 = vmatprep.subr.bf16.mxu0 0
        %1681 = vmatpush1.bf16.msra.mxu0 0
        %1682 = vmatprep.subr.bf16.mxu0 0
        %1683 = vmatpush1.bf16.msra.mxu0 0
        %1684 = vmatprep.subr.bf16.mxu0 0
        %1685 = vmatpush1.bf16.msra.mxu0 0
        %1686 = vmatprep.subr.bf16.mxu0 0
        %1687 = vmatpush1.bf16.msra.mxu0 0
        %1688 = vmatprep.subr.bf16.mxu0 0
        %1689 = vmatpush1.bf16.msra.mxu0 0
        %1690 = vmatprep.subr.bf16.mxu0 0
        %1691 = vmatpush1.bf16.msra.mxu0 0
        %1692 = vmatprep.subr.bf16.mxu0 0
        %1693 = vmatpush1.bf16.msra.mxu0 0
        %1694 = vmatprep.subr.bf16.mxu0 0
        %1695 = vmatpush1.bf16.msra.mxu0 0
        %1696 = vmatprep.subr.bf16.mxu0 0
        %1697 = vmatpush1.bf16.msra.mxu0 0
        %1698 = vmatprep.subr.bf16.mxu0 0
        %1699 = vmatpush1.bf16.msra.mxu0 0
        %1700 = vmatprep.subr.bf16.mxu0 0
        %1701 = vmatpush1.bf16.msra.mxu0 0
        %1702 = vmatprep.subr.bf16.mxu0 0
        %1703 = vmatpush1.bf16.msra.mxu0 0
        %1704 = vmatprep.mubr.bf16.mxu0 0
        %1705 = vmatmul.mubr.bf16.gmra.mrb[0].mxu0 %v1661
        %v1706 = vpop.f32.mrb[0].mxu0
        %v1707 = vadd.f32 0.0, %v1706
        %v1708 = vpop.f32.mrb[0].mxu0
        %v1709 = vpop.f32.mrb[0].mxu0
        %v1710 = vadd.f32 0.0, %v1709
        %v1711 = vpop.f32.mrb[0].mxu0
        %1712 = vmatprep.mubr.bf16.mxu0 0
        %1713 = vmatmul.mubr.bf16.gmra.mrb[0].mxu0 %v1664
        %v1714 = vpop.f32.mrb[0].mxu0
        %v1715 = vadd.f32 0.0, %v1714
        %v1716 = vpop.f32.mrb[0].mxu0
        %v1717 = vpop.f32.mrb[0].mxu0
        %v1718 = vadd.f32 0.0, %v1717
        %v1719 = vpop.f32.mrb[0].mxu0
        %1720 = vmatprep.mubr.bf16.mxu0 0
        %1721 = vmatmul.mubr.bf16.gmra.mrb[0].mxu0 %v1667
        %v1722 = vpop.f32.mrb[0].mxu0
        %v1723 = vadd.f32 0.0, %v1722
        %v1724 = vpop.f32.mrb[0].mxu0
        %v1725 = vpop.f32.mrb[0].mxu0
        %v1726 = vadd.f32 0.0, %v1725
        %v1727 = vpop.f32.mrb[0].mxu0
        %1728 = vmatprep.mubr.bf16.mxu0 0
        %1729 = vmatmul.mubr.bf16.gmra.mrb[0].mxu0 %v1670
        %v1730 = vpop.f32.mrb[0].mxu0
        %v1731 = vadd.f32 0.0, %v1730
        %v1732 = vpop.f32.mrb[0].mxu0
        %v1733 = vpop.f32.mrb[0].mxu0
        %v1734 = vadd.f32 0.0, %v1733
        %v1735 = vpop.f32.mrb[0].mxu0
        %1736 = vdwg.mxu0
        %v1737 = vpack.c.bf16 %v1710, %v1707
        %v1738 = vpack.c.bf16 %v1718, %v1715
        %v1739 = vpack.c.bf16 %v1726, %v1723
        %v1740 = vpack.c.bf16 %v1734, %v1731
        %1741 = vst [vmem:[#allocation2 + $0x40] sm:$0xff] %v1737
        %1742 = vst [vmem:[#allocation2 + $0x50] sm:$0xff] %v1738
        %1743 = vst [vmem:[#allocation2 + $0x60] sm:$0xff] %v1739
        %1744 = vst [vmem:[#allocation2 + $0x70] sm:$0xff] %v1740
        %1745 = vmatprep.subr.bf16.mxu0 0
        %1746 = vmatpush1.bf16.xpose.msra.mxu0 %v1214
        %1747 = vmatprep.subr.bf16.mxu0 0
        %1748 = vmatpush1.bf16.xpose.msra.mxu0 %v1220
        %1749 = vmatprep.subr.bf16.mxu0 0
        %1750 = vmatpush1.bf16.xpose.msra.mxu0 %v1226
        %1751 = vmatprep.subr.bf16.mxu0 0
        %1752 = vmatpush1.bf16.xpose.msra.mxu0 %v1232
        %1753 = vmatprep.subr.bf16.mxu0 0
        %1754 = vmatpush1.bf16.xpose.msra.mxu0 0
        %1755 = vmatprep.subr.bf16.mxu0 0
        %1756 = vmatpush1.bf16.xpose.msra.mxu0 0
        %1757 = vmatprep.subr.bf16.mxu0 0
        %1758 = vmatpush1.bf16.xpose.msra.mxu0 0
        %1759 = vmatprep.subr.bf16.mxu0 0
        %1760 = vmatpush1.bf16.xpose.msra.mxu0 0
        %1761 = vmatprep.subr.bf16.mxu0 0
        %1762 = vmatpush1.bf16.xpose.msra.mxu0 0
        %1763 = vmatprep.subr.bf16.mxu0 0
        %1764 = vmatpush1.bf16.xpose.msra.mxu0 0
        %1765 = vmatprep.subr.bf16.mxu0 0
        %1766 = vmatpush1.bf16.xpose.msra.mxu0 0
        %1767 = vmatprep.subr.bf16.mxu0 0
        %1768 = vmatpush1.bf16.xpose.msra.mxu0 0
        %1769 = vmatprep.subr.bf16.mxu0 0
        %1770 = vmatpush1.bf16.xpose.msra.mxu0 0
        %1771 = vmatprep.subr.bf16.mxu0 0
        %1772 = vmatpush1.bf16.xpose.msra.mxu0 0
        %1773 = vmatprep.subr.bf16.mxu0 0
        %1774 = vmatpush1.bf16.xpose.msra.mxu0 0
        %1775 = vmatprep.subr.bf16.mxu0 0
        %1776 = vmatpush1.bf16.xpose.msra.mxu0 0
        %1777 = vmatprep.mubr.bf16.mxu0 0
        %1778 = vmatmul.mubr.bf16.gmra.mrb[0].mxu0 %v1212
        %v1779 = vpop.f32.mrb[0].mxu0
        %v1780 = vadd.f32 0.0, %v1779
        %v1781 = vpop.f32.mrb[0].mxu0
        %v1782 = vpop.f32.mrb[0].mxu0
        %v1783 = vadd.f32 0.0, %v1782
        %v1784 = vpop.f32.mrb[0].mxu0
        %1785 = vmatprep.mubr.bf16.mxu0 0
        %1786 = vmatmul.mubr.bf16.gmra.mrb[0].mxu0 %v1218
        %v1787 = vpop.f32.mrb[0].mxu0
        %v1788 = vadd.f32 0.0, %v1787
        %v1789 = vpop.f32.mrb[0].mxu0
        %v1790 = vpop.f32.mrb[0].mxu0
        %v1791 = vadd.f32 0.0, %v1790
        %v1792 = vpop.f32.mrb[0].mxu0
        %1793 = vmatprep.mubr.bf16.mxu0 0
        %1794 = vmatmul.mubr.bf16.gmra.mrb[0].mxu0 %v1224
        %v1795 = vpop.f32.mrb[0].mxu0
        %v1796 = vadd.f32 0.0, %v1795
        %v1797 = vpop.f32.mrb[0].mxu0
        %v1798 = vpop.f32.mrb[0].mxu0
        %v1799 = vadd.f32 0.0, %v1798
        %v1800 = vpop.f32.mrb[0].mxu0
        %1801 = vmatprep.mubr.bf16.mxu0 0
        %1802 = vmatmul.mubr.bf16.gmra.mrb[0].mxu0 %v1230
        %v1803 = vpop.f32.mrb[0].mxu0
        %v1804 = vadd.f32 0.0, %v1803
        %v1805 = vpop.f32.mrb[0].mxu0
        %v1806 = vpop.f32.mrb[0].mxu0
        %v1807 = vadd.f32 0.0, %v1806
        %v1808 = vpop.f32.mrb[0].mxu0
        %1809 = vdwg.mxu0
        %v1810 = vsel %vm1325, %v1780, -inf
        %1811 = vmax.xlane.f32.xlu0 %v1810
        %v1812 = vpop.xlane.xlu0 %1811
        %v1813 = vsel %vm1325, %v1783, -inf
        %1814 = vmax.xlane.f32.xlu0 %v1813
        %v1815 = vpop.xlane.xlu0 %1814
        %v1816 = vsel %vm1325, %v1788, -inf
        %1817 = vmax.xlane.f32.xlu0 %v1816
        %v1818 = vpop.xlane.xlu0 %1817
        %v1819 = vsel %vm1325, %v1791, -inf
        %1820 = vmax.xlane.f32.xlu0 %v1819
        %v1821 = vpop.xlane.xlu0 %1820
        %v1822 = vsel %vm1325, %v1796, -inf
        %1823 = vmax.xlane.f32.xlu0 %v1822
        %v1824 = vpop.xlane.xlu0 %1823
        %v1825 = vsel %vm1325, %v1799, -inf
        %1826 = vmax.xlane.f32.xlu0 %v1825
        %v1827 = vpop.xlane.xlu0 %1826
        %v1828 = vsel %vm1325, %v1804, -inf
        %1829 = vmax.xlane.f32.xlu0 %v1828
        %v1830 = vpop.xlane.xlu0 %1829
        %v1831 = vsel %vm1325, %v1807, -inf
        %1832 = vmax.xlane.f32.xlu0 %v1831
        %v1833 = vpop.xlane.xlu0 %1832
        %v1834 = vsub.f32 %v1780, %v1812
        %v1835 = vsub.f32 %v1783, %v1815
        %v1836 = vsub.f32 %v1788, %v1818
        %v1837 = vsub.f32 %v1791, %v1821
        %v1838 = vsub.f32 %v1796, %v1824
        %v1839 = vsub.f32 %v1799, %v1827
        %v1840 = vsub.f32 %v1804, %v1830
        %v1841 = vsub.f32 %v1807, %v1833
        %v1842 = vmul.f32 %v1834, 1.442695
        %v1843 = vpow.pop %v1842
        %v1844 = vmul.f32 %v1835, 1.442695
        %v1845 = vpow.pop %v1844
        %v1846 = vmul.f32 %v1836, 1.442695
        %v1847 = vpow.pop %v1846
        %v1848 = vmul.f32 %v1837, 1.442695
        %v1849 = vpow.pop %v1848
        %v1850 = vmul.f32 %v1838, 1.442695
        %v1851 = vpow.pop %v1850
        %v1852 = vmul.f32 %v1839, 1.442695
        %v1853 = vpow.pop %v1852
        %v1854 = vmul.f32 %v1840, 1.442695
        %v1855 = vpow.pop %v1854
        %v1856 = vmul.f32 %v1841, 1.442695
        %v1857 = vpow.pop %v1856
        %v1858 = vsel %vm1325, %v1843, 0.0
        %1859 = vadd.xlane.f32.xlu0 %v1858
        %v1860 = vpop.xlane.xlu0 %1859
        %v1861 = vsel %vm1325, %v1845, 0.0
        %1862 = vadd.xlane.f32.xlu0 %v1861
        %v1863 = vpop.xlane.xlu0 %1862
        %v1864 = vsel %vm1325, %v1847, 0.0
        %1865 = vadd.xlane.f32.xlu0 %v1864
        %v1866 = vpop.xlane.xlu0 %1865
        %v1867 = vsel %vm1325, %v1849, 0.0
        %1868 = vadd.xlane.f32.xlu0 %v1867
        %v1869 = vpop.xlane.xlu0 %1868
        %v1870 = vsel %vm1325, %v1851, 0.0
        %1871 = vadd.xlane.f32.xlu0 %v1870
        %v1872 = vpop.xlane.xlu0 %1871
        %v1873 = vsel %vm1325, %v1853, 0.0
        %1874 = vadd.xlane.f32.xlu0 %v1873
        %v1875 = vpop.xlane.xlu0 %1874
        %v1876 = vsel %vm1325, %v1855, 0.0
        %1877 = vadd.xlane.f32.xlu0 %v1876
        %v1878 = vpop.xlane.xlu0 %1877
        %v1879 = vsel %vm1325, %v1857, 0.0
        %1880 = vadd.xlane.f32.xlu0 %v1879
        %v1881 = vpop.xlane.xlu0 %1880
        %v1882 = vrcp.pop %v1860
        %v1883 = vrcp.pop %v1863
        %v1884 = vrcp.pop %v1866
        %v1885 = vrcp.pop %v1869
        %v1886 = vrcp.pop %v1872
        %v1887 = vrcp.pop %v1875
        %v1888 = vrcp.pop %v1878
        %v1889 = vrcp.pop %v1881
        %v1890 = vmul.f32 %v1843, %v1882
        %v1891 = vmul.f32 %v1845, %v1883
        %v1892 = vmul.f32 %v1847, %v1884
        %v1893 = vmul.f32 %v1849, %v1885
        %v1894 = vmul.f32 %v1851, %v1886
        %v1895 = vmul.f32 %v1853, %v1887
        %v1896 = vmul.f32 %v1855, %v1888
        %v1897 = vmul.f32 %v1857, %v1889
        %v1898 = vpack.c.bf16 %v1891, %v1890
        %v1899 = vpack.c.bf16 %v1893, %v1892
        %v1900 = vpack.c.bf16 %v1895, %v1894
        %v1901 = vpack.c.bf16 %v1897, %v1896
        %v1903 = vsel %vm1325, %v1898, 0
        %v1906 = vsel %vm1325, %v1899, 0
        %v1909 = vsel %vm1325, %v1900, 0
        %v1912 = vsel %vm1325, %v1901, 0
        %1914 = vmatprep.subr.bf16.mxu0 0
        %1915 = vmatpush1.bf16.msra.mxu0 %v1216
        %1916 = vmatprep.subr.bf16.mxu0 0
        %1917 = vmatpush1.bf16.msra.mxu0 %v1222
        %1918 = vmatprep.subr.bf16.mxu0 0
        %1919 = vmatpush1.bf16.msra.mxu0 %v1228
        %1920 = vmatprep.subr.bf16.mxu0 0
        %1921 = vmatpush1.bf16.msra.mxu0 %v1234
        %1922 = vmatprep.subr.bf16.mxu0 0
        %1923 = vmatpush1.bf16.msra.mxu0 0
        %1924 = vmatprep.subr.bf16.mxu0 0
        %1925 = vmatpush1.bf16.msra.mxu0 0
        %1926 = vmatprep.subr.bf16.mxu0 0
        %1927 = vmatpush1.bf16.msra.mxu0 0
        %1928 = vmatprep.subr.bf16.mxu0 0
        %1929 = vmatpush1.bf16.msra.mxu0 0
        %1930 = vmatprep.subr.bf16.mxu0 0
        %1931 = vmatpush1.bf16.msra.mxu0 0
        %1932 = vmatprep.subr.bf16.mxu0 0
        %1933 = vmatpush1.bf16.msra.mxu0 0
        %1934 = vmatprep.subr.bf16.mxu0 0
        %1935 = vmatpush1.bf16.msra.mxu0 0
        %1936 = vmatprep.subr.bf16.mxu0 0
        %1937 = vmatpush1.bf16.msra.mxu0 0
        %1938 = vmatprep.subr.bf16.mxu0 0
        %1939 = vmatpush1.bf16.msra.mxu0 0
        %1940 = vmatprep.subr.bf16.mxu0 0
        %1941 = vmatpush1.bf16.msra.mxu0 0
        %1942 = vmatprep.subr.bf16.mxu0 0
        %1943 = vmatpush1.bf16.msra.mxu0 0
        %1944 = vmatprep.subr.bf16.mxu0 0
        %1945 = vmatpush1.bf16.msra.mxu0 0
        %1946 = vmatprep.mubr.bf16.mxu0 0
        %1947 = vmatmul.mubr.bf16.gmra.mrb[0].mxu0 %v1903
        %v1948 = vpop.f32.mrb[0].mxu0
        %v1949 = vadd.f32 0.0, %v1948
        %v1950 = vpop.f32.mrb[0].mxu0
        %v1951 = vpop.f32.mrb[0].mxu0
        %v1952 = vadd.f32 0.0, %v1951
        %v1953 = vpop.f32.mrb[0].mxu0
        %1954 = vmatprep.mubr.bf16.mxu0 0
        %1955 = vmatmul.mubr.bf16.gmra.mrb[0].mxu0 %v1906
        %v1956 = vpop.f32.mrb[0].mxu0
        %v1957 = vadd.f32 0.0, %v1956
        %v1958 = vpop.f32.mrb[0].mxu0
        %v1959 = vpop.f32.mrb[0].mxu0
        %v1960 = vadd.f32 0.0, %v1959
        %v1961 = vpop.f32.mrb[0].mxu0
        %1962 = vmatprep.mubr.bf16.mxu0 0
        %1963 = vmatmul.mubr.bf16.gmra.mrb[0].mxu0 %v1909
        %v1964 = vpop.f32.mrb[0].mxu0
        %v1965 = vadd.f32 0.0, %v1964
        %v1966 = vpop.f32.mrb[0].mxu0
        %v1967 = vpop.f32.mrb[0].mxu0
        %v1968 = vadd.f32 0.0, %v1967
        %v1969 = vpop.f32.mrb[0].mxu0
        %1970 = vmatprep.mubr.bf16.mxu0 0
        %1971 = vmatmul.mubr.bf16.gmra.mrb[0].mxu0 %v1912
        %v1972 = vpop.f32.mrb[0].mxu0
        %v1973 = vadd.f32 0.0, %v1972
        %v1974 = vpop.f32.mrb[0].mxu0
        %v1975 = vpop.f32.mrb[0].mxu0
        %v1976 = vadd.f32 0.0, %v1975
        %v1977 = vpop.f32.mrb[0].mxu0
        %1978 = vdwg.mxu0
        %v1979 = vpack.c.bf16 %v1952, %v1949
        %v1980 = vpack.c.bf16 %v1960, %v1957
        %v1981 = vpack.c.bf16 %v1968, %v1965
        %v1982 = vpack.c.bf16 %v1976, %v1973
        %1983 = vst [vmem:[#allocation2 + $0x80] sm:$0xff] %v1979
        %1984 = vst [vmem:[#allocation2 + $0x90] sm:$0xff] %v1980
        %1985 = vst [vmem:[#allocation2 + $0xa0] sm:$0xff] %v1981
        %1986 = vst [vmem:[#allocation2 + $0xb0] sm:$0xff] %v1982
        %1987 = vmatprep.subr.bf16.mxu0 0
        %1988 = vmatpush1.bf16.xpose.msra.mxu0 %v1238
        %1989 = vmatprep.subr.bf16.mxu0 0
        %1990 = vmatpush1.bf16.xpose.msra.mxu0 %v1244
        %1991 = vmatprep.subr.bf16.mxu0 0
        %1992 = vmatpush1.bf16.xpose.msra.mxu0 %v1250
        %1993 = vmatprep.subr.bf16.mxu0 0
        %1994 = vmatpush1.bf16.xpose.msra.mxu0 %v1256
        %1995 = vmatprep.subr.bf16.mxu0 0
        %1996 = vmatpush1.bf16.xpose.msra.mxu0 0
        %1997 = vmatprep.subr.bf16.mxu0 0
        %1998 = vmatpush1.bf16.xpose.msra.mxu0 0
        %1999 = vmatprep.subr.bf16.mxu0 0
        %2000 = vmatpush1.bf16.xpose.msra.mxu0 0
        %2001 = vmatprep.subr.bf16.mxu0 0
        %2002 = vmatpush1.bf16.xpose.msra.mxu0 0
        %2003 = vmatprep.subr.bf16.mxu0 0
        %2004 = vmatpush1.bf16.xpose.msra.mxu0 0
        %2005 = vmatprep.subr.bf16.mxu0 0
        %2006 = vmatpush1.bf16.xpose.msra.mxu0 0
        %2007 = vmatprep.subr.bf16.mxu0 0
        %2008 = vmatpush1.bf16.xpose.msra.mxu0 0
        %2009 = vmatprep.subr.bf16.mxu0 0
        %2010 = vmatpush1.bf16.xpose.msra.mxu0 0
        %2011 = vmatprep.subr.bf16.mxu0 0
        %2012 = vmatpush1.bf16.xpose.msra.mxu0 0
        %2013 = vmatprep.subr.bf16.mxu0 0
        %2014 = vmatpush1.bf16.xpose.msra.mxu0 0
        %2015 = vmatprep.subr.bf16.mxu0 0
        %2016 = vmatpush1.bf16.xpose.msra.mxu0 0
        %2017 = vmatprep.subr.bf16.mxu0 0
        %2018 = vmatpush1.bf16.xpose.msra.mxu0 0
        %2019 = vmatprep.mubr.bf16.mxu0 0
        %2020 = vmatmul.mubr.bf16.gmra.mrb[0].mxu0 %v1236
        %v2021 = vpop.f32.mrb[0].mxu0
        %v2022 = vadd.f32 0.0, %v2021
        %v2023 = vpop.f32.mrb[0].mxu0
        %v2024 = vpop.f32.mrb[0].mxu0
        %v2025 = vadd.f32 0.0, %v2024
        %v2026 = vpop.f32.mrb[0].mxu0
        %2027 = vmatprep.mubr.bf16.mxu0 0
        %2028 = vmatmul.mubr.bf16.gmra.mrb[0].mxu0 %v1242
        %v2029 = vpop.f32.mrb[0].mxu0
        %v2030 = vadd.f32 0.0, %v2029
        %v2031 = vpop.f32.mrb[0].mxu0
        %v2032 = vpop.f32.mrb[0].mxu0
        %v2033 = vadd.f32 0.0, %v2032
        %v2034 = vpop.f32.mrb[0].mxu0
        %2035 = vmatprep.mubr.bf16.mxu0 0
        %2036 = vmatmul.mubr.bf16.gmra.mrb[0].mxu0 %v1248
        %v2037 = vpop.f32.mrb[0].mxu0
        %v2038 = vadd.f32 0.0, %v2037
        %v2039 = vpop.f32.mrb[0].mxu0
        %v2040 = vpop.f32.mrb[0].mxu0
        %v2041 = vadd.f32 0.0, %v2040
        %v2042 = vpop.f32.mrb[0].mxu0
        %2043 = vmatprep.mubr.bf16.mxu0 0
        %2044 = vmatmul.mubr.bf16.gmra.mrb[0].mxu0 %v1254
        %v2045 = vpop.f32.mrb[0].mxu0
        %v2046 = vadd.f32 0.0, %v2045
        %v2047 = vpop.f32.mrb[0].mxu0
        %v2048 = vpop.f32.mrb[0].mxu0
        %v2049 = vadd.f32 0.0, %v2048
        %v2050 = vpop.f32.mrb[0].mxu0
        %2051 = vdwg.mxu0
        %v2052 = vsel %vm1325, %v2022, -inf
        %2053 = vmax.xlane.f32.xlu0 %v2052
        %v2054 = vpop.xlane.xlu0 %2053
        %v2055 = vsel %vm1325, %v2025, -inf
        %2056 = vmax.xlane.f32.xlu0 %v2055
        %v2057 = vpop.xlane.xlu0 %2056
        %v2058 = vsel %vm1325, %v2030, -inf
        %2059 = vmax.xlane.f32.xlu0 %v2058
        %v2060 = vpop.xlane.xlu0 %2059
        %v2061 = vsel %vm1325, %v2033, -inf
        %2062 = vmax.xlane.f32.xlu0 %v2061
        %v2063 = vpop.xlane.xlu0 %2062
        %v2064 = vsel %vm1325, %v2038, -inf
        %2065 = vmax.xlane.f32.xlu0 %v2064
        %v2066 = vpop.xlane.xlu0 %2065
        %v2067 = vsel %vm1325, %v2041, -inf
        %2068 = vmax.xlane.f32.xlu0 %v2067
        %v2069 = vpop.xlane.xlu0 %2068
        %v2070 = vsel %vm1325, %v2046, -inf
        %2071 = vmax.xlane.f32.xlu0 %v2070
        %v2072 = vpop.xlane.xlu0 %2071
        %v2073 = vsel %vm1325, %v2049, -inf
        %2074 = vmax.xlane.f32.xlu0 %v2073
        %v2075 = vpop.xlane.xlu0 %2074
        %v2076 = vsub.f32 %v2022, %v2054
        %v2077 = vsub.f32 %v2025, %v2057
        %v2078 = vsub.f32 %v2030, %v2060
        %v2079 = vsub.f32 %v2033, %v2063
        %v2080 = vsub.f32 %v2038, %v2066
        %v2081 = vsub.f32 %v2041, %v2069
        %v2082 = vsub.f32 %v2046, %v2072
        %v2083 = vsub.f32 %v2049, %v2075
        %v2084 = vmul.f32 %v2076, 1.442695
        %v2085 = vpow.pop %v2084
        %v2086 = vmul.f32 %v2077, 1.442695
        %v2087 = vpow.pop %v2086
        %v2088 = vmul.f32 %v2078, 1.442695
        %v2089 = vpow.pop %v2088
        %v2090 = vmul.f32 %v2079, 1.442695
        %v2091 = vpow.pop %v2090
        %v2092 = vmul.f32 %v2080, 1.442695
        %v2093 = vpow.pop %v2092
        %v2094 = vmul.f32 %v2081, 1.442695
        %v2095 = vpow.pop %v2094
        %v2096 = vmul.f32 %v2082, 1.442695
        %v2097 = vpow.pop %v2096
        %v2098 = vmul.f32 %v2083, 1.442695
        %v2099 = vpow.pop %v2098
        %v2100 = vsel %vm1325, %v2085, 0.0
        %2101 = vadd.xlane.f32.xlu0 %v2100
        %v2102 = vpop.xlane.xlu0 %2101
        %v2103 = vsel %vm1325, %v2087, 0.0
        %2104 = vadd.xlane.f32.xlu0 %v2103
        %v2105 = vpop.xlane.xlu0 %2104
        %v2106 = vsel %vm1325, %v2089, 0.0
        %2107 = vadd.xlane.f32.xlu0 %v2106
        %v2108 = vpop.xlane.xlu0 %2107
        %v2109 = vsel %vm1325, %v2091, 0.0
        %2110 = vadd.xlane.f32.xlu0 %v2109
        %v2111 = vpop.xlane.xlu0 %2110
        %v2112 = vsel %vm1325, %v2093, 0.0
        %2113 = vadd.xlane.f32.xlu0 %v2112
        %v2114 = vpop.xlane.xlu0 %2113
        %v2115 = vsel %vm1325, %v2095, 0.0
        %2116 = vadd.xlane.f32.xlu0 %v2115
        %v2117 = vpop.xlane.xlu0 %2116
        %v2118 = vsel %vm1325, %v2097, 0.0
        %2119 = vadd.xlane.f32.xlu0 %v2118
        %v2120 = vpop.xlane.xlu0 %2119
        %v2121 = vsel %vm1325, %v2099, 0.0
        %2122 = vadd.xlane.f32.xlu0 %v2121
        %v2123 = vpop.xlane.xlu0 %2122
        %v2124 = vrcp.pop %v2102
        %v2125 = vrcp.pop %v2105
        %v2126 = vrcp.pop %v2108
        %v2127 = vrcp.pop %v2111
        %v2128 = vrcp.pop %v2114
        %v2129 = vrcp.pop %v2117
        %v2130 = vrcp.pop %v2120
        %v2131 = vrcp.pop %v2123
        %v2132 = vmul.f32 %v2085, %v2124
        %v2133 = vmul.f32 %v2087, %v2125
        %v2134 = vmul.f32 %v2089, %v2126
        %v2135 = vmul.f32 %v2091, %v2127
        %v2136 = vmul.f32 %v2093, %v2128
        %v2137 = vmul.f32 %v2095, %v2129
        %v2138 = vmul.f32 %v2097, %v2130
        %v2139 = vmul.f32 %v2099, %v2131
        %v2140 = vpack.c.bf16 %v2133, %v2132
        %v2141 = vpack.c.bf16 %v2135, %v2134
        %v2142 = vpack.c.bf16 %v2137, %v2136
        %v2143 = vpack.c.bf16 %v2139, %v2138
        %v2145 = vsel %vm1325, %v2140, 0
        %v2148 = vsel %vm1325, %v2141, 0
        %v2151 = vsel %vm1325, %v2142, 0
        %v2154 = vsel %vm1325, %v2143, 0
        %2156 = vmatprep.subr.bf16.mxu0 0
        %2157 = vmatpush1.bf16.msra.mxu0 %v1240
        %2158 = vmatprep.subr.bf16.mxu0 0
        %2159 = vmatpush1.bf16.msra.mxu0 %v1246
        %2160 = vmatprep.subr.bf16.mxu0 0
        %2161 = vmatpush1.bf16.msra.mxu0 %v1252
        %2162 = vmatprep.subr.bf16.mxu0 0
        %2163 = vmatpush1.bf16.msra.mxu0 %v1258
        %2164 = vmatprep.subr.bf16.mxu0 0
        %2165 = vmatpush1.bf16.msra.mxu0 0
        %2166 = vmatprep.subr.bf16.mxu0 0
        %2167 = vmatpush1.bf16.msra.mxu0 0
        %2168 = vmatprep.subr.bf16.mxu0 0
        %2169 = vmatpush1.bf16.msra.mxu0 0
        %2170 = vmatprep.subr.bf16.mxu0 0
        %2171 = vmatpush1.bf16.msra.mxu0 0
        %2172 = vmatprep.subr.bf16.mxu0 0
        %2173 = vmatpush1.bf16.msra.mxu0 0
        %2174 = vmatprep.subr.bf16.mxu0 0
        %2175 = vmatpush1.bf16.msra.mxu0 0
        %2176 = vmatprep.subr.bf16.mxu0 0
        %2177 = vmatpush1.bf16.msra.mxu0 0
        %2178 = vmatprep.subr.bf16.mxu0 0
        %2179 = vmatpush1.bf16.msra.mxu0 0
        %2180 = vmatprep.subr.bf16.mxu0 0
        %2181 = vmatpush1.bf16.msra.mxu0 0
        %2182 = vmatprep.subr.bf16.mxu0 0
        %2183 = vmatpush1.bf16.msra.mxu0 0
        %2184 = vmatprep.subr.bf16.mxu0 0
        %2185 = vmatpush1.bf16.msra.mxu0 0
        %2186 = vmatprep.subr.bf16.mxu0 0
        %2187 = vmatpush1.bf16.msra.mxu0 0
        %2188 = vmatprep.mubr.bf16.mxu0 0
        %2189 = vmatmul.mubr.bf16.gmra.mrb[0].mxu0 %v2145
        %v2190 = vpop.f32.mrb[0].mxu0
        %v2191 = vadd.f32 0.0, %v2190
        %v2192 = vpop.f32.mrb[0].mxu0
        %v2193 = vpop.f32.mrb[0].mxu0
        %v2194 = vadd.f32 0.0, %v2193
        %v2195 = vpop.f32.mrb[0].mxu0
        %2196 = vmatprep.mubr.bf16.mxu0 0
        %2197 = vmatmul.mubr.bf16.gmra.mrb[0].mxu0 %v2148
        %v2198 = vpop.f32.mrb[0].mxu0
        %v2199 = vadd.f32 0.0, %v2198
        %v2200 = vpop.f32.mrb[0].mxu0
        %v2201 = vpop.f32.mrb[0].mxu0
        %v2202 = vadd.f32 0.0, %v2201
        %v2203 = vpop.f32.mrb[0].mxu0
        %2204 = vmatprep.mubr.bf16.mxu0 0
        %2205 = vmatmul.mubr.bf16.gmra.mrb[0].mxu0 %v2151
        %v2206 = vpop.f32.mrb[0].mxu0
        %v2207 = vadd.f32 0.0, %v2206
        %v2208 = vpop.f32.mrb[0].mxu0
        %v2209 = vpop.f32.mrb[0].mxu0
        %v2210 = vadd.f32 0.0, %v2209
        %v2211 = vpop.f32.mrb[0].mxu0
        %2212 = vmatprep.mubr.bf16.mxu0 0
        %2213 = vmatmul.mubr.bf16.gmra.mrb[0].mxu0 %v2154
        %v2214 = vpop.f32.mrb[0].mxu0
        %v2215 = vadd.f32 0.0, %v2214
        %v2216 = vpop.f32.mrb[0].mxu0
        %v2217 = vpop.f32.mrb[0].mxu0
        %v2218 = vadd.f32 0.0, %v2217
        %v2219 = vpop.f32.mrb[0].mxu0
        %2220 = vdwg.mxu0
        %v2221 = vpack.c.bf16 %v2194, %v2191
        %v2222 = vpack.c.bf16 %v2202, %v2199
        %v2223 = vpack.c.bf16 %v2210, %v2207
        %v2224 = vpack.c.bf16 %v2218, %v2215
        %2225 = vst [vmem:[#allocation2 + $0xc0] sm:$0xff] %v2221
        %2226 = vst [vmem:[#allocation2 + $0xd0] sm:$0xff] %v2222
        %2227 = vst [vmem:[#allocation2 + $0xe0] sm:$0xff] %v2223
        %2228 = vst [vmem:[#allocation2 + $0xf0] sm:$0xff] %v2224
        %2229 = vmatprep.subr.bf16.mxu0 0
        %2230 = vmatpush1.bf16.xpose.msra.mxu0 %v1167
        %2231 = vmatprep.subr.bf16.mxu0 0
        %2232 = vmatpush1.bf16.xpose.msra.mxu0 %v1173
        %2233 = vmatprep.subr.bf16.mxu0 0
        %2234 = vmatpush1.bf16.xpose.msra.mxu0 %v1179
        %2235 = vmatprep.subr.bf16.mxu0 0
        %2236 = vmatpush1.bf16.xpose.msra.mxu0 %v1185
        %2237 = vmatprep.subr.bf16.mxu0 0
        %2238 = vmatpush1.bf16.xpose.msra.mxu0 0
        %2239 = vmatprep.subr.bf16.mxu0 0
        %2240 = vmatpush1.bf16.xpose.msra.mxu0 0
        %2241 = vmatprep.subr.bf16.mxu0 0
        %2242 = vmatpush1.bf16.xpose.msra.mxu0 0
        %2243 = vmatprep.subr.bf16.mxu0 0
        %2244 = vmatpush1.bf16.xpose.msra.mxu0 0
        %2245 = vmatprep.subr.bf16.mxu0 0
        %2246 = vmatpush1.bf16.xpose.msra.mxu0 0
        %2247 = vmatprep.subr.bf16.mxu0 0
        %2248 = vmatpush1.bf16.xpose.msra.mxu0 0
        %2249 = vmatprep.subr.bf16.mxu0 0
        %2250 = vmatpush1.bf16.xpose.msra.mxu0 0
        %2251 = vmatprep.subr.bf16.mxu0 0
        %2252 = vmatpush1.bf16.xpose.msra.mxu0 0
        %2253 = vmatprep.subr.bf16.mxu0 0
        %2254 = vmatpush1.bf16.xpose.msra.mxu0 0
        %2255 = vmatprep.subr.bf16.mxu0 0
        %2256 = vmatpush1.bf16.xpose.msra.mxu0 0
        %2257 = vmatprep.subr.bf16.mxu0 0
        %2258 = vmatpush1.bf16.xpose.msra.mxu0 0
        %2259 = vmatprep.subr.bf16.mxu0 0
        %2260 = vmatpush1.bf16.xpose.msra.mxu0 0
        %2261 = vmatprep.mubr.bf16.mxu0 0
        %2262 = vmatmul.mubr.bf16.gmra.mrb[0].mxu0 %v1165
        %v2263 = vpop.f32.mrb[0].mxu0
        %v2264 = vadd.f32 0.0, %v2263
        %v2265 = vpop.f32.mrb[0].mxu0
        %v2266 = vpop.f32.mrb[0].mxu0
        %v2267 = vadd.f32 0.0, %v2266
        %v2268 = vpop.f32.mrb[0].mxu0
        %2269 = vmatprep.mubr.bf16.mxu0 0
        %2270 = vmatmul.mubr.bf16.gmra.mrb[0].mxu0 %v1171
        %v2271 = vpop.f32.mrb[0].mxu0
        %v2272 = vadd.f32 0.0, %v2271
        %v2273 = vpop.f32.mrb[0].mxu0
        %v2274 = vpop.f32.mrb[0].mxu0
        %v2275 = vadd.f32 0.0, %v2274
        %v2276 = vpop.f32.mrb[0].mxu0
        %2277 = vmatprep.mubr.bf16.mxu0 0
        %2278 = vmatmul.mubr.bf16.gmra.mrb[0].mxu0 %v1177
        %v2279 = vpop.f32.mrb[0].mxu0
        %v2280 = vadd.f32 0.0, %v2279
        %v2281 = vpop.f32.mrb[0].mxu0
        %v2282 = vpop.f32.mrb[0].mxu0
        %v2283 = vadd.f32 0.0, %v2282
        %v2284 = vpop.f32.mrb[0].mxu0
        %2285 = vmatprep.mubr.bf16.mxu0 0
        %2286 = vmatmul.mubr.bf16.gmra.mrb[0].mxu0 %v1183
        %v2287 = vpop.f32.mrb[0].mxu0
        %v2288 = vadd.f32 0.0, %v2287
        %v2289 = vpop.f32.mrb[0].mxu0
        %v2290 = vpop.f32.mrb[0].mxu0
        %v2291 = vadd.f32 0.0, %v2290
        %v2292 = vpop.f32.mrb[0].mxu0
        %2293 = vdwg.mxu0
        %v2294 = vsel %vm1325, %v2264, -inf
        %2295 = vmax.xlane.f32.xlu0 %v2294
        %v2296 = vpop.xlane.xlu0 %2295
        %v2297 = vsel %vm1325, %v2267, -inf
        %2298 = vmax.xlane.f32.xlu0 %v2297
        %v2299 = vpop.xlane.xlu0 %2298
        %v2300 = vsel %vm1325, %v2272, -inf
        %2301 = vmax.xlane.f32.xlu0 %v2300
        %v2302 = vpop.xlane.xlu0 %2301
        %v2303 = vsel %vm1325, %v2275, -inf
        %2304 = vmax.xlane.f32.xlu0 %v2303
        %v2305 = vpop.xlane.xlu0 %2304
        %v2306 = vsel %vm1325, %v2280, -inf
        %2307 = vmax.xlane.f32.xlu0 %v2306
        %v2308 = vpop.xlane.xlu0 %2307
        %v2309 = vsel %vm1325, %v2283, -inf
        %2310 = vmax.xlane.f32.xlu0 %v2309
        %v2311 = vpop.xlane.xlu0 %2310
        %v2312 = vsel %vm1325, %v2288, -inf
        %2313 = vmax.xlane.f32.xlu0 %v2312
        %v2314 = vpop.xlane.xlu0 %2313
        %v2315 = vsel %vm1325, %v2291, -inf
        %2316 = vmax.xlane.f32.xlu0 %v2315
        %v2317 = vpop.xlane.xlu0 %2316
        %v2318 = vsub.f32 %v2264, %v2296
        %v2319 = vsub.f32 %v2267, %v2299
        %v2320 = vsub.f32 %v2272, %v2302
        %v2321 = vsub.f32 %v2275, %v2305
        %v2322 = vsub.f32 %v2280, %v2308
        %v2323 = vsub.f32 %v2283, %v2311
        %v2324 = vsub.f32 %v2288, %v2314
        %v2325 = vsub.f32 %v2291, %v2317
        %v2326 = vmul.f32 %v2318, 1.442695
        %v2327 = vpow.pop %v2326
        %v2328 = vmul.f32 %v2319, 1.442695
        %v2329 = vpow.pop %v2328
        %v2330 = vmul.f32 %v2320, 1.442695
        %v2331 = vpow.pop %v2330
        %v2332 = vmul.f32 %v2321, 1.442695
        %v2333 = vpow.pop %v2332
        %v2334 = vmul.f32 %v2322, 1.442695
        %v2335 = vpow.pop %v2334
        %v2336 = vmul.f32 %v2323, 1.442695
        %v2337 = vpow.pop %v2336
        %v2338 = vmul.f32 %v2324, 1.442695
        %v2339 = vpow.pop %v2338
        %v2340 = vmul.f32 %v2325, 1.442695
        %v2341 = vpow.pop %v2340
        %v2342 = vsel %vm1325, %v2327, 0.0
        %2343 = vadd.xlane.f32.xlu0 %v2342
        %v2344 = vpop.xlane.xlu0 %2343
        %v2345 = vsel %vm1325, %v2329, 0.0
        %2346 = vadd.xlane.f32.xlu0 %v2345
        %v2347 = vpop.xlane.xlu0 %2346
        %v2348 = vsel %vm1325, %v2331, 0.0
        %2349 = vadd.xlane.f32.xlu0 %v2348
        %v2350 = vpop.xlane.xlu0 %2349
        %v2351 = vsel %vm1325, %v2333, 0.0
        %2352 = vadd.xlane.f32.xlu0 %v2351
        %v2353 = vpop.xlane.xlu0 %2352
        %v2354 = vsel %vm1325, %v2335, 0.0
        %2355 = vadd.xlane.f32.xlu0 %v2354
        %v2356 = vpop.xlane.xlu0 %2355
        %v2357 = vsel %vm1325, %v2337, 0.0
        %2358 = vadd.xlane.f32.xlu0 %v2357
        %v2359 = vpop.xlane.xlu0 %2358
        %v2360 = vsel %vm1325, %v2339, 0.0
        %2361 = vadd.xlane.f32.xlu0 %v2360
        %v2362 = vpop.xlane.xlu0 %2361
        %v2363 = vsel %vm1325, %v2341, 0.0
        %2364 = vadd.xlane.f32.xlu0 %v2363
        %v2365 = vpop.xlane.xlu0 %2364
        %v2366 = vrcp.pop %v2344
        %v2367 = vrcp.pop %v2347
        %v2368 = vrcp.pop %v2350
        %v2369 = vrcp.pop %v2353
        %v2370 = vrcp.pop %v2356
        %v2371 = vrcp.pop %v2359
        %v2372 = vrcp.pop %v2362
        %v2373 = vrcp.pop %v2365
        %v2374 = vmul.f32 %v2327, %v2366
        %v2375 = vmul.f32 %v2329, %v2367
        %v2376 = vmul.f32 %v2331, %v2368
        %v2377 = vmul.f32 %v2333, %v2369
        %v2378 = vmul.f32 %v2335, %v2370
        %v2379 = vmul.f32 %v2337, %v2371
        %v2380 = vmul.f32 %v2339, %v2372
        %v2381 = vmul.f32 %v2341, %v2373
        %v2382 = vpack.c.bf16 %v2375, %v2374
        %v2383 = vpack.c.bf16 %v2377, %v2376
        %v2384 = vpack.c.bf16 %v2379, %v2378
        %v2385 = vpack.c.bf16 %v2381, %v2380
        %v2387 = vsel %vm1325, %v2382, 0
        %v2390 = vsel %vm1325, %v2383, 0
        %v2393 = vsel %vm1325, %v2384, 0
        %v2396 = vsel %vm1325, %v2385, 0
        %2398 = vmatprep.subr.bf16.mxu0 0
        %2399 = vmatpush1.bf16.msra.mxu0 %v1169
        %2400 = vmatprep.subr.bf16.mxu0 0
        %2401 = vmatpush1.bf16.msra.mxu0 %v1175
        %2402 = vmatprep.subr.bf16.mxu0 0
        %2403 = vmatpush1.bf16.msra.mxu0 %v1181
        %2404 = vmatprep.subr.bf16.mxu0 0
        %2405 = vmatpush1.bf16.msra.mxu0 %v1187
        %2406 = vmatprep.subr.bf16.mxu0 0
        %2407 = vmatpush1.bf16.msra.mxu0 0
        %2408 = vmatprep.subr.bf16.mxu0 0
        %2409 = vmatpush1.bf16.msra.mxu0 0
        %2410 = vmatprep.subr.bf16.mxu0 0
        %2411 = vmatpush1.bf16.msra.mxu0 0
        %2412 = vmatprep.subr.bf16.mxu0 0
        %2413 = vmatpush1.bf16.msra.mxu0 0
        %2414 = vmatprep.subr.bf16.mxu0 0
        %2415 = vmatpush1.bf16.msra.mxu0 0
        %2416 = vmatprep.subr.bf16.mxu0 0
        %2417 = vmatpush1.bf16.msra.mxu0 0
        %2418 = vmatprep.subr.bf16.mxu0 0
        %2419 = vmatpush1.bf16.msra.mxu0 0
        %2420 = vmatprep.subr.bf16.mxu0 0
        %2421 = vmatpush1.bf16.msra.mxu0 0
        %2422 = vmatprep.subr.bf16.mxu0 0
        %2423 = vmatpush1.bf16.msra.mxu0 0
        %2424 = vmatprep.subr.bf16.mxu0 0
        %2425 = vmatpush1.bf16.msra.mxu0 0
        %2426 = vmatprep.subr.bf16.mxu0 0
        %2427 = vmatpush1.bf16.msra.mxu0 0
        %2428 = vmatprep.subr.bf16.mxu0 0
        %2429 = vmatpush1.bf16.msra.mxu0 0
        %2430 = vmatprep.mubr.bf16.mxu0 0
        %2431 = vmatmul.mubr.bf16.gmra.mrb[0].mxu0 %v2387
        %v2432 = vpop.f32.mrb[0].mxu0
        %v2433 = vadd.f32 0.0, %v2432
        %v2434 = vpop.f32.mrb[0].mxu0
        %v2435 = vpop.f32.mrb[0].mxu0
        %v2436 = vadd.f32 0.0, %v2435
        %v2437 = vpop.f32.mrb[0].mxu0
        %2438 = vmatprep.mubr.bf16.mxu0 0
        %2439 = vmatmul.mubr.bf16.gmra.mrb[0].mxu0 %v2390
        %v2440 = vpop.f32.mrb[0].mxu0
        %v2441 = vadd.f32 0.0, %v2440
        %v2442 = vpop.f32.mrb[0].mxu0
        %v2443 = vpop.f32.mrb[0].mxu0
        %v2444 = vadd.f32 0.0, %v2443
        %v2445 = vpop.f32.mrb[0].mxu0
        %2446 = vmatprep.mubr.bf16.mxu0 0
        %2447 = vmatmul.mubr.bf16.gmra.mrb[0].mxu0 %v2393
        %v2448 = vpop.f32.mrb[0].mxu0
        %v2449 = vadd.f32 0.0, %v2448
        %v2450 = vpop.f32.mrb[0].mxu0
        %v2451 = vpop.f32.mrb[0].mxu0
        %v2452 = vadd.f32 0.0, %v2451
        %v2453 = vpop.f32.mrb[0].mxu0
        %2454 = vmatprep.mubr.bf16.mxu0 0
        %2455 = vmatmul.mubr.bf16.gmra.mrb[0].mxu0 %v2396
        %v2456 = vpop.f32.mrb[0].mxu0
        %v2457 = vadd.f32 0.0, %v2456
        %v2458 = vpop.f32.mrb[0].mxu0
        %v2459 = vpop.f32.mrb[0].mxu0
        %v2460 = vadd.f32 0.0, %v2459
        %v2461 = vpop.f32.mrb[0].mxu0
        %2462 = vdwg.mxu0
        %v2463 = vpack.c.bf16 %v2436, %v2433
        %v2464 = vpack.c.bf16 %v2444, %v2441
        %v2465 = vpack.c.bf16 %v2452, %v2449
        %v2466 = vpack.c.bf16 %v2460, %v2457
        %2467 = vst [vmem:[#allocation2 + $0x8] sm:$0xff] %v2463
        %2468 = vst [vmem:[#allocation2 + $0x18] sm:$0xff] %v2464
        %2469 = vst [vmem:[#allocation2 + $0x28] sm:$0xff] %v2465
        %2470 = vst [vmem:[#allocation2 + $0x38] sm:$0xff] %v2466
        %2471 = vmatprep.subr.bf16.mxu0 0
        %2472 = vmatpush1.bf16.xpose.msra.mxu0 %v1191
        %2473 = vmatprep.subr.bf16.mxu0 0
        %2474 = vmatpush1.bf16.xpose.msra.mxu0 %v1197
        %2475 = vmatprep.subr.bf16.mxu0 0
        %2476 = vmatpush1.bf16.xpose.msra.mxu0 %v1203
        %2477 = vmatprep.subr.bf16.mxu0 0
        %2478 = vmatpush1.bf16.xpose.msra.mxu0 %v1209
        %2479 = vmatprep.subr.bf16.mxu0 0
        %2480 = vmatpush1.bf16.xpose.msra.mxu0 0
        %2481 = vmatprep.subr.bf16.mxu0 0
        %2482 = vmatpush1.bf16.xpose.msra.mxu0 0
        %2483 = vmatprep.subr.bf16.mxu0 0
        %2484 = vmatpush1.bf16.xpose.msra.mxu0 0
        %2485 = vmatprep.subr.bf16.mxu0 0
        %2486 = vmatpush1.bf16.xpose.msra.mxu0 0
        %2487 = vmatprep.subr.bf16.mxu0 0
        %2488 = vmatpush1.bf16.xpose.msra.mxu0 0
        %2489 = vmatprep.subr.bf16.mxu0 0
        %2490 = vmatpush1.bf16.xpose.msra.mxu0 0
        %2491 = vmatprep.subr.bf16.mxu0 0
        %2492 = vmatpush1.bf16.xpose.msra.mxu0 0
        %2493 = vmatprep.subr.bf16.mxu0 0
        %2494 = vmatpush1.bf16.xpose.msra.mxu0 0
        %2495 = vmatprep.subr.bf16.mxu0 0
        %2496 = vmatpush1.bf16.xpose.msra.mxu0 0
        %2497 = vmatprep.subr.bf16.mxu0 0
        %2498 = vmatpush1.bf16.xpose.msra.mxu0 0
        %2499 = vmatprep.subr.bf16.mxu0 0
        %2500 = vmatpush1.bf16.xpose.msra.mxu0 0
        %2501 = vmatprep.subr.bf16.mxu0 0
        %2502 = vmatpush1.bf16.xpose.msra.mxu0 0
        %2503 = vmatprep.mubr.bf16.mxu0 0
        %2504 = vmatmul.mubr.bf16.gmra.mrb[0].mxu0 %v1189
        %v2505 = vpop.f32.mrb[0].mxu0
        %v2506 = vadd.f32 0.0, %v2505
        %v2507 = vpop.f32.mrb[0].mxu0
        %v2508 = vpop.f32.mrb[0].mxu0
        %v2509 = vadd.f32 0.0, %v2508
        %v2510 = vpop.f32.mrb[0].mxu0
        %2511 = vmatprep.mubr.bf16.mxu0 0
        %2512 = vmatmul.mubr.bf16.gmra.mrb[0].mxu0 %v1195
        %v2513 = vpop.f32.mrb[0].mxu0
        %v2514 = vadd.f32 0.0, %v2513
        %v2515 = vpop.f32.mrb[0].mxu0
        %v2516 = vpop.f32.mrb[0].mxu0
        %v2517 = vadd.f32 0.0, %v2516
        %v2518 = vpop.f32.mrb[0].mxu0
        %2519 = vmatprep.mubr.bf16.mxu0 0
        %2520 = vmatmul.mubr.bf16.gmra.mrb[0].mxu0 %v1201
        %v2521 = vpop.f32.mrb[0].mxu0
        %v2522 = vadd.f32 0.0, %v2521
        %v2523 = vpop.f32.mrb[0].mxu0
        %v2524 = vpop.f32.mrb[0].mxu0
        %v2525 = vadd.f32 0.0, %v2524
        %v2526 = vpop.f32.mrb[0].mxu0
        %2527 = vmatprep.mubr.bf16.mxu0 0
        %2528 = vmatmul.mubr.bf16.gmra.mrb[0].mxu0 %v1207
        %v2529 = vpop.f32.mrb[0].mxu0
        %v2530 = vadd.f32 0.0, %v2529
        %v2531 = vpop.f32.mrb[0].mxu0
        %v2532 = vpop.f32.mrb[0].mxu0
        %v2533 = vadd.f32 0.0, %v2532
        %v2534 = vpop.f32.mrb[0].mxu0
        %2535 = vdwg.mxu0
        %v2536 = vsel %vm1325, %v2506, -inf
        %2537 = vmax.xlane.f32.xlu0 %v2536
        %v2538 = vpop.xlane.xlu0 %2537
        %v2539 = vsel %vm1325, %v2509, -inf
        %2540 = vmax.xlane.f32.xlu0 %v2539
        %v2541 = vpop.xlane.xlu0 %2540
        %v2542 = vsel %vm1325, %v2514, -inf
        %2543 = vmax.xlane.f32.xlu0 %v2542
        %v2544 = vpop.xlane.xlu0 %2543
        %v2545 = vsel %vm1325, %v2517, -inf
        %2546 = vmax.xlane.f32.xlu0 %v2545
        %v2547 = vpop.xlane.xlu0 %2546
        %v2548 = vsel %vm1325, %v2522, -inf
        %2549 = vmax.xlane.f32.xlu0 %v2548
        %v2550 = vpop.xlane.xlu0 %2549
        %v2551 = vsel %vm1325, %v2525, -inf
        %2552 = vmax.xlane.f32.xlu0 %v2551
        %v2553 = vpop.xlane.xlu0 %2552
        %v2554 = vsel %vm1325, %v2530, -inf
        %2555 = vmax.xlane.f32.xlu0 %v2554
        %v2556 = vpop.xlane.xlu0 %2555
        %v2557 = vsel %vm1325, %v2533, -inf
        %2558 = vmax.xlane.f32.xlu0 %v2557
        %v2559 = vpop.xlane.xlu0 %2558
        %v2560 = vsub.f32 %v2506, %v2538
        %v2561 = vsub.f32 %v2509, %v2541
        %v2562 = vsub.f32 %v2514, %v2544
        %v2563 = vsub.f32 %v2517, %v2547
        %v2564 = vsub.f32 %v2522, %v2550
        %v2565 = vsub.f32 %v2525, %v2553
        %v2566 = vsub.f32 %v2530, %v2556
        %v2567 = vsub.f32 %v2533, %v2559
        %v2568 = vmul.f32 %v2560, 1.442695
        %v2569 = vpow.pop %v2568
        %v2570 = vmul.f32 %v2561, 1.442695
        %v2571 = vpow.pop %v2570
        %v2572 = vmul.f32 %v2562, 1.442695
        %v2573 = vpow.pop %v2572
        %v2574 = vmul.f32 %v2563, 1.442695
        %v2575 = vpow.pop %v2574
        %v2576 = vmul.f32 %v2564, 1.442695
        %v2577 = vpow.pop %v2576
        %v2578 = vmul.f32 %v2565, 1.442695
        %v2579 = vpow.pop %v2578
        %v2580 = vmul.f32 %v2566, 1.442695
        %v2581 = vpow.pop %v2580
        %v2582 = vmul.f32 %v2567, 1.442695
        %v2583 = vpow.pop %v2582
        %v2584 = vsel %vm1325, %v2569, 0.0
        %2585 = vadd.xlane.f32.xlu0 %v2584
        %v2586 = vpop.xlane.xlu0 %2585
        %v2587 = vsel %vm1325, %v2571, 0.0
        %2588 = vadd.xlane.f32.xlu0 %v2587
        %v2589 = vpop.xlane.xlu0 %2588
        %v2590 = vsel %vm1325, %v2573, 0.0
        %2591 = vadd.xlane.f32.xlu0 %v2590
        %v2592 = vpop.xlane.xlu0 %2591
        %v2593 = vsel %vm1325, %v2575, 0.0
        %2594 = vadd.xlane.f32.xlu0 %v2593
        %v2595 = vpop.xlane.xlu0 %2594
        %v2596 = vsel %vm1325, %v2577, 0.0
        %2597 = vadd.xlane.f32.xlu0 %v2596
        %v2598 = vpop.xlane.xlu0 %2597
        %v2599 = vsel %vm1325, %v2579, 0.0
        %2600 = vadd.xlane.f32.xlu0 %v2599
        %v2601 = vpop.xlane.xlu0 %2600
        %v2602 = vsel %vm1325, %v2581, 0.0
        %2603 = vadd.xlane.f32.xlu0 %v2602
        %v2604 = vpop.xlane.xlu0 %2603
        %v2605 = vsel %vm1325, %v2583, 0.0
        %2606 = vadd.xlane.f32.xlu0 %v2605
        %v2607 = vpop.xlane.xlu0 %2606
        %v2608 = vrcp.pop %v2586
        %v2609 = vrcp.pop %v2589
        %v2610 = vrcp.pop %v2592
        %v2611 = vrcp.pop %v2595
        %v2612 = vrcp.pop %v2598
        %v2613 = vrcp.pop %v2601
        %v2614 = vrcp.pop %v2604
        %v2615 = vrcp.pop %v2607
        %v2616 = vmul.f32 %v2569, %v2608
        %v2617 = vmul.f32 %v2571, %v2609
        %v2618 = vmul.f32 %v2573, %v2610
        %v2619 = vmul.f32 %v2575, %v2611
        %v2620 = vmul.f32 %v2577, %v2612
        %v2621 = vmul.f32 %v2579, %v2613
        %v2622 = vmul.f32 %v2581, %v2614
        %v2623 = vmul.f32 %v2583, %v2615
        %v2624 = vpack.c.bf16 %v2617, %v2616
        %v2625 = vpack.c.bf16 %v2619, %v2618
        %v2626 = vpack.c.bf16 %v2621, %v2620
        %v2627 = vpack.c.bf16 %v2623, %v2622
        %v2629 = vsel %vm1325, %v2624, 0
        %v2632 = vsel %vm1325, %v2625, 0
        %v2635 = vsel %vm1325, %v2626, 0
        %v2638 = vsel %vm1325, %v2627, 0
        %2640 = vmatprep.subr.bf16.mxu0 0
        %2641 = vmatpush1.bf16.msra.mxu0 %v1193
        %2642 = vmatprep.subr.bf16.mxu0 0
        %2643 = vmatpush1.bf16.msra.mxu0 %v1199
        %2644 = vmatprep.subr.bf16.mxu0 0
        %2645 = vmatpush1.bf16.msra.mxu0 %v1205
        %2646 = vmatprep.subr.bf16.mxu0 0
        %2647 = vmatpush1.bf16.msra.mxu0 %v1211
        %2648 = vmatprep.subr.bf16.mxu0 0
        %2649 = vmatpush1.bf16.msra.mxu0 0
        %2650 = vmatprep.subr.bf16.mxu0 0
        %2651 = vmatpush1.bf16.msra.mxu0 0
        %2652 = vmatprep.subr.bf16.mxu0 0
        %2653 = vmatpush1.bf16.msra.mxu0 0
        %2654 = vmatprep.subr.bf16.mxu0 0
        %2655 = vmatpush1.bf16.msra.mxu0 0
        %2656 = vmatprep.subr.bf16.mxu0 0
        %2657 = vmatpush1.bf16.msra.mxu0 0
        %2658 = vmatprep.subr.bf16.mxu0 0
        %2659 = vmatpush1.bf16.msra.mxu0 0
        %2660 = vmatprep.subr.bf16.mxu0 0
        %2661 = vmatpush1.bf16.msra.mxu0 0
        %2662 = vmatprep.subr.bf16.mxu0 0
        %2663 = vmatpush1.bf16.msra.mxu0 0
        %2664 = vmatprep.subr.bf16.mxu0 0
        %2665 = vmatpush1.bf16.msra.mxu0 0
        %2666 = vmatprep.subr.bf16.mxu0 0
        %2667 = vmatpush1.bf16.msra.mxu0 0
        %2668 = vmatprep.subr.bf16.mxu0 0
        %2669 = vmatpush1.bf16.msra.mxu0 0
        %2670 = vmatprep.subr.bf16.mxu0 0
        %2671 = vmatpush1.bf16.msra.mxu0 0
        %2672 = vmatprep.mubr.bf16.mxu0 0
        %2673 = vmatmul.mubr.bf16.gmra.mrb[0].mxu0 %v2629
        %v2674 = vpop.f32.mrb[0].mxu0
        %v2675 = vadd.f32 0.0, %v2674
        %v2676 = vpop.f32.mrb[0].mxu0
        %v2677 = vpop.f32.mrb[0].mxu0
        %v2678 = vadd.f32 0.0, %v2677
        %v2679 = vpop.f32.mrb[0].mxu0
        %2680 = vmatprep.mubr.bf16.mxu0 0
        %2681 = vmatmul.mubr.bf16.gmra.mrb[0].mxu0 %v2632
        %v2682 = vpop.f32.mrb[0].mxu0
        %v2683 = vadd.f32 0.0, %v2682
        %v2684 = vpop.f32.mrb[0].mxu0
        %v2685 = vpop.f32.mrb[0].mxu0
        %v2686 = vadd.f32 0.0, %v2685
        %v2687 = vpop.f32.mrb[0].mxu0
        %2688 = vmatprep.mubr.bf16.mxu0 0
        %2689 = vmatmul.mubr.bf16.gmra.mrb[0].mxu0 %v2635
        %v2690 = vpop.f32.mrb[0].mxu0
        %v2691 = vadd.f32 0.0, %v2690
        %v2692 = vpop.f32.mrb[0].mxu0
        %v2693 = vpop.f32.mrb[0].mxu0
        %v2694 = vadd.f32 0.0, %v2693
        %v2695 = vpop.f32.mrb[0].mxu0
        %2696 = vmatprep.mubr.bf16.mxu0 0
        %2697 = vmatmul.mubr.bf16.gmra.mrb[0].mxu0 %v2638
        %v2698 = vpop.f32.mrb[0].mxu0
        %v2699 = vadd.f32 0.0, %v2698
        %v2700 = vpop.f32.mrb[0].mxu0
        %v2701 = vpop.f32.mrb[0].mxu0
        %v2702 = vadd.f32 0.0, %v2701
        %v2703 = vpop.f32.mrb[0].mxu0
        %2704 = vdwg.mxu0
        %v2705 = vpack.c.bf16 %v2678, %v2675
        %v2706 = vpack.c.bf16 %v2686, %v2683
        %v2707 = vpack.c.bf16 %v2694, %v2691
        %v2708 = vpack.c.bf16 %v2702, %v2699
        %2709 = vst [vmem:[#allocation2 + $0x48] sm:$0xff] %v2705
        %2710 = vst [vmem:[#allocation2 + $0x58] sm:$0xff] %v2706
        %2711 = vst [vmem:[#allocation2 + $0x68] sm:$0xff] %v2707
        %2712 = vst [vmem:[#allocation2 + $0x78] sm:$0xff] %v2708
        %2713 = vmatprep.subr.bf16.mxu0 0
        %2714 = vmatpush1.bf16.xpose.msra.mxu0 %v1215
        %2715 = vmatprep.subr.bf16.mxu0 0
        %2716 = vmatpush1.bf16.xpose.msra.mxu0 %v1221
        %2717 = vmatprep.subr.bf16.mxu0 0
        %2718 = vmatpush1.bf16.xpose.msra.mxu0 %v1227
        %2719 = vmatprep.subr.bf16.mxu0 0
        %2720 = vmatpush1.bf16.xpose.msra.mxu0 %v1233
        %2721 = vmatprep.subr.bf16.mxu0 0
        %2722 = vmatpush1.bf16.xpose.msra.mxu0 0
        %2723 = vmatprep.subr.bf16.mxu0 0
        %2724 = vmatpush1.bf16.xpose.msra.mxu0 0
        %2725 = vmatprep.subr.bf16.mxu0 0
        %2726 = vmatpush1.bf16.xpose.msra.mxu0 0
        %2727 = vmatprep.subr.bf16.mxu0 0
        %2728 = vmatpush1.bf16.xpose.msra.mxu0 0
        %2729 = vmatprep.subr.bf16.mxu0 0
        %2730 = vmatpush1.bf16.xpose.msra.mxu0 0
        %2731 = vmatprep.subr.bf16.mxu0 0
        %2732 = vmatpush1.bf16.xpose.msra.mxu0 0
        %2733 = vmatprep.subr.bf16.mxu0 0
        %2734 = vmatpush1.bf16.xpose.msra.mxu0 0
        %2735 = vmatprep.subr.bf16.mxu0 0
        %2736 = vmatpush1.bf16.xpose.msra.mxu0 0
        %2737 = vmatprep.subr.bf16.mxu0 0
        %2738 = vmatpush1.bf16.xpose.msra.mxu0 0
        %2739 = vmatprep.subr.bf16.mxu0 0
        %2740 = vmatpush1.bf16.xpose.msra.mxu0 0
        %2741 = vmatprep.subr.bf16.mxu0 0
        %2742 = vmatpush1.bf16.xpose.msra.mxu0 0
        %2743 = vmatprep.subr.bf16.mxu0 0
        %2744 = vmatpush1.bf16.xpose.msra.mxu0 0
        %2745 = vmatprep.mubr.bf16.mxu0 0
        %2746 = vmatmul.mubr.bf16.gmra.mrb[0].mxu0 %v1213
        %v2747 = vpop.f32.mrb[0].mxu0
        %v2748 = vadd.f32 0.0, %v2747
        %v2749 = vpop.f32.mrb[0].mxu0
        %v2750 = vpop.f32.mrb[0].mxu0
        %v2751 = vadd.f32 0.0, %v2750
        %v2752 = vpop.f32.mrb[0].mxu0
        %2753 = vmatprep.mubr.bf16.mxu0 0
        %2754 = vmatmul.mubr.bf16.gmra.mrb[0].mxu0 %v1219
        %v2755 = vpop.f32.mrb[0].mxu0
        %v2756 = vadd.f32 0.0, %v2755
        %v2757 = vpop.f32.mrb[0].mxu0
        %v2758 = vpop.f32.mrb[0].mxu0
        %v2759 = vadd.f32 0.0, %v2758
        %v2760 = vpop.f32.mrb[0].mxu0
        %2761 = vmatprep.mubr.bf16.mxu0 0
        %2762 = vmatmul.mubr.bf16.gmra.mrb[0].mxu0 %v1225
        %v2763 = vpop.f32.mrb[0].mxu0
        %v2764 = vadd.f32 0.0, %v2763
        %v2765 = vpop.f32.mrb[0].mxu0
        %v2766 = vpop.f32.mrb[0].mxu0
        %v2767 = vadd.f32 0.0, %v2766
        %v2768 = vpop.f32.mrb[0].mxu0
        %2769 = vmatprep.mubr.bf16.mxu0 0
        %2770 = vmatmul.mubr.bf16.gmra.mrb[0].mxu0 %v1231
        %v2771 = vpop.f32.mrb[0].mxu0
        %v2772 = vadd.f32 0.0, %v2771
        %v2773 = vpop.f32.mrb[0].mxu0
        %v2774 = vpop.f32.mrb[0].mxu0
        %v2775 = vadd.f32 0.0, %v2774
        %v2776 = vpop.f32.mrb[0].mxu0
        %2777 = vdwg.mxu0
        %v2778 = vsel %vm1325, %v2748, -inf
        %2779 = vmax.xlane.f32.xlu0 %v2778
        %v2780 = vpop.xlane.xlu0 %2779
        %v2781 = vsel %vm1325, %v2751, -inf
        %2782 = vmax.xlane.f32.xlu0 %v2781
        %v2783 = vpop.xlane.xlu0 %2782
        %v2784 = vsel %vm1325, %v2756, -inf
        %2785 = vmax.xlane.f32.xlu0 %v2784
        %v2786 = vpop.xlane.xlu0 %2785
        %v2787 = vsel %vm1325, %v2759, -inf
        %2788 = vmax.xlane.f32.xlu0 %v2787
        %v2789 = vpop.xlane.xlu0 %2788
        %v2790 = vsel %vm1325, %v2764, -inf
        %2791 = vmax.xlane.f32.xlu0 %v2790
        %v2792 = vpop.xlane.xlu0 %2791
        %v2793 = vsel %vm1325, %v2767, -inf
        %2794 = vmax.xlane.f32.xlu0 %v2793
        %v2795 = vpop.xlane.xlu0 %2794
        %v2796 = vsel %vm1325, %v2772, -inf
        %2797 = vmax.xlane.f32.xlu0 %v2796
        %v2798 = vpop.xlane.xlu0 %2797
        %v2799 = vsel %vm1325, %v2775, -inf
        %2800 = vmax.xlane.f32.xlu0 %v2799
        %v2801 = vpop.xlane.xlu0 %2800
        %v2802 = vsub.f32 %v2748, %v2780
        %v2803 = vsub.f32 %v2751, %v2783
        %v2804 = vsub.f32 %v2756, %v2786
        %v2805 = vsub.f32 %v2759, %v2789
        %v2806 = vsub.f32 %v2764, %v2792
        %v2807 = vsub.f32 %v2767, %v2795
        %v2808 = vsub.f32 %v2772, %v2798
        %v2809 = vsub.f32 %v2775, %v2801
        %v2810 = vmul.f32 %v2802, 1.442695
        %v2811 = vpow.pop %v2810
        %v2812 = vmul.f32 %v2803, 1.442695
        %v2813 = vpow.pop %v2812
        %v2814 = vmul.f32 %v2804, 1.442695
        %v2815 = vpow.pop %v2814
        %v2816 = vmul.f32 %v2805, 1.442695
        %v2817 = vpow.pop %v2816
        %v2818 = vmul.f32 %v2806, 1.442695
        %v2819 = vpow.pop %v2818
        %v2820 = vmul.f32 %v2807, 1.442695
        %v2821 = vpow.pop %v2820
        %v2822 = vmul.f32 %v2808, 1.442695
        %v2823 = vpow.pop %v2822
        %v2824 = vmul.f32 %v2809, 1.442695
        %v2825 = vpow.pop %v2824
        %v2826 = vsel %vm1325, %v2811, 0.0
        %2827 = vadd.xlane.f32.xlu0 %v2826
        %v2828 = vpop.xlane.xlu0 %2827
        %v2829 = vsel %vm1325, %v2813, 0.0
        %2830 = vadd.xlane.f32.xlu0 %v2829
        %v2831 = vpop.xlane.xlu0 %2830
        %v2832 = vsel %vm1325, %v2815, 0.0
        %2833 = vadd.xlane.f32.xlu0 %v2832
        %v2834 = vpop.xlane.xlu0 %2833
        %v2835 = vsel %vm1325, %v2817, 0.0
        %2836 = vadd.xlane.f32.xlu0 %v2835
        %v2837 = vpop.xlane.xlu0 %2836
        %v2838 = vsel %vm1325, %v2819, 0.0
        %2839 = vadd.xlane.f32.xlu0 %v2838
        %v2840 = vpop.xlane.xlu0 %2839
        %v2841 = vsel %vm1325, %v2821, 0.0
        %2842 = vadd.xlane.f32.xlu0 %v2841
        %v2843 = vpop.xlane.xlu0 %2842
        %v2844 = vsel %vm1325, %v2823, 0.0
        %2845 = vadd.xlane.f32.xlu0 %v2844
        %v2846 = vpop.xlane.xlu0 %2845
        %v2847 = vsel %vm1325, %v2825, 0.0
        %2848 = vadd.xlane.f32.xlu0 %v2847
        %v2849 = vpop.xlane.xlu0 %2848
        %v2850 = vrcp.pop %v2828
        %v2851 = vrcp.pop %v2831
        %v2852 = vrcp.pop %v2834
        %v2853 = vrcp.pop %v2837
        %v2854 = vrcp.pop %v2840
        %v2855 = vrcp.pop %v2843
        %v2856 = vrcp.pop %v2846
        %v2857 = vrcp.pop %v2849
        %v2858 = vmul.f32 %v2811, %v2850
        %v2859 = vmul.f32 %v2813, %v2851
        %v2860 = vmul.f32 %v2815, %v2852
        %v2861 = vmul.f32 %v2817, %v2853
        %v2862 = vmul.f32 %v2819, %v2854
        %v2863 = vmul.f32 %v2821, %v2855
        %v2864 = vmul.f32 %v2823, %v2856
        %v2865 = vmul.f32 %v2825, %v2857
        %v2866 = vpack.c.bf16 %v2859, %v2858
        %v2867 = vpack.c.bf16 %v2861, %v2860
        %v2868 = vpack.c.bf16 %v2863, %v2862
        %v2869 = vpack.c.bf16 %v2865, %v2864
        %v2871 = vsel %vm1325, %v2866, 0
        %v2874 = vsel %vm1325, %v2867, 0
        %v2877 = vsel %vm1325, %v2868, 0
        %v2880 = vsel %vm1325, %v2869, 0
        %2882 = vmatprep.subr.bf16.mxu0 0
        %2883 = vmatpush1.bf16.msra.mxu0 %v1217
        %2884 = vmatprep.subr.bf16.mxu0 0
        %2885 = vmatpush1.bf16.msra.mxu0 %v1223
        %2886 = vmatprep.subr.bf16.mxu0 0
        %2887 = vmatpush1.bf16.msra.mxu0 %v1229
        %2888 = vmatprep.subr.bf16.mxu0 0
        %2889 = vmatpush1.bf16.msra.mxu0 %v1235
        %2890 = vmatprep.subr.bf16.mxu0 0
        %2891 = vmatpush1.bf16.msra.mxu0 0
        %2892 = vmatprep.subr.bf16.mxu0 0
        %2893 = vmatpush1.bf16.msra.mxu0 0
        %2894 = vmatprep.subr.bf16.mxu0 0
        %2895 = vmatpush1.bf16.msra.mxu0 0
        %2896 = vmatprep.subr.bf16.mxu0 0
        %2897 = vmatpush1.bf16.msra.mxu0 0
        %2898 = vmatprep.subr.bf16.mxu0 0
        %2899 = vmatpush1.bf16.msra.mxu0 0
        %2900 = vmatprep.subr.bf16.mxu0 0
        %2901 = vmatpush1.bf16.msra.mxu0 0
        %2902 = vmatprep.subr.bf16.mxu0 0
        %2903 = vmatpush1.bf16.msra.mxu0 0
        %2904 = vmatprep.subr.bf16.mxu0 0
        %2905 = vmatpush1.bf16.msra.mxu0 0
        %2906 = vmatprep.subr.bf16.mxu0 0
        %2907 = vmatpush1.bf16.msra.mxu0 0
        %2908 = vmatprep.subr.bf16.mxu0 0
        %2909 = vmatpush1.bf16.msra.mxu0 0
        %2910 = vmatprep.subr.bf16.mxu0 0
        %2911 = vmatpush1.bf16.msra.mxu0 0
        %2912 = vmatprep.subr.bf16.mxu0 0
        %2913 = vmatpush1.bf16.msra.mxu0 0
        %2914 = vmatprep.mubr.bf16.mxu0 0
        %2915 = vmatmul.mubr.bf16.gmra.mrb[0].mxu0 %v2871
        %v2916 = vpop.f32.mrb[0].mxu0
        %v2917 = vadd.f32 0.0, %v2916
        %v2918 = vpop.f32.mrb[0].mxu0
        %v2919 = vpop.f32.mrb[0].mxu0
        %v2920 = vadd.f32 0.0, %v2919
        %v2921 = vpop.f32.mrb[0].mxu0
        %2922 = vmatprep.mubr.bf16.mxu0 0
        %2923 = vmatmul.mubr.bf16.gmra.mrb[0].mxu0 %v2874
        %v2924 = vpop.f32.mrb[0].mxu0
        %v2925 = vadd.f32 0.0, %v2924
        %v2926 = vpop.f32.mrb[0].mxu0
        %v2927 = vpop.f32.mrb[0].mxu0
        %v2928 = vadd.f32 0.0, %v2927
        %v2929 = vpop.f32.mrb[0].mxu0
        %2930 = vmatprep.mubr.bf16.mxu0 0
        %2931 = vmatmul.mubr.bf16.gmra.mrb[0].mxu0 %v2877
        %v2932 = vpop.f32.mrb[0].mxu0
        %v2933 = vadd.f32 0.0, %v2932
        %v2934 = vpop.f32.mrb[0].mxu0
        %v2935 = vpop.f32.mrb[0].mxu0
        %v2936 = vadd.f32 0.0, %v2935
        %v2937 = vpop.f32.mrb[0].mxu0
        %2938 = vmatprep.mubr.bf16.mxu0 0
        %2939 = vmatmul.mubr.bf16.gmra.mrb[0].mxu0 %v2880
        %v2940 = vpop.f32.mrb[0].mxu0
        %v2941 = vadd.f32 0.0, %v2940
        %v2942 = vpop.f32.mrb[0].mxu0
        %v2943 = vpop.f32.mrb[0].mxu0
        %v2944 = vadd.f32 0.0, %v2943
        %v2945 = vpop.f32.mrb[0].mxu0
        %2946 = vdwg.mxu0
        %v2947 = vpack.c.bf16 %v2920, %v2917
        %v2948 = vpack.c.bf16 %v2928, %v2925
        %v2949 = vpack.c.bf16 %v2936, %v2933
        %v2950 = vpack.c.bf16 %v2944, %v2941
        %2951 = vst [vmem:[#allocation2 + $0x88] sm:$0xff] %v2947
        %2952 = vst [vmem:[#allocation2 + $0x98] sm:$0xff] %v2948
        %2953 = vst [vmem:[#allocation2 + $0xa8] sm:$0xff] %v2949
        %2954 = vst [vmem:[#allocation2 + $0xb8] sm:$0xff] %v2950
        %2955 = vmatprep.subr.bf16.mxu0 0
        %2956 = vmatpush1.bf16.xpose.msra.mxu0 %v1239
        %2957 = vmatprep.subr.bf16.mxu0 0
        %2958 = vmatpush1.bf16.xpose.msra.mxu0 %v1245
        %2959 = vmatprep.subr.bf16.mxu0 0
        %2960 = vmatpush1.bf16.xpose.msra.mxu0 %v1251
        %2961 = vmatprep.subr.bf16.mxu0 0
        %2962 = vmatpush1.bf16.xpose.msra.mxu0 %v1257
        %2963 = vmatprep.subr.bf16.mxu0 0
        %2964 = vmatpush1.bf16.xpose.msra.mxu0 0
        %2965 = vmatprep.subr.bf16.mxu0 0
        %2966 = vmatpush1.bf16.xpose.msra.mxu0 0
        %2967 = vmatprep.subr.bf16.mxu0 0
        %2968 = vmatpush1.bf16.xpose.msra.mxu0 0
        %2969 = vmatprep.subr.bf16.mxu0 0
        %2970 = vmatpush1.bf16.xpose.msra.mxu0 0
        %2971 = vmatprep.subr.bf16.mxu0 0
        %2972 = vmatpush1.bf16.xpose.msra.mxu0 0
        %2973 = vmatprep.subr.bf16.mxu0 0
        %2974 = vmatpush1.bf16.xpose.msra.mxu0 0
        %2975 = vmatprep.subr.bf16.mxu0 0
        %2976 = vmatpush1.bf16.xpose.msra.mxu0 0
        %2977 = vmatprep.subr.bf16.mxu0 0
        %2978 = vmatpush1.bf16.xpose.msra.mxu0 0
        %2979 = vmatprep.subr.bf16.mxu0 0
        %2980 = vmatpush1.bf16.xpose.msra.mxu0 0
        %2981 = vmatprep.subr.bf16.mxu0 0
        %2982 = vmatpush1.bf16.xpose.msra.mxu0 0
        %2983 = vmatprep.subr.bf16.mxu0 0
        %2984 = vmatpush1.bf16.xpose.msra.mxu0 0
        %2985 = vmatprep.subr.bf16.mxu0 0
        %2986 = vmatpush1.bf16.xpose.msra.mxu0 0
        %2987 = vmatprep.mubr.bf16.mxu0 0
        %2988 = vmatmul.mubr.bf16.gmra.mrb[0].mxu0 %v1237
        %v2989 = vpop.f32.mrb[0].mxu0
        %v2990 = vadd.f32 0.0, %v2989
        %v2991 = vpop.f32.mrb[0].mxu0
        %v2992 = vpop.f32.mrb[0].mxu0
        %v2993 = vadd.f32 0.0, %v2992
        %v2994 = vpop.f32.mrb[0].mxu0
        %2995 = vmatprep.mubr.bf16.mxu0 0
        %2996 = vmatmul.mubr.bf16.gmra.mrb[0].mxu0 %v1243
        %v2997 = vpop.f32.mrb[0].mxu0
        %v2998 = vadd.f32 0.0, %v2997
        %v2999 = vpop.f32.mrb[0].mxu0
        %v3000 = vpop.f32.mrb[0].mxu0
        %v3001 = vadd.f32 0.0, %v3000
        %v3002 = vpop.f32.mrb[0].mxu0
        %3003 = vmatprep.mubr.bf16.mxu0 0
        %3004 = vmatmul.mubr.bf16.gmra.mrb[0].mxu0 %v1249
        %v3005 = vpop.f32.mrb[0].mxu0
        %v3006 = vadd.f32 0.0, %v3005
        %v3007 = vpop.f32.mrb[0].mxu0
        %v3008 = vpop.f32.mrb[0].mxu0
        %v3009 = vadd.f32 0.0, %v3008
        %v3010 = vpop.f32.mrb[0].mxu0
        %3011 = vmatprep.mubr.bf16.mxu0 0
        %3012 = vmatmul.mubr.bf16.gmra.mrb[0].mxu0 %v1255
        %v3013 = vpop.f32.mrb[0].mxu0
        %v3014 = vadd.f32 0.0, %v3013
        %v3015 = vpop.f32.mrb[0].mxu0
        %v3016 = vpop.f32.mrb[0].mxu0
        %v3017 = vadd.f32 0.0, %v3016
        %v3018 = vpop.f32.mrb[0].mxu0
        %3019 = vdwg.mxu0
        %v3020 = vsel %vm1325, %v2990, -inf
        %3021 = vmax.xlane.f32.xlu0 %v3020
        %v3022 = vpop.xlane.xlu0 %3021
        %v3023 = vsel %vm1325, %v2993, -inf
        %3024 = vmax.xlane.f32.xlu0 %v3023
        %v3025 = vpop.xlane.xlu0 %3024
        %v3026 = vsel %vm1325, %v2998, -inf
        %3027 = vmax.xlane.f32.xlu0 %v3026
        %v3028 = vpop.xlane.xlu0 %3027
        %v3029 = vsel %vm1325, %v3001, -inf
        %3030 = vmax.xlane.f32.xlu0 %v3029
        %v3031 = vpop.xlane.xlu0 %3030
        %v3032 = vsel %vm1325, %v3006, -inf
        %3033 = vmax.xlane.f32.xlu0 %v3032
        %v3034 = vpop.xlane.xlu0 %3033
        %v3035 = vsel %vm1325, %v3009, -inf
        %3036 = vmax.xlane.f32.xlu0 %v3035
        %v3037 = vpop.xlane.xlu0 %3036
        %v3038 = vsel %vm1325, %v3014, -inf
        %3039 = vmax.xlane.f32.xlu0 %v3038
        %v3040 = vpop.xlane.xlu0 %3039
        %v3041 = vsel %vm1325, %v3017, -inf
        %3042 = vmax.xlane.f32.xlu0 %v3041
        %v3043 = vpop.xlane.xlu0 %3042
        %v3044 = vsub.f32 %v2990, %v3022
        %v3045 = vsub.f32 %v2993, %v3025
        %v3046 = vsub.f32 %v2998, %v3028
        %v3047 = vsub.f32 %v3001, %v3031
        %v3048 = vsub.f32 %v3006, %v3034
        %v3049 = vsub.f32 %v3009, %v3037
        %v3050 = vsub.f32 %v3014, %v3040
        %v3051 = vsub.f32 %v3017, %v3043
        %v3052 = vmul.f32 %v3044, 1.442695
        %v3053 = vpow.pop %v3052
        %v3054 = vmul.f32 %v3045, 1.442695
        %v3055 = vpow.pop %v3054
        %v3056 = vmul.f32 %v3046, 1.442695
        %v3057 = vpow.pop %v3056
        %v3058 = vmul.f32 %v3047, 1.442695
        %v3059 = vpow.pop %v3058
        %v3060 = vmul.f32 %v3048, 1.442695
        %v3061 = vpow.pop %v3060
        %v3062 = vmul.f32 %v3049, 1.442695
        %v3063 = vpow.pop %v3062
        %v3064 = vmul.f32 %v3050, 1.442695
        %v3065 = vpow.pop %v3064
        %v3066 = vmul.f32 %v3051, 1.442695
        %v3067 = vpow.pop %v3066
        %v3068 = vsel %vm1325, %v3053, 0.0
        %3069 = vadd.xlane.f32.xlu0 %v3068
        %v3070 = vpop.xlane.xlu0 %3069
        %v3071 = vsel %vm1325, %v3055, 0.0
        %3072 = vadd.xlane.f32.xlu0 %v3071
        %v3073 = vpop.xlane.xlu0 %3072
        %v3074 = vsel %vm1325, %v3057, 0.0
        %3075 = vadd.xlane.f32.xlu0 %v3074
        %v3076 = vpop.xlane.xlu0 %3075
        %v3077 = vsel %vm1325, %v3059, 0.0
        %3078 = vadd.xlane.f32.xlu0 %v3077
        %v3079 = vpop.xlane.xlu0 %3078
        %v3080 = vsel %vm1325, %v3061, 0.0
        %3081 = vadd.xlane.f32.xlu0 %v3080
        %v3082 = vpop.xlane.xlu0 %3081
        %v3083 = vsel %vm1325, %v3063, 0.0
        %3084 = vadd.xlane.f32.xlu0 %v3083
        %v3085 = vpop.xlane.xlu0 %3084
        %v3086 = vsel %vm1325, %v3065, 0.0
        %3087 = vadd.xlane.f32.xlu0 %v3086
        %v3088 = vpop.xlane.xlu0 %3087
        %v3089 = vsel %vm1325, %v3067, 0.0
        %3090 = vadd.xlane.f32.xlu0 %v3089
        %v3091 = vpop.xlane.xlu0 %3090
        %v3092 = vrcp.pop %v3070
        %v3093 = vrcp.pop %v3073
        %v3094 = vrcp.pop %v3076
        %v3095 = vrcp.pop %v3079
        %v3096 = vrcp.pop %v3082
        %v3097 = vrcp.pop %v3085
        %v3098 = vrcp.pop %v3088
        %v3099 = vrcp.pop %v3091
        %v3100 = vmul.f32 %v3053, %v3092
        %v3101 = vmul.f32 %v3055, %v3093
        %v3102 = vmul.f32 %v3057, %v3094
        %v3103 = vmul.f32 %v3059, %v3095
        %v3104 = vmul.f32 %v3061, %v3096
        %v3105 = vmul.f32 %v3063, %v3097
        %v3106 = vmul.f32 %v3065, %v3098
        %v3107 = vmul.f32 %v3067, %v3099
        %v3108 = vpack.c.bf16 %v3101, %v3100
        %v3109 = vpack.c.bf16 %v3103, %v3102
        %v3110 = vpack.c.bf16 %v3105, %v3104
        %v3111 = vpack.c.bf16 %v3107, %v3106
        %v3113 = vsel %vm1325, %v3108, 0
        %v3116 = vsel %vm1325, %v3109, 0
        %v3119 = vsel %vm1325, %v3110, 0
        %v3122 = vsel %vm1325, %v3111, 0
        %3124 = vmatprep.subr.bf16.mxu0 0
        %3125 = vmatpush1.bf16.msra.mxu0 %v1241
        %3126 = vmatprep.subr.bf16.mxu0 0
        %3127 = vmatpush1.bf16.msra.mxu0 %v1247
        %3128 = vmatprep.subr.bf16.mxu0 0
        %3129 = vmatpush1.bf16.msra.mxu0 %v1253
        %3130 = vmatprep.subr.bf16.mxu0 0
        %3131 = vmatpush1.bf16.msra.mxu0 %v1259
        %3132 = vmatprep.subr.bf16.mxu0 0
        %3133 = vmatpush1.bf16.msra.mxu0 0
        %3134 = vmatprep.subr.bf16.mxu0 0
        %3135 = vmatpush1.bf16.msra.mxu0 0
        %3136 = vmatprep.subr.bf16.mxu0 0
        %3137 = vmatpush1.bf16.msra.mxu0 0
        %3138 = vmatprep.subr.bf16.mxu0 0
        %3139 = vmatpush1.bf16.msra.mxu0 0
        %3140 = vmatprep.subr.bf16.mxu0 0
        %3141 = vmatpush1.bf16.msra.mxu0 0
        %3142 = vmatprep.subr.bf16.mxu0 0
        %3143 = vmatpush1.bf16.msra.mxu0 0
        %3144 = vmatprep.subr.bf16.mxu0 0
        %3145 = vmatpush1.bf16.msra.mxu0 0
        %3146 = vmatprep.subr.bf16.mxu0 0
        %3147 = vmatpush1.bf16.msra.mxu0 0
        %3148 = vmatprep.subr.bf16.mxu0 0
        %3149 = vmatpush1.bf16.msra.mxu0 0
        %3150 = vmatprep.subr.bf16.mxu0 0
        %3151 = vmatpush1.bf16.msra.mxu0 0
        %3152 = vmatprep.subr.bf16.mxu0 0
        %3153 = vmatpush1.bf16.msra.mxu0 0
        %3154 = vmatprep.subr.bf16.mxu0 0
        %3155 = vmatpush1.bf16.msra.mxu0 0
        %3156 = vmatprep.mubr.bf16.mxu0 0
        %3157 = vmatmul.mubr.bf16.gmra.mrb[0].mxu0 %v3113
        %v3158 = vpop.f32.mrb[0].mxu0
        %v3159 = vadd.f32 0.0, %v3158
        %v3160 = vpop.f32.mrb[0].mxu0
        %v3161 = vpop.f32.mrb[0].mxu0
        %v3162 = vadd.f32 0.0, %v3161
        %v3163 = vpop.f32.mrb[0].mxu0
        %3164 = vmatprep.mubr.bf16.mxu0 0
        %3165 = vmatmul.mubr.bf16.gmra.mrb[0].mxu0 %v3116
        %v3166 = vpop.f32.mrb[0].mxu0
        %v3167 = vadd.f32 0.0, %v3166
        %v3168 = vpop.f32.mrb[0].mxu0
        %v3169 = vpop.f32.mrb[0].mxu0
        %v3170 = vadd.f32 0.0, %v3169
        %v3171 = vpop.f32.mrb[0].mxu0
        %3172 = vmatprep.mubr.bf16.mxu0 0
        %3173 = vmatmul.mubr.bf16.gmra.mrb[0].mxu0 %v3119
        %v3174 = vpop.f32.mrb[0].mxu0
        %v3175 = vadd.f32 0.0, %v3174
        %v3176 = vpop.f32.mrb[0].mxu0
        %v3177 = vpop.f32.mrb[0].mxu0
        %v3178 = vadd.f32 0.0, %v3177
        %v3179 = vpop.f32.mrb[0].mxu0
        %3180 = vmatprep.mubr.bf16.mxu0 0
        %3181 = vmatmul.mubr.bf16.gmra.mrb[0].mxu0 %v3122
        %v3182 = vpop.f32.mrb[0].mxu0
        %v3183 = vadd.f32 0.0, %v3182
        %v3184 = vpop.f32.mrb[0].mxu0
        %v3185 = vpop.f32.mrb[0].mxu0
        %v3186 = vadd.f32 0.0, %v3185
        %v3187 = vpop.f32.mrb[0].mxu0
        %3188 = vdwg.mxu0
        %v3189 = vpack.c.bf16 %v3162, %v3159
        %v3190 = vpack.c.bf16 %v3170, %v3167
        %v3191 = vpack.c.bf16 %v3178, %v3175
        %v3192 = vpack.c.bf16 %v3186, %v3183
        %3193 = vst [vmem:[#allocation2 + $0xc8] sm:$0xff] %v3189
        %3194 = vst [vmem:[#allocation2 + $0xd8] sm:$0xff] %v3190
        %3195 = vst [vmem:[#allocation2 + $0xe8] sm:$0xff] %v3191
        %3196 = vst [vmem:[#allocation2 + $0xf8] sm:$0xff] %v3192
        %v3197 = vld [vmem:[#allocation2] sm:$0xff]
        %v3198 = vld [vmem:[#allocation2 + $0x8] sm:$0xff]
        %v3199 = vld [vmem:[#allocation2 + $0x10] sm:$0xff]
        %v3200 = vld [vmem:[#allocation2 + $0x18] sm:$0xff]
        %v3201 = vld [vmem:[#allocation2 + $0x20] sm:$0xff]
        %v3202 = vld [vmem:[#allocation2 + $0x28] sm:$0xff]
        %v3203 = vld [vmem:[#allocation2 + $0x30] sm:$0xff]
        %v3204 = vld [vmem:[#allocation2 + $0x38] sm:$0xff]
        %v3205 = vld [vmem:[#allocation2 + $0x40] sm:$0xff]
        %v3206 = vld [vmem:[#allocation2 + $0x48] sm:$0xff]
        %v3207 = vld [vmem:[#allocation2 + $0x50] sm:$0xff]
        %v3208 = vld [vmem:[#allocation2 + $0x58] sm:$0xff]
        %v3209 = vld [vmem:[#allocation2 + $0x60] sm:$0xff]
        %v3210 = vld [vmem:[#allocation2 + $0x68] sm:$0xff]
        %v3211 = vld [vmem:[#allocation2 + $0x70] sm:$0xff]
        %v3212 = vld [vmem:[#allocation2 + $0x78] sm:$0xff]
        %v3213 = vld [vmem:[#allocation2 + $0x80] sm:$0xff]
        %v3214 = vld [vmem:[#allocation2 + $0x88] sm:$0xff]
        %v3215 = vld [vmem:[#allocation2 + $0x90] sm:$0xff]
        %v3216 = vld [vmem:[#allocation2 + $0x98] sm:$0xff]
        %v3217 = vld [vmem:[#allocation2 + $0xa0] sm:$0xff]
        %v3218 = vld [vmem:[#allocation2 + $0xa8] sm:$0xff]
        %v3219 = vld [vmem:[#allocation2 + $0xb0] sm:$0xff]
        %v3220 = vld [vmem:[#allocation2 + $0xb8] sm:$0xff]
        %v3221 = vld [vmem:[#allocation2 + $0xc0] sm:$0xff]
        %v3222 = vld [vmem:[#allocation2 + $0xc8] sm:$0xff]
        %v3223 = vld [vmem:[#allocation2 + $0xd0] sm:$0xff]
        %v3224 = vld [vmem:[#allocation2 + $0xd8] sm:$0xff]
        %v3225 = vld [vmem:[#allocation2 + $0xe0] sm:$0xff]
        %v3226 = vld [vmem:[#allocation2 + $0xe8] sm:$0xff]
        %v3227 = vld [vmem:[#allocation2 + $0xf0] sm:$0xff]
        %v3228 = vld [vmem:[#allocation2 + $0xf8] sm:$0xff]
        %v3229 = vld [vmem:[#allocation8] sm:$0xf]
        %v3230 = vld [vmem:[#allocation8 + $0x4] sm:$0xf]
        %v3231 = vld [vmem:[#allocation8 + $0x8] sm:$0xf]
        %v3232 = vld [vmem:[#allocation8 + $0xc] sm:$0xf]
        %v3233 = vld [vmem:[#allocation8 + $0x10] sm:$0xf]
        %v3234 = vld [vmem:[#allocation8 + $0x14] sm:$0xf]
        %v3235 = vld [vmem:[#allocation8 + $0x18] sm:$0xf]
        %v3236 = vld [vmem:[#allocation8 + $0x1c] sm:$0xf]
        %v3237 = vld [vmem:[#allocation8 + $0x20] sm:$0xf]
        %v3238 = vld [vmem:[#allocation8 + $0x24] sm:$0xf]
        %v3239 = vld [vmem:[#allocation8 + $0x28] sm:$0xf]
        %v3240 = vld [vmem:[#allocation8 + $0x2c] sm:$0xf]
        %v3241 = vld [vmem:[#allocation8 + $0x30] sm:$0xf]
        %v3242 = vld [vmem:[#allocation8 + $0x34] sm:$0xf]
        %v3243 = vld [vmem:[#allocation8 + $0x38] sm:$0xf]
        %v3244 = vld [vmem:[#allocation8 + $0x3c] sm:$0xf]
        %v3245 = vld [vmem:[#allocation8 + $0x40] sm:$0xf]
        %v3246 = vld [vmem:[#allocation8 + $0x44] sm:$0xf]
        %v3247 = vld [vmem:[#allocation8 + $0x48] sm:$0xf]
        %v3248 = vld [vmem:[#allocation8 + $0x4c] sm:$0xf]
        %v3249 = vld [vmem:[#allocation8 + $0x50] sm:$0xf]
        %v3250 = vld [vmem:[#allocation8 + $0x54] sm:$0xf]
        %v3251 = vld [vmem:[#allocation8 + $0x58] sm:$0xf]
        %v3252 = vld [vmem:[#allocation8 + $0x5c] sm:$0xf]
        %v3253 = vld [vmem:[#allocation8 + $0x60] sm:$0xf]
        %v3254 = vld [vmem:[#allocation8 + $0x64] sm:$0xf]
        %v3255 = vld [vmem:[#allocation8 + $0x68] sm:$0xf]
        %v3256 = vld [vmem:[#allocation8 + $0x6c] sm:$0xf]
        %v3257 = vld [vmem:[#allocation8 + $0x70] sm:$0xf]
        %v3258 = vld [vmem:[#allocation8 + $0x74] sm:$0xf]
        %v3259 = vld [vmem:[#allocation8 + $0x78] sm:$0xf]
        %v3260 = vld [vmem:[#allocation8 + $0x7c] sm:$0xf]
        %v3261 = vld [vmem:[%s3] sm:$0x1]
        %v3263 = vlaneseq
        %v3264 = vshrl.u32 %v3263, 7
        %v3265 = vsub.s32 0, %v3264
        %v3266 = vrot.slane %v3261, %v3265
        %v3300 = vunpack.c.l.b16 %v3229
        %v3301 = vunpack.c.l.b16 %v3230
        %v3302 = vunpack.c.l.b16 %v3231
        %v3303 = vunpack.c.l.b16 %v3232
        %v3304 = vunpack.c.l.b16 %v3233
        %v3305 = vunpack.c.l.b16 %v3234
        %v3306 = vunpack.c.l.b16 %v3235
        %v3307 = vunpack.c.l.b16 %v3236
        %v3308 = vunpack.c.l.b16 %v3237
        %v3309 = vunpack.c.l.b16 %v3238
        %v3310 = vunpack.c.l.b16 %v3239
        %v3311 = vunpack.c.l.b16 %v3240
        %v3312 = vunpack.c.l.b16 %v3241
        %v3313 = vunpack.c.l.b16 %v3242
        %v3314 = vunpack.c.l.b16 %v3243
        %v3315 = vunpack.c.l.b16 %v3244
        %v3316 = vunpack.c.l.b16 %v3245
        %v3317 = vunpack.c.l.b16 %v3246
        %v3318 = vunpack.c.l.b16 %v3247
        %v3319 = vunpack.c.l.b16 %v3248
        %v3320 = vunpack.c.l.b16 %v3249
        %v3321 = vunpack.c.l.b16 %v3250
        %v3322 = vunpack.c.l.b16 %v3251
        %v3323 = vunpack.c.l.b16 %v3252
        %v3324 = vunpack.c.l.b16 %v3253
        %v3325 = vunpack.c.l.b16 %v3254
        %v3326 = vunpack.c.l.b16 %v3255
        %v3327 = vunpack.c.l.b16 %v3256
        %v3328 = vunpack.c.l.b16 %v3257
        %v3329 = vunpack.c.l.b16 %v3258
        %v3330 = vunpack.c.l.b16 %v3259
        %v3331 = vunpack.c.l.b16 %v3260
        %v3332 = vpack.c.b16 %v3301, %v3300
        %v3333 = vpack.c.b16 %v3303, %v3302
        %v3334 = vpack.c.b16 %v3305, %v3304
        %v3335 = vpack.c.b16 %v3307, %v3306
        %v3336 = vpack.c.b16 %v3309, %v3308
        %v3337 = vpack.c.b16 %v3311, %v3310
        %v3338 = vpack.c.b16 %v3313, %v3312
        %v3339 = vpack.c.b16 %v3315, %v3314
        %v3340 = vpack.c.b16 %v3317, %v3316
        %v3341 = vpack.c.b16 %v3319, %v3318
        %v3342 = vpack.c.b16 %v3321, %v3320
        %v3343 = vpack.c.b16 %v3323, %v3322
        %v3344 = vpack.c.b16 %v3325, %v3324
        %v3345 = vpack.c.b16 %v3327, %v3326
        %v3346 = vpack.c.b16 %v3329, %v3328
        %v3347 = vpack.c.b16 %v3331, %v3330
        %3364 = vmatprep.subr.bf16.mxu0 0
        %3365 = vmatpush1.bf16.msra.mxu0 %v3332
        %3366 = vmatprep.subr.bf16.mxu0 0
        %3367 = vmatpush1.bf16.msra.mxu0 %v3333
        %3368 = vmatprep.subr.bf16.mxu0 0
        %3369 = vmatpush1.bf16.msra.mxu0 %v3334
        %3370 = vmatprep.subr.bf16.mxu0 0
        %3371 = vmatpush1.bf16.msra.mxu0 %v3335
        %3372 = vmatprep.subr.bf16.mxu0 0
        %3373 = vmatpush1.bf16.msra.mxu0 %v3336
        %3374 = vmatprep.subr.bf16.mxu0 0
        %3375 = vmatpush1.bf16.msra.mxu0 %v3337
        %3376 = vmatprep.subr.bf16.mxu0 0
        %3377 = vmatpush1.bf16.msra.mxu0 %v3338
        %3378 = vmatprep.subr.bf16.mxu0 0
        %3379 = vmatpush1.bf16.msra.mxu0 %v3339
        %3380 = vmatprep.subr.bf16.mxu0 0
        %3381 = vmatpush1.bf16.msra.mxu0 %v3340
        %3382 = vmatprep.subr.bf16.mxu0 0
        %3383 = vmatpush1.bf16.msra.mxu0 %v3341
        %3384 = vmatprep.subr.bf16.mxu0 0
        %3385 = vmatpush1.bf16.msra.mxu0 %v3342
        %3386 = vmatprep.subr.bf16.mxu0 0
        %3387 = vmatpush1.bf16.msra.mxu0 %v3343
        %3388 = vmatprep.subr.bf16.mxu0 0
        %3389 = vmatpush1.bf16.msra.mxu0 %v3344
        %3390 = vmatprep.subr.bf16.mxu0 0
        %3391 = vmatpush1.bf16.msra.mxu0 %v3345
        %3392 = vmatprep.subr.bf16.mxu0 0
        %3393 = vmatpush1.bf16.msra.mxu0 %v3346
        %3394 = vmatprep.subr.bf16.mxu0 0
        %3395 = vmatpush1.bf16.msra.mxu0 %v3347
        %3396 = vmatprep.mubr.bf16.mxu0 %v3198
        %3397 = vmatmul.mubr.bf16.gmra.mrb[0].mxu0 %v3197
        %v3398 = vpop.f32.mrb[0].mxu0
        %v3399 = vadd.f32 %v3266, %v3398
        %v3400 = vpop.f32.mrb[0].mxu0
        %v3401 = vpop.f32.mrb[0].mxu0
        %v3402 = vadd.f32 %v3266, %v3401
        %v3403 = vpop.f32.mrb[0].mxu0
        %3404 = vmatprep.mubr.bf16.mxu0 %v3200
        %3405 = vmatmul.mubr.bf16.gmra.mrb[0].mxu0 %v3199
        %v3406 = vpop.f32.mrb[0].mxu0
        %v3407 = vadd.f32 %v3266, %v3406
        %v3408 = vpop.f32.mrb[0].mxu0
        %v3409 = vpop.f32.mrb[0].mxu0
        %v3410 = vadd.f32 %v3266, %v3409
        %v3411 = vpop.f32.mrb[0].mxu0
        %3412 = vmatprep.mubr.bf16.mxu0 %v3202
        %3413 = vmatmul.mubr.bf16.gmra.mrb[0].mxu0 %v3201
        %v3414 = vpop.f32.mrb[0].mxu0
        %v3415 = vadd.f32 %v3266, %v3414
        %v3416 = vpop.f32.mrb[0].mxu0
        %v3417 = vpop.f32.mrb[0].mxu0
        %v3418 = vadd.f32 %v3266, %v3417
        %v3419 = vpop.f32.mrb[0].mxu0
        %3420 = vmatprep.mubr.bf16.mxu0 %v3204
        %3421 = vmatmul.mubr.bf16.gmra.mrb[0].mxu0 %v3203
        %v3422 = vpop.f32.mrb[0].mxu0
        %v3423 = vadd.f32 %v3266, %v3422
        %v3424 = vpop.f32.mrb[0].mxu0
        %v3425 = vpop.f32.mrb[0].mxu0
        %v3426 = vadd.f32 %v3266, %v3425
        %v3427 = vpop.f32.mrb[0].mxu0
        %3428 = vmatprep.mubr.bf16.mxu0 %v3206
        %3429 = vmatmul.mubr.bf16.gmra.mrb[0].mxu0 %v3205
        %v3430 = vpop.f32.mrb[0].mxu0
        %v3431 = vadd.f32 %v3266, %v3430
        %v3432 = vpop.f32.mrb[0].mxu0
        %v3433 = vpop.f32.mrb[0].mxu0
        %v3434 = vadd.f32 %v3266, %v3433
        %v3435 = vpop.f32.mrb[0].mxu0
        %3436 = vmatprep.mubr.bf16.mxu0 %v3208
        %3437 = vmatmul.mubr.bf16.gmra.mrb[0].mxu0 %v3207
        %v3438 = vpop.f32.mrb[0].mxu0
        %v3439 = vadd.f32 %v3266, %v3438
        %v3440 = vpop.f32.mrb[0].mxu0
        %v3441 = vpop.f32.mrb[0].mxu0
        %v3442 = vadd.f32 %v3266, %v3441
        %v3443 = vpop.f32.mrb[0].mxu0
        %3444 = vmatprep.mubr.bf16.mxu0 %v3210
        %3445 = vmatmul.mubr.bf16.gmra.mrb[0].mxu0 %v3209
        %v3446 = vpop.f32.mrb[0].mxu0
        %v3447 = vadd.f32 %v3266, %v3446
        %v3448 = vpop.f32.mrb[0].mxu0
        %v3449 = vpop.f32.mrb[0].mxu0
        %v3450 = vadd.f32 %v3266, %v3449
        %v3451 = vpop.f32.mrb[0].mxu0
        %3452 = vmatprep.mubr.bf16.mxu0 %v3212
        %3453 = vmatmul.mubr.bf16.gmra.mrb[0].mxu0 %v3211
        %v3454 = vpop.f32.mrb[0].mxu0
        %v3455 = vadd.f32 %v3266, %v3454
        %v3456 = vpop.f32.mrb[0].mxu0
        %v3457 = vpop.f32.mrb[0].mxu0
        %v3458 = vadd.f32 %v3266, %v3457
        %v3459 = vpop.f32.mrb[0].mxu0
        %3460 = vmatprep.mubr.bf16.mxu0 %v3214
        %3461 = vmatmul.mubr.bf16.gmra.mrb[0].mxu0 %v3213
        %v3462 = vpop.f32.mrb[0].mxu0
        %v3463 = vadd.f32 %v3266, %v3462
        %v3464 = vpop.f32.mrb[0].mxu0
        %v3465 = vpop.f32.mrb[0].mxu0
        %v3466 = vadd.f32 %v3266, %v3465
        %v3467 = vpop.f32.mrb[0].mxu0
        %3468 = vmatprep.mubr.bf16.mxu0 %v3216
        %3469 = vmatmul.mubr.bf16.gmra.mrb[0].mxu0 %v3215
        %v3470 = vpop.f32.mrb[0].mxu0
        %v3471 = vadd.f32 %v3266, %v3470
        %v3472 = vpop.f32.mrb[0].mxu0
        %v3473 = vpop.f32.mrb[0].mxu0
        %v3474 = vadd.f32 %v3266, %v3473
        %v3475 = vpop.f32.mrb[0].mxu0
        %3476 = vmatprep.mubr.bf16.mxu0 %v3218
        %3477 = vmatmul.mubr.bf16.gmra.mrb[0].mxu0 %v3217
        %v3478 = vpop.f32.mrb[0].mxu0
        %v3479 = vadd.f32 %v3266, %v3478
        %v3480 = vpop.f32.mrb[0].mxu0
        %v3481 = vpop.f32.mrb[0].mxu0
        %v3482 = vadd.f32 %v3266, %v3481
        %v3483 = vpop.f32.mrb[0].mxu0
        %3484 = vmatprep.mubr.bf16.mxu0 %v3220
        %3485 = vmatmul.mubr.bf16.gmra.mrb[0].mxu0 %v3219
        %v3486 = vpop.f32.mrb[0].mxu0
        %v3487 = vadd.f32 %v3266, %v3486
        %v3488 = vpop.f32.mrb[0].mxu0
        %v3489 = vpop.f32.mrb[0].mxu0
        %v3490 = vadd.f32 %v3266, %v3489
        %v3491 = vpop.f32.mrb[0].mxu0
        %3492 = vmatprep.mubr.bf16.mxu0 %v3222
        %3493 = vmatmul.mubr.bf16.gmra.mrb[0].mxu0 %v3221
        %v3494 = vpop.f32.mrb[0].mxu0
        %v3495 = vadd.f32 %v3266, %v3494
        %v3496 = vpop.f32.mrb[0].mxu0
        %v3497 = vpop.f32.mrb[0].mxu0
        %v3498 = vadd.f32 %v3266, %v3497
        %v3499 = vpop.f32.mrb[0].mxu0
        %3500 = vmatprep.mubr.bf16.mxu0 %v3224
        %3501 = vmatmul.mubr.bf16.gmra.mrb[0].mxu0 %v3223
        %v3502 = vpop.f32.mrb[0].mxu0
        %v3503 = vadd.f32 %v3266, %v3502
        %v3504 = vpop.f32.mrb[0].mxu0
        %v3505 = vpop.f32.mrb[0].mxu0
        %v3506 = vadd.f32 %v3266, %v3505
        %v3507 = vpop.f32.mrb[0].mxu0
        %3508 = vmatprep.mubr.bf16.mxu0 %v3226
        %3509 = vmatmul.mubr.bf16.gmra.mrb[0].mxu0 %v3225
        %v3510 = vpop.f32.mrb[0].mxu0
        %v3511 = vadd.f32 %v3266, %v3510
        %v3512 = vpop.f32.mrb[0].mxu0
        %v3513 = vpop.f32.mrb[0].mxu0
        %v3514 = vadd.f32 %v3266, %v3513
        %v3515 = vpop.f32.mrb[0].mxu0
        %3516 = vmatprep.mubr.bf16.mxu0 %v3228
        %3517 = vmatmul.mubr.bf16.gmra.mrb[0].mxu0 %v3227
        %v3518 = vpop.f32.mrb[0].mxu0
        %v3519 = vadd.f32 %v3266, %v3518
        %v3520 = vpop.f32.mrb[0].mxu0
        %v3521 = vpop.f32.mrb[0].mxu0
        %v3522 = vadd.f32 %v3266, %v3521
        %v3523 = vpop.f32.mrb[0].mxu0
        %3524 = vdwg.mxu0
        %3525 = vst [vmem:[%s245] sm:$0xff] %v3399
        %3526 = vst [vmem:[%s245 + $0x8] sm:$0xff] %v3402
        %3527 = vst [vmem:[%s245 + $0x10] sm:$0xff] %v3407
        %3528 = vst [vmem:[%s245 + $0x18] sm:$0xff] %v3410
        %3529 = vst [vmem:[%s245 + $0x20] sm:$0xff] %v3415
        %3530 = vst [vmem:[%s245 + $0x28] sm:$0xff] %v3418
        %3531 = vst [vmem:[%s245 + $0x30] sm:$0xff] %v3423
        %3532 = vst [vmem:[%s245 + $0x38] sm:$0xff] %v3426
        %3533 = vst [vmem:[%s245 + $0x40] sm:$0xff] %v3431
        %3534 = vst [vmem:[%s245 + $0x48] sm:$0xff] %v3434
        %3535 = vst [vmem:[%s245 + $0x50] sm:$0xff] %v3439
        %3536 = vst [vmem:[%s245 + $0x58] sm:$0xff] %v3442
        %3537 = vst [vmem:[%s245 + $0x60] sm:$0xff] %v3447
        %3538 = vst [vmem:[%s245 + $0x68] sm:$0xff] %v3450
        %3539 = vst [vmem:[%s245 + $0x70] sm:$0xff] %v3455
        %3540 = vst [vmem:[%s245 + $0x78] sm:$0xff] %v3458
        %3541 = vst [vmem:[%s245 + $0x80] sm:$0xff] %v3463
        %3542 = vst [vmem:[%s245 + $0x88] sm:$0xff] %v3466
        %3543 = vst [vmem:[%s245 + $0x90] sm:$0xff] %v3471
        %3544 = vst [vmem:[%s245 + $0x98] sm:$0xff] %v3474
        %3545 = vst [vmem:[%s245 + $0xa0] sm:$0xff] %v3479
        %3546 = vst [vmem:[%s245 + $0xa8] sm:$0xff] %v3482
        %3547 = vst [vmem:[%s245 + $0xb0] sm:$0xff] %v3487
        %3548 = vst [vmem:[%s245 + $0xb8] sm:$0xff] %v3490
        %3549 = vst [vmem:[%s245 + $0xc0] sm:$0xff] %v3495
        %3550 = vst [vmem:[%s245 + $0xc8] sm:$0xff] %v3498
        %3551 = vst [vmem:[%s245 + $0xd0] sm:$0xff] %v3503
        %3552 = vst [vmem:[%s245 + $0xd8] sm:$0xff] %v3506
        %3553 = vst [vmem:[%s245 + $0xe0] sm:$0xff] %v3511
        %3554 = vst [vmem:[%s245 + $0xe8] sm:$0xff] %v3514
        %3555 = vst [vmem:[%s245 + $0xf0] sm:$0xff] %v3519
        %3556 = vst [vmem:[%s245 + $0xf8] sm:$0xff] %v3522
        %s3557 = sand.u32 %s119, 1
        %s3558 = scalar_lea.sflag [#allocation5], %s3557
        %s3559 = sand.u32 %s119, 1
        %s3560 = smul.addr %s3559, 256
        %s3561 = scalar_lea.vmem [#allocation9], %s3560
        // Predicated region
        $region49: #{tpu_custom_call.1} parent=35 // pred_check
          %p3562 = pneg %p129
        $region50: #{tpu_custom_call.1} parent=35 // pred_check_branch
          %3564 = sbr.rel (%p3562) target = $region52
        $region51: #{tpu_custom_call.1} parent=35 // pred_region
          %s3565 = smul.u32 4, %s22
          %s3567 = ssub.s32 4096, 4096
          %3568 = vsyncadd %s3558, %s3567
          %s3569 = smul.addr %s3565, 8
          %s3570 = smul.addr %s3569, 128
          %s3571 = scalar_lea.hbm %s4, %s3570
          %s3572 = sshll.u32 %s3561, 4
          %s3573 = int_to_ptr.vmem [resolvable:$true] %s3572
          %3578 = dma.vmem_to_hbm [thread:$0]  %s3573, 4096, %s3571, %s3558, 128, 128, 8
        $region52: #{tpu_custom_call.1} parent=35 // pred_fallthru
          _
      $region36: #{tpu_custom_call.1} parent=5 // pred_fallthru
        _
      %p3579 = scmp.le.s32.totalorder 2, %s17
      // Predicated region
      $region53: #{tpu_custom_call.1} parent=5 // pred_check
        %p3580 = pneg %p3579
      $region54: #{tpu_custom_call.1} parent=5 // pred_check_branch
        %3582 = sbr.rel (%p3580) target = $region56
      $region55: #{tpu_custom_call.1} parent=5 // pred_region
        %s3583 = ssub.s32 %s17, 2
        // Predicated region
        $region57: #{tpu_custom_call.1} parent=55 // pred_check
          %p3584 = pneg %p135
        $region58: #{tpu_custom_call.1} parent=55 // pred_check_branch
          %3586 = sbr.rel (%p3584) target = $region60
        $region59: #{tpu_custom_call.1} parent=55 // pred_region
          %s3587 = sand.u32 %s120, 1
          %s3588 = scalar_lea.sflag [#allocation5], %s3587
          %s3589 = sand.u32 %s120, 1
          %s3590 = smul.addr %s3589, 256
          %s3591 = scalar_lea.vmem [#allocation9], %s3590
          %3592 = dma.done %s3588, 4096
        $region60: #{tpu_custom_call.1} parent=55 // pred_fallthru
          _
      $region56: #{tpu_custom_call.1} parent=5 // pred_fallthru
        _
    $region6: #{tpu_custom_call.1} parent=1 // loop_footer
      %s21 = sadd.s32 1, %s17
    $region7: #{tpu_custom_call.1} parent=1 // loop_footer_branch
      %16 = sbr.rel target = $region3
    $region8: #{tpu_custom_call.1} parent=1 // loop_exit
      _
    %3593 = vsyncpa [#allocation4], 1
    %s3594 = scalar_lea.sflag [#allocation4], 1
    %3595 = vsyncpa %s3594, 1
    %3596 = vsyncpa [#allocation7], 1
    %3597 = vsyncpa [#allocation5], 1
    %s3598 = scalar_lea.sflag [#allocation5], 1
    %3599 = vsyncpa %s3598, 1

</llo_original>
